<compile_context>
chip_gen: v7x
topology: tpu7x:2x2x1
jax: 0.10.0
libtpu: 0.0.40
codegen_flags: <defaults>
</compile_context>

<pallas_src>
import math
from functools import partial

import jax
import jax.numpy as jnp
from jax.experimental import pallas as pl
from jax.experimental.pallas import tpu as pltpu


# ----------------------------------------------------------------------------
# Fused HOG + 2-layer GCN + softmax kernel (whole batch in one invocation).
# ----------------------------------------------------------------------------
def hoggcn_kernel(x_ref, a_ref, lum_ref, dv_ref, dh_ref, rep_ref, ptb_ref,
                  prow_ref, w1_ref, b1_ref, w2_ref, b2_ref, out_ref, *, n_cells):
    f32 = jnp.float32

    # ---- HOG stage: whole batch at once, B folded into the sublane axis ----
    # Grayscale (luma) conversion fused into a constant channel-mixing matmul.
    # x_ref is the raw NCHW pixel data viewed as (B*3*D, D); lum picks & weights channels.
    gray = jnp.dot(lum_ref[...], x_ref[...], preferred_element_type=f32)        # (B*D, D)

    # Central differences with zero padding baked into banded operator matrices
    # (no unaligned slices / rolls; the stencil rides on the otherwise-idle MXU).
    gx = jnp.dot(gray, dh_ref[...], preferred_element_type=f32)                 # d/dx, (B*D, D)
    gy = jnp.dot(dv_ref[...], gray, preferred_element_type=f32)                 # d/dy, (B*D, D)

    # Unsigned gradients: fold the direction into the upper half plane.
    flip = (gy < 0.0) | ((gy == 0.0) & (gx < 0.0))
    gxu = jnp.where(flip, -gx, gx)
    gyu = jnp.where(flip, -gy, gy)
    mag = jnp.sqrt(gx * gx + gy * gy)

    # Orientation binning for ALL bins at once: the D gradient columns are replicated
    # into `bins` lane blocks scaled by cos/sin of the lower/upper bin boundary, so the
    # per-bin membership test is two compares + one select on lane-dense data (the
    # boundary cross products live in constant matrices, not in a per-bin VPU loop).
    mag_t = jnp.dot(mag, rep_ref[0], preferred_element_type=f32)                # (B*D, bins*D)
    lo = (jnp.dot(gyu, rep_ref[1], preferred_element_type=f32)
          - jnp.dot(gxu, rep_ref[2], preferred_element_type=f32))               # |g|*sin(th - a_k)
    hi = (jnp.dot(gyu, rep_ref[3], preferred_element_type=f32)
          - jnp.dot(gxu, rep_ref[4], preferred_element_type=f32))               # |g|*sin(th - a_{k+1})
    masked = jnp.where((lo >= 0.0) & (hi < 0.0), mag_t, 0.0)                    # (B*D, bins*D)

    # Cell pooling: one block-diagonal matmul over column cells ...
    cols = jnp.dot(masked, ptb_ref[...], preferred_element_type=f32)            # (B*D, bins*nc)

    # ... then row-cell pooling fused with the per-image L2 norm and the first GCN
    # matmul, so the (B, F) HOG descriptor never leaves registers/VMEM.
    acc_xw = None
    acc_ss = None
    for ci in range(n_cells):                                                   # static unroll (nc == 2)
        a_ci = jnp.dot(prow_ref[ci], cols, preferred_element_type=f32)          # (B, bins*nc)
        sq = jnp.sum(a_ci * a_ci, axis=1, keepdims=True)                        # (B, 1)
        xw = jnp.dot(a_ci, w1_ref[ci], preferred_element_type=f32)              # (B, F)
        acc_ss = sq if acc_ss is None else acc_ss + sq
        acc_xw = xw if acc_xw is None else acc_xw + xw
    inv_norm = jax.lax.rsqrt(acc_ss + 1e-12)           # per-image L2 normalisation of the descriptor
    xw1 = acc_xw * inv_norm                            # == (hog / ||hog||_2) @ W1

    # ---- GCN layer 1: relu(A_norm @ (X @ W1) + b1); dropout is identity in eval mode ----
    adj = a_ref[...]
    h = jnp.maximum(jnp.dot(adj, xw1, preferred_element_type=f32) + b1_ref[...], 0.0)

    # ---- GCN layer 2 + row-wise softmax (dim=1) ----
    logits = jnp.dot(adj, jnp.dot(h, w2_ref[...], preferred_element_type=f32),
                     preferred_element_type=f32) + b2_ref[...]
    zmax = jnp.max(logits, axis=-1, keepdims=True)
    expz = jnp.exp(logits - zmax)
    # exact reciprocal: keeps softmax rows summing to 1 within 1e-4 (approx=True would relax this)
    out_ref[...] = expz * pl.reciprocal(jnp.sum(expz, axis=-1, keepdims=True), approx=False)


# ----------------------------------------------------------------------------
# Compile-time constant operator matrices that turn the HOG stage into matmuls.
# ----------------------------------------------------------------------------
def _hog_operator_constants(batch, dim, cell, bins):
    f32 = jnp.float32
    n_cells = dim // cell
    bd = batch * dim
    eye_d = jnp.eye(dim, dtype=f32)

    # Luma grayscale as a channel-mixing selection matrix: gray = lum @ images_flat,
    # where images_flat = images.reshape(B*3*D, D) is a free, layout-preserving view.
    luma = jnp.array([[0.299, 0.587, 0.114]], f32)
    lum = jnp.kron(jnp.eye(batch, dtype=f32), jnp.kron(luma, eye_d))             # (B*D, B*3*D)

    # Central-difference operators with zero padding baked in.
    dh = jnp.eye(dim, k=-1, dtype=f32) - jnp.eye(dim, k=1, dtype=f32)            # gray @ dh == d/dx
    rows = jnp.arange(bd)
    dv = (jnp.eye(bd, k=1, dtype=f32) * ((rows % dim) != dim - 1).astype(f32)[:, None]
          - jnp.eye(bd, k=-1, dtype=f32) * ((rows % dim) != 0).astype(f32)[:, None])   # dv @ gray == d/dy

    # Orientation-bin boundary operators (unsigned gradients, boundaries a_k = k*pi/bins).
    ang = jnp.arange(bins + 1, dtype=f32) * (math.pi / bins)
    rep = jnp.stack([
        jnp.kron(jnp.ones((1, bins), f32), eye_d),      # replicate |g| into every bin block
        jnp.kron(jnp.cos(ang)[None, :bins], eye_d),     # cos(a_k)      (lower boundary)
        jnp.kron(jnp.sin(ang)[None, :bins], eye_d),     # sin(a_k)
        jnp.kron(jnp.cos(ang)[None, 1:], eye_d),        # cos(a_{k+1})  (upper boundary)
        jnp.kron(jnp.sin(ang)[None, 1:], eye_d),        # sin(a_{k+1})
    ])                                                                            # (5, D, bins*D)

    # Cell pooling: column-cell sums (block-diagonal over bins) and per-row-cell sums.
    pool_cols = jnp.kron(jnp.eye(n_cells, dtype=f32), jnp.ones((cell, 1), f32))   # (D, nc)
    pt_blk = jnp.kron(jnp.eye(bins, dtype=f32), pool_cols)                        # (bins*D, bins*nc)
    prow = jnp.stack([
        jnp.kron(jnp.eye(batch, dtype=f32),
                 ((jnp.arange(dim) // cell) == ci).astype(f32)[None, :])
        for ci in range(n_cells)])                                                # (nc, B, B*D)
    return lum, dv, dh, rep, pt_blk, prow


# ----------------------------------------------------------------------------
# Glue: clique batch-graph construction (GCNConv normalization) and params.
# ----------------------------------------------------------------------------
def build_normalized_adjacency(labels, word_vectors):
    """Clique graph over the batch; edge weight = Euclidean word-vector distance."""
    wv = word_vectors[labels]                                    # (N, WV)
    d2 = jnp.sum((wv[:, None, :] - wv[None, :, :]) ** 2, axis=-1)
    dist = jnp.sqrt(d2 + 1e-12)
    n = labels.shape[0]
    eye = jnp.eye(n, dtype=jnp.float32)
    a_hat = dist * (1.0 - eye) + eye                             # self loops with weight 1
    deg = jnp.sum(a_hat, axis=1)
    dinv = 1.0 / jnp.sqrt(deg)
    return (a_hat * dinv[:, None] * dinv[None, :]).astype(jnp.float32)


def init_params(key, feat_dim, num_classes, wv_dim):
    k1, k2, k3 = jax.random.split(key, 3)

    def glorot(k, fan_in, fan_out):
        s = math.sqrt(6.0 / (fan_in + fan_out))
        return jax.random.uniform(k, (fan_in, fan_out), jnp.float32, -s, s)

    return {
        "w1": glorot(k1, feat_dim, feat_dim),
        "b1": jnp.zeros((feat_dim,), jnp.float32),
        "w2": glorot(k2, feat_dim, num_classes),
        "b2": jnp.zeros((num_classes,), jnp.float32),
        "word_vectors": jax.random.normal(k3, (num_classes, wv_dim), jnp.float32),
    }


@partial(jax.jit, static_argnames=("cell", "bins"))
def hoggcn_forward(images, labels, params, *, cell=8, bins=9):
    """images: (B, 3, H, H) NCHW float32, labels: (B,) int32 -> (B, num_classes) probabilities."""
    batch, chan, dim, dim_w = images.shape
    assert chan == 3 and dim == dim_w and dim % cell == 0
    n_cells = dim // cell
    feat = bins * n_cells * n_cells
    num_classes = params["w2"].shape[1]

    # Batch clique graph with GCNConv D^-1/2 (A+I) D^-1/2 normalization (tiny; plain XLA).
    a_norm = build_normalized_adjacency(labels, params["word_vectors"])

    lum, dv, dh, rep, pt_blk, prow = _hog_operator_constants(batch, dim, cell, bins)

    # W1 split row-wise to match the descriptor ordering f = ci*(bins*nc) + k*nc + cj, so the
    # embedding is consumed straight out of registers inside the kernel (no (B,F) HBM store).
    w1r = params["w1"].reshape(n_cells, bins * n_cells, feat)
    b1 = params["b1"].reshape(1, feat)
    b2 = params["b2"].reshape(1, num_classes)
    x_flat = images.reshape(batch * chan * dim, dim)      # free, layout-preserving view of NCHW

    return pl.pallas_call(
        partial(hoggcn_kernel, n_cells=n_cells),
        out_shape=jax.ShapeDtypeStruct((batch, num_classes), jnp.float32),
        compiler_params=pltpu.CompilerParams(vmem_limit_bytes=32 * 1024 * 1024),
    )(x_flat, a_norm, lum, dv, dh, rep, pt_blk, prow, w1r, b1, params["w2"], b2)


if __name__ == "__main__":
    B, C_IMG, DIM = 8, 3, 16
    CELL, BINS = 8, 9
    NUM_CLASSES, WV_DIM = 5, 10
    FEAT_DIM = BINS * (DIM // CELL) ** 2                         # HOG descriptor length

    key = jax.random.PRNGKey(0)
    kx, ky, kp = jax.random.split(key, 3)
    images = jax.random.normal(kx, (B, C_IMG, DIM, DIM), jnp.float32)
    labels = jax.random.randint(ky, (B,), 0, NUM_CLASSES)
    params = init_params(kp, FEAT_DIM, NUM_CLASSES, WV_DIM)

    out = hoggcn_forward(images, labels, params, cell=CELL, bins=BINS)
    out = jax.block_until_ready(out)

    assert out.shape == (B, NUM_CLASSES), out.shape
    assert bool(jnp.all(jnp.isfinite(out)))
    # softmax rows must sum to 1
    assert bool(jnp.allclose(jnp.sum(out, axis=1), 1.0, atol=1e-4))
    print("KERNEL_OK")
</pallas_src>

<mosaic_0001>
module attributes {stable_mosaic.version = 11 : i64} {
  func.func @hoggcn_kernel(%arg0: memref<384x16xf32, #tpu.memory_space<vmem>>, %arg1: memref<8x8xf32, #tpu.memory_space<vmem>>, %arg2: memref<128x384xf32, #tpu.memory_space<vmem>>, %arg3: memref<128x128xf32, #tpu.memory_space<vmem>>, %arg4: memref<16x16xf32, #tpu.memory_space<vmem>>, %arg5: memref<5x16x144xf32, #tpu.memory_space<vmem>>, %arg6: memref<144x18xf32, #tpu.memory_space<vmem>>, %arg7: memref<2x8x128xf32, #tpu.memory_space<vmem>>, %arg8: memref<2x18x36xf32, #tpu.memory_space<vmem>>, %arg9: memref<1x36xf32, #tpu.memory_space<vmem>>, %arg10: memref<36x5xf32, #tpu.memory_space<vmem>>, %arg11: memref<1x5xf32, #tpu.memory_space<vmem>>, %arg12: memref<8x5xf32, #tpu.memory_space<vmem>>) attributes {dimension_semantics = [], scalar_prefetch = 0 : i64, scratch_operands = 0 : i64, tpu.core_type = #tpu.core_type<tc>} {
    %c0 = arith.constant 0 : index
    %c0_0 = arith.constant 0 : index
    %0 = vector.load %arg2[%c0, %c0_0] : memref<128x384xf32, #tpu.memory_space<vmem>>, vector<128x384xf32>
    %c0_1 = arith.constant 0 : index
    %c0_2 = arith.constant 0 : index
    %1 = vector.load %arg0[%c0_1, %c0_2] : memref<384x16xf32, #tpu.memory_space<vmem>>, vector<384x16xf32>
    %cst = arith.constant dense<0.000000e+00> : vector<128x16xf32>
    %2 = tpu.matmul %0, %1, %cst {dimension_numbers = #tpu.dot_dimension_numbers<[1], [0], [0], [1], [0, 0, 1, 1], [], []>} : vector<128x384xf32>, vector<384x16xf32>, vector<128x16xf32> -> vector<128x16xf32>
    %c0_3 = arith.constant 0 : index
    %c0_4 = arith.constant 0 : index
    %3 = vector.load %arg4[%c0_3, %c0_4] : memref<16x16xf32, #tpu.memory_space<vmem>>, vector<16x16xf32>
    %cst_5 = arith.constant dense<0.000000e+00> : vector<128x16xf32>
    %4 = tpu.matmul %2, %3, %cst_5 {dimension_numbers = #tpu.dot_dimension_numbers<[1], [0], [0], [1], [0, 0, 1, 1], [], []>} : vector<128x16xf32>, vector<16x16xf32>, vector<128x16xf32> -> vector<128x16xf32>
    %c0_6 = arith.constant 0 : index
    %c0_7 = arith.constant 0 : index
    %5 = vector.load %arg3[%c0_6, %c0_7] : memref<128x128xf32, #tpu.memory_space<vmem>>, vector<128x128xf32>
    %cst_8 = arith.constant dense<0.000000e+00> : vector<128x16xf32>
    %6 = tpu.matmul %5, %2, %cst_8 {dimension_numbers = #tpu.dot_dimension_numbers<[1], [0], [0], [1], [0, 0, 1, 1], [], []>} : vector<128x128xf32>, vector<128x16xf32>, vector<128x16xf32> -> vector<128x16xf32>
    %cst_9 = arith.constant 0.000000e+00 : f32
    %7 = vector.broadcast %cst_9 : f32 to vector<128x16xf32>
    %8 = arith.cmpf olt, %6, %7 : vector<128x16xf32>
    %cst_10 = arith.constant 0.000000e+00 : f32
    %9 = vector.broadcast %cst_10 : f32 to vector<128x16xf32>
    %10 = arith.cmpf oeq, %6, %9 : vector<128x16xf32>
    %cst_11 = arith.constant 0.000000e+00 : f32
    %11 = vector.broadcast %cst_11 : f32 to vector<128x16xf32>
    %12 = arith.cmpf olt, %4, %11 : vector<128x16xf32>
    %13 = arith.andi %10, %12 : vector<128x16xi1>
    %14 = arith.ori %8, %13 : vector<128x16xi1>
    %cst_12 = arith.constant 0.000000e+00 : f32
    %15 = vector.broadcast %cst_12 : f32 to vector<128x16xf32>
    %16 = arith.subf %15, %4 : vector<128x16xf32>
    %17 = arith.select %14, %16, %4 : vector<128x16xi1>, vector<128x16xf32>
    %cst_13 = arith.constant 0.000000e+00 : f32
    %18 = vector.broadcast %cst_13 : f32 to vector<128x16xf32>
    %19 = arith.subf %18, %6 : vector<128x16xf32>
    %20 = arith.select %14, %19, %6 : vector<128x16xi1>, vector<128x16xf32>
    %21 = arith.mulf %4, %4 : vector<128x16xf32>
    %22 = arith.mulf %6, %6 : vector<128x16xf32>
    %23 = arith.addf %21, %22 : vector<128x16xf32>
    %24 = math.sqrt %23 : vector<128x16xf32>
    %c0_14 = arith.constant 0 : index
    %c0_15 = arith.constant 0 : index
    %c0_16 = arith.constant 0 : index
    %25 = vector.load %arg5[%c0_14, %c0_15, %c0_16] : memref<5x16x144xf32, #tpu.memory_space<vmem>>, vector<1x16x144xf32>
    %26 = vector.shape_cast %25 : vector<1x16x144xf32> to vector<16x144xf32>
    %cst_17 = arith.constant dense<0.000000e+00> : vector<128x144xf32>
    %27 = tpu.matmul %24, %26, %cst_17 {dimension_numbers = #tpu.dot_dimension_numbers<[1], [0], [0], [1], [0, 0, 1, 1], [], []>} : vector<128x16xf32>, vector<16x144xf32>, vector<128x144xf32> -> vector<128x144xf32>
    %c1 = arith.constant 1 : index
    %c0_18 = arith.constant 0 : index
    %c0_19 = arith.constant 0 : index
    %28 = vector.load %arg5[%c1, %c0_18, %c0_19] : memref<5x16x144xf32, #tpu.memory_space<vmem>>, vector<1x16x144xf32>
    %29 = vector.shape_cast %28 : vector<1x16x144xf32> to vector<16x144xf32>
    %cst_20 = arith.constant dense<0.000000e+00> : vector<128x144xf32>
    %30 = tpu.matmul %20, %29, %cst_20 {dimension_numbers = #tpu.dot_dimension_numbers<[1], [0], [0], [1], [0, 0, 1, 1], [], []>} : vector<128x16xf32>, vector<16x144xf32>, vector<128x144xf32> -> vector<128x144xf32>
    %c2 = arith.constant 2 : index
    %c0_21 = arith.constant 0 : index
    %c0_22 = arith.constant 0 : index
    %31 = vector.load %arg5[%c2, %c0_21, %c0_22] : memref<5x16x144xf32, #tpu.memory_space<vmem>>, vector<1x16x144xf32>
    %32 = vector.shape_cast %31 : vector<1x16x144xf32> to vector<16x144xf32>
    %cst_23 = arith.constant dense<0.000000e+00> : vector<128x144xf32>
    %33 = tpu.matmul %17, %32, %cst_23 {dimension_numbers = #tpu.dot_dimension_numbers<[1], [0], [0], [1], [0, 0, 1, 1], [], []>} : vector<128x16xf32>, vector<16x144xf32>, vector<128x144xf32> -> vector<128x144xf32>
    %34 = arith.subf %30, %33 : vector<128x144xf32>
    %c3 = arith.constant 3 : index
    %c0_24 = arith.constant 0 : index
    %c0_25 = arith.constant 0 : index
    %35 = vector.load %arg5[%c3, %c0_24, %c0_25] : memref<5x16x144xf32, #tpu.memory_space<vmem>>, vector<1x16x144xf32>
    %36 = vector.shape_cast %35 : vector<1x16x144xf32> to vector<16x144xf32>
    %cst_26 = arith.constant dense<0.000000e+00> : vector<128x144xf32>
    %37 = tpu.matmul %20, %36, %cst_26 {dimension_numbers = #tpu.dot_dimension_numbers<[1], [0], [0], [1], [0, 0, 1, 1], [], []>} : vector<128x16xf32>, vector<16x144xf32>, vector<128x144xf32> -> vector<128x144xf32>
    %c4 = arith.constant 4 : index
    %c0_27 = arith.constant 0 : index
    %c0_28 = arith.constant 0 : index
    %38 = vector.load %arg5[%c4, %c0_27, %c0_28] : memref<5x16x144xf32, #tpu.memory_space<vmem>>, vector<1x16x144xf32>
    %39 = vector.shape_cast %38 : vector<1x16x144xf32> to vector<16x144xf32>
    %cst_29 = arith.constant dense<0.000000e+00> : vector<128x144xf32>
    %40 = tpu.matmul %17, %39, %cst_29 {dimension_numbers = #tpu.dot_dimension_numbers<[1], [0], [0], [1], [0, 0, 1, 1], [], []>} : vector<128x16xf32>, vector<16x144xf32>, vector<128x144xf32> -> vector<128x144xf32>
    %41 = arith.subf %37, %40 : vector<128x144xf32>
    %cst_30 = arith.constant 0.000000e+00 : f32
    %42 = vector.broadcast %cst_30 : f32 to vector<128x144xf32>
    %43 = arith.cmpf oge, %34, %42 : vector<128x144xf32>
    %cst_31 = arith.constant 0.000000e+00 : f32
    %44 = vector.broadcast %cst_31 : f32 to vector<128x144xf32>
    %45 = arith.cmpf olt, %41, %44 : vector<128x144xf32>
    %46 = arith.andi %43, %45 : vector<128x144xi1>
    %cst_32 = arith.constant 0.000000e+00 : f32
    %47 = vector.broadcast %cst_32 : f32 to vector<128x144xf32>
    %48 = arith.select %46, %27, %47 : vector<128x144xi1>, vector<128x144xf32>
    %c0_33 = arith.constant 0 : index
    %c0_34 = arith.constant 0 : index
    %49 = vector.load %arg6[%c0_33, %c0_34] : memref<144x18xf32, #tpu.memory_space<vmem>>, vector<144x18xf32>
    %cst_35 = arith.constant dense<0.000000e+00> : vector<128x18xf32>
    %50 = tpu.matmul %48, %49, %cst_35 {dimension_numbers = #tpu.dot_dimension_numbers<[1], [0], [0], [1], [0, 0, 1, 1], [], []>} : vector<128x144xf32>, vector<144x18xf32>, vector<128x18xf32> -> vector<128x18xf32>
    %c0_36 = arith.constant 0 : index
    %c0_37 = arith.constant 0 : index
    %c0_38 = arith.constant 0 : index
    %51 = vector.load %arg7[%c0_36, %c0_37, %c0_38] : memref<2x8x128xf32, #tpu.memory_space<vmem>>, vector<1x8x128xf32>
    %52 = vector.shape_cast %51 : vector<1x8x128xf32> to vector<8x128xf32>
    %cst_39 = arith.constant dense<0.000000e+00> : vector<8x18xf32>
    %53 = tpu.matmul %52, %50, %cst_39 {dimension_numbers = #tpu.dot_dimension_numbers<[1], [0], [0], [1], [0, 0, 1, 1], [], []>} : vector<8x128xf32>, vector<128x18xf32>, vector<8x18xf32> -> vector<8x18xf32>
    %54 = arith.mulf %53, %53 : vector<8x18xf32>
    %cst_40 = arith.constant dense<0.000000e+00> : vector<8xf32>
    %55 = vector.multi_reduction <add>, %54, %cst_40 [1] : vector<8x18xf32> to vector<8xf32>
    %56 = vector.shape_cast %55 : vector<8xf32> to vector<8x1xf32>
    %c0_41 = arith.constant 0 : index
    %c0_42 = arith.constant 0 : index
    %c0_43 = arith.constant 0 : index
    %57 = vector.load %arg8[%c0_41, %c0_42, %c0_43] : memref<2x18x36xf32, #tpu.memory_space<vmem>>, vector<1x18x36xf32>
    %58 = vector.shape_cast %57 : vector<1x18x36xf32> to vector<18x36xf32>
    %cst_44 = arith.constant dense<0.000000e+00> : vector<8x36xf32>
    %59 = tpu.matmul %53, %58, %cst_44 {dimension_numbers = #tpu.dot_dimension_numbers<[1], [0], [0], [1], [0, 0, 1, 1], [], []>} : vector<8x18xf32>, vector<18x36xf32>, vector<8x36xf32> -> vector<8x36xf32>
    %c1_45 = arith.constant 1 : index
    %c0_46 = arith.constant 0 : index
    %c0_47 = arith.constant 0 : index
    %60 = vector.load %arg7[%c1_45, %c0_46, %c0_47] : memref<2x8x128xf32, #tpu.memory_space<vmem>>, vector<1x8x128xf32>
    %61 = vector.shape_cast %60 : vector<1x8x128xf32> to vector<8x128xf32>
    %cst_48 = arith.constant dense<0.000000e+00> : vector<8x18xf32>
    %62 = tpu.matmul %61, %50, %cst_48 {dimension_numbers = #tpu.dot_dimension_numbers<[1], [0], [0], [1], [0, 0, 1, 1], [], []>} : vector<8x128xf32>, vector<128x18xf32>, vector<8x18xf32> -> vector<8x18xf32>
    %63 = arith.mulf %62, %62 : vector<8x18xf32>
    %cst_49 = arith.constant dense<0.000000e+00> : vector<8xf32>
    %64 = vector.multi_reduction <add>, %63, %cst_49 [1] : vector<8x18xf32> to vector<8xf32>
    %65 = vector.shape_cast %64 : vector<8xf32> to vector<8x1xf32>
    %c1_50 = arith.constant 1 : index
    %c0_51 = arith.constant 0 : index
    %c0_52 = arith.constant 0 : index
    %66 = vector.load %arg8[%c1_50, %c0_51, %c0_52] : memref<2x18x36xf32, #tpu.memory_space<vmem>>, vector<1x18x36xf32>
    %67 = vector.shape_cast %66 : vector<1x18x36xf32> to vector<18x36xf32>
    %cst_53 = arith.constant dense<0.000000e+00> : vector<8x36xf32>
    %68 = tpu.matmul %62, %67, %cst_53 {dimension_numbers = #tpu.dot_dimension_numbers<[1], [0], [0], [1], [0, 0, 1, 1], [], []>} : vector<8x18xf32>, vector<18x36xf32>, vector<8x36xf32> -> vector<8x36xf32>
    %69 = arith.addf %56, %65 : vector<8x1xf32>
    %70 = arith.addf %59, %68 : vector<8x36xf32>
    %cst_54 = arith.constant 9.99999996E-13 : f32
    %71 = vector.broadcast %cst_54 : f32 to vector<8x1xf32>
    %72 = arith.addf %69, %71 : vector<8x1xf32>
    %73 = math.rsqrt %72 : vector<8x1xf32>
    %74 = vector.broadcast %73 : vector<8x1xf32> to vector<8x36xf32>
    %75 = arith.mulf %70, %74 : vector<8x36xf32>
    %c0_55 = arith.constant 0 : index
    %c0_56 = arith.constant 0 : index
    %76 = vector.load %arg1[%c0_55, %c0_56] : memref<8x8xf32, #tpu.memory_space<vmem>>, vector<8x8xf32>
    %cst_57 = arith.constant dense<0.000000e+00> : vector<8x36xf32>
    %77 = tpu.matmul %76, %75, %cst_57 {dimension_numbers = #tpu.dot_dimension_numbers<[1], [0], [0], [1], [0, 0, 1, 1], [], []>} : vector<8x8xf32>, vector<8x36xf32>, vector<8x36xf32> -> vector<8x36xf32>
    %c0_58 = arith.constant 0 : index
    %c0_59 = arith.constant 0 : index
    %78 = vector.load %arg9[%c0_58, %c0_59] : memref<1x36xf32, #tpu.memory_space<vmem>>, vector<1x36xf32>
    %79 = vector.broadcast %78 : vector<1x36xf32> to vector<8x36xf32>
    %80 = arith.addf %77, %79 : vector<8x36xf32>
    %cst_60 = arith.constant 0.000000e+00 : f32
    %81 = vector.broadcast %cst_60 : f32 to vector<8x36xf32>
    %82 = arith.maximumf %80, %81 : vector<8x36xf32>
    %c0_61 = arith.constant 0 : index
    %c0_62 = arith.constant 0 : index
    %83 = vector.load %arg10[%c0_61, %c0_62] : memref<36x5xf32, #tpu.memory_space<vmem>>, vector<36x5xf32>
    %cst_63 = arith.constant dense<0.000000e+00> : vector<8x5xf32>
    %84 = tpu.matmul %82, %83, %cst_63 {dimension_numbers = #tpu.dot_dimension_numbers<[1], [0], [0], [1], [0, 0, 1, 1], [], []>} : vector<8x36xf32>, vector<36x5xf32>, vector<8x5xf32> -> vector<8x5xf32>
    %cst_64 = arith.constant dense<0.000000e+00> : vector<8x5xf32>
    %85 = tpu.matmul %76, %84, %cst_64 {dimension_numbers = #tpu.dot_dimension_numbers<[1], [0], [0], [1], [0, 0, 1, 1], [], []>} : vector<8x8xf32>, vector<8x5xf32>, vector<8x5xf32> -> vector<8x5xf32>
    %c0_65 = arith.constant 0 : index
    %c0_66 = arith.constant 0 : index
    %86 = vector.load %arg11[%c0_65, %c0_66] : memref<1x5xf32, #tpu.memory_space<vmem>>, vector<1x5xf32>
    %87 = vector.broadcast %86 : vector<1x5xf32> to vector<8x5xf32>
    %88 = arith.addf %85, %87 : vector<8x5xf32>
    %cst_67 = arith.constant dense<0xFF800000> : vector<8xf32>
    %89 = vector.multi_reduction <maximumf>, %88, %cst_67 [1] : vector<8x5xf32> to vector<8xf32>
    %90 = vector.shape_cast %89 : vector<8xf32> to vector<8x1xf32>
    %91 = vector.broadcast %90 : vector<8x1xf32> to vector<8x5xf32>
    %92 = arith.subf %88, %91 : vector<8x5xf32>
    %93 = math.exp %92 : vector<8x5xf32>
    %cst_68 = arith.constant dense<0.000000e+00> : vector<8xf32>
    %94 = vector.multi_reduction <add>, %93, %cst_68 [1] : vector<8x5xf32> to vector<8xf32>
    %95 = vector.shape_cast %94 : vector<8xf32> to vector<8x1xf32>
    %96 = tpu.reciprocal %95 : vector<8x1xf32> -> vector<8x1xf32>
    %97 = vector.broadcast %96 : vector<8x1xf32> to vector<8x5xf32>
    %98 = arith.mulf %93, %97 : vector<8x5xf32>
    %c0_69 = arith.constant 0 : index
    %c0_70 = arith.constant 0 : index
    %99 = vector.load %arg12[%c0_69, %c0_70] : memref<8x5xf32, #tpu.memory_space<vmem>>, vector<8x5xf32>
    tpu.vector_store %arg12[%c0_69, %c0_70], %98 {strides = array<i32>} : memref<8x5xf32, #tpu.memory_space<vmem>>, vector<8x5xf32>,
    return
  }
}

</mosaic_0001>

<llo_original>
// kernel: hoggcn_forward.1
$region0: #{hoggcn_forward.1}
  #allocation0 [shape = 'u32[]', space=smem, size = 0x4, offset = 0x4, fixed_abs, tag = 'smem constant byte address 0x4 - core index']
  #allocation1 [shape = 'u32[144,128]{1,0:T(1,128)}', space=vmem, size = 0x12000, scoped, tag = 'internal scratch']
  %s0 = inlined_call_operand.vmem [shape: f32[384,16], index: 0, kind: input, shape index: {}]
  %s1 = inlined_call_operand.vmem [shape: f32[8,8], index: 1, kind: input, shape index: {}]
  %s2 = inlined_call_operand.vmem [shape: f32[128,384], index: 2, kind: input, shape index: {}]
  %s3 = inlined_call_operand.vmem [shape: f32[128,128], index: 3, kind: input, shape index: {}]
  %s4 = inlined_call_operand.vmem [shape: f32[16,16], index: 4, kind: input, shape index: {}]
  %s5 = inlined_call_operand.vmem [shape: f32[5,16,144], index: 5, kind: input, shape index: {}]
  %s6 = inlined_call_operand.vmem [shape: f32[144,18], index: 6, kind: input, shape index: {}]
  %s7 = inlined_call_operand.vmem [shape: f32[2,8,128], index: 7, kind: input, shape index: {}]
  %s8 = inlined_call_operand.vmem [shape: f32[2,18,36], index: 8, kind: input, shape index: {}]
  %s9 = inlined_call_operand.vmem [shape: f32[1,36], index: 9, kind: input, shape index: {}]
  %s10 = inlined_call_operand.vmem [shape: f32[36,5], index: 10, kind: input, shape index: {}]
  %s11 = inlined_call_operand.vmem [shape: f32[1,5], index: 11, kind: input, shape index: {}]
  %s12 = inlined_call_operand.hbm [shape: f32[8,5], index: 12, kind: output, shape index: {}]
  %s13 = sld [smem:[#allocation0]]
  $region58: #{hoggcn_forward.1} parent=0
    _
  %s15 = ssub.s32 1, %s13
  %s16 = scalar_select 0, %s15, %s13
  $region1: #{hoggcn_forward.1} parent=0
    #allocation2 [shape = 'u8[4096]{0}', space=vmem, size = 0x1000, scoped, tag = 'output window, operand 0, single buffered']
    #allocation3 [shape = 's32[1]{0}', space=sflag, size = 0x4, scoped, tag = 'scoped memory for hoggcn_forward.1']
    %17 = vsyncpa [#allocation3], 0
    // Predicated region
    $region2: #{hoggcn_forward.1} parent=1 // pred_check
      _
    $region3: #{hoggcn_forward.1} parent=1 // pred_check_branch
      %19 = sbr.rel (0) target = $region5
    $region4: #{hoggcn_forward.1} parent=1 // pred_region
      _
    $region5: #{hoggcn_forward.1} parent=1 // pred_fallthru
      _
    // Predicated region
    $region6: #{hoggcn_forward.1} parent=1 // pred_check
      _
    $region7: #{hoggcn_forward.1} parent=1 // pred_check_branch
      %21 = sbr.rel (0) target = $region9
    $region8: #{hoggcn_forward.1} parent=1 // pred_region
      _
    $region9: #{hoggcn_forward.1} parent=1 // pred_fallthru
      _
    // Predicated region
    $region10: #{hoggcn_forward.1} parent=1 // pred_check
      _
    $region11: #{hoggcn_forward.1} parent=1 // pred_check_branch
      %23 = sbr.rel (0) target = $region13
    $region12: #{hoggcn_forward.1} parent=1 // pred_region
      _
    $region13: #{hoggcn_forward.1} parent=1 // pred_fallthru
      _
    // Predicated region
    $region14: #{hoggcn_forward.1} parent=1 // pred_check
      _
    $region15: #{hoggcn_forward.1} parent=1 // pred_check_branch
      %25 = sbr.rel (0) target = $region17
    $region16: #{hoggcn_forward.1} parent=1 // pred_region
      _
    $region17: #{hoggcn_forward.1} parent=1 // pred_fallthru
      _
    // Predicated region
    $region18: #{hoggcn_forward.1} parent=1 // pred_check
      _
    $region19: #{hoggcn_forward.1} parent=1 // pred_check_branch
      %27 = sbr.rel (0) target = $region21
    $region20: #{hoggcn_forward.1} parent=1 // pred_region
      _
    $region21: #{hoggcn_forward.1} parent=1 // pred_fallthru
      _
    // Predicated region
    $region22: #{hoggcn_forward.1} parent=1 // pred_check
      _
    $region23: #{hoggcn_forward.1} parent=1 // pred_check_branch
      %29 = sbr.rel (0) target = $region25
    $region24: #{hoggcn_forward.1} parent=1 // pred_region
      _
    $region25: #{hoggcn_forward.1} parent=1 // pred_fallthru
      _
    // Predicated region
    $region26: #{hoggcn_forward.1} parent=1 // pred_check
      _
    $region27: #{hoggcn_forward.1} parent=1 // pred_check_branch
      %31 = sbr.rel (0) target = $region29
    $region28: #{hoggcn_forward.1} parent=1 // pred_region
      _
    $region29: #{hoggcn_forward.1} parent=1 // pred_fallthru
      _
    // Predicated region
    $region30: #{hoggcn_forward.1} parent=1 // pred_check
      _
    $region31: #{hoggcn_forward.1} parent=1 // pred_check_branch
      %33 = sbr.rel (0) target = $region33
    $region32: #{hoggcn_forward.1} parent=1 // pred_region
      _
    $region33: #{hoggcn_forward.1} parent=1 // pred_fallthru
      _
    // Predicated region
    $region34: #{hoggcn_forward.1} parent=1 // pred_check
      _
    $region35: #{hoggcn_forward.1} parent=1 // pred_check_branch
      %35 = sbr.rel (0) target = $region37
    $region36: #{hoggcn_forward.1} parent=1 // pred_region
      _
    $region37: #{hoggcn_forward.1} parent=1 // pred_fallthru
      _
    // Predicated region
    $region38: #{hoggcn_forward.1} parent=1 // pred_check
      _
    $region39: #{hoggcn_forward.1} parent=1 // pred_check_branch
      %37 = sbr.rel (0) target = $region41
    $region40: #{hoggcn_forward.1} parent=1 // pred_region
      _
    $region41: #{hoggcn_forward.1} parent=1 // pred_fallthru
      _
    // Predicated region
    $region42: #{hoggcn_forward.1} parent=1 // pred_check
      _
    $region43: #{hoggcn_forward.1} parent=1 // pred_check_branch
      %39 = sbr.rel (0) target = $region45
    $region44: #{hoggcn_forward.1} parent=1 // pred_region
      _
    $region45: #{hoggcn_forward.1} parent=1 // pred_fallthru
      _
    // Predicated region
    $region46: #{hoggcn_forward.1} parent=1 // pred_check
      _
    $region47: #{hoggcn_forward.1} parent=1 // pred_check_branch
      %41 = sbr.rel (0) target = $region49
    $region48: #{hoggcn_forward.1} parent=1 // pred_region
      _
    $region49: #{hoggcn_forward.1} parent=1 // pred_fallthru
      _
    %v42 = vld [vmem:[%s2] sm:$0xff]
    %v43 = vld [vmem:[%s2 + $0x8] sm:$0xff]
    %v44 = vld [vmem:[%s2 + $0x10] sm:$0xff]
    %v45 = vld [vmem:[%s2 + $0x18] sm:$0xff]
    %v46 = vld [vmem:[%s2 + $0x20] sm:$0xff]
    %v47 = vld [vmem:[%s2 + $0x28] sm:$0xff]
    %v48 = vld [vmem:[%s2 + $0x30] sm:$0xff]
    %v49 = vld [vmem:[%s2 + $0x38] sm:$0xff]
    %v50 = vld [vmem:[%s2 + $0x40] sm:$0xff]
    %v51 = vld [vmem:[%s2 + $0x48] sm:$0xff]
    %v52 = vld [vmem:[%s2 + $0x50] sm:$0xff]
    %v53 = vld [vmem:[%s2 + $0x58] sm:$0xff]
    %v54 = vld [vmem:[%s2 + $0x60] sm:$0xff]
    %v55 = vld [vmem:[%s2 + $0x68] sm:$0xff]
    %v56 = vld [vmem:[%s2 + $0x70] sm:$0xff]
    %v57 = vld [vmem:[%s2 + $0x78] sm:$0xff]
    %v58 = vld [vmem:[%s2 + $0x80] sm:$0xff]
    %v59 = vld [vmem:[%s2 + $0x88] sm:$0xff]
    %v60 = vld [vmem:[%s2 + $0x90] sm:$0xff]
    %v61 = vld [vmem:[%s2 + $0x98] sm:$0xff]
    %v62 = vld [vmem:[%s2 + $0xa0] sm:$0xff]
    %v63 = vld [vmem:[%s2 + $0xa8] sm:$0xff]
    %v64 = vld [vmem:[%s2 + $0xb0] sm:$0xff]
    %v65 = vld [vmem:[%s2 + $0xb8] sm:$0xff]
    %v66 = vld [vmem:[%s2 + $0xc0] sm:$0xff]
    %v67 = vld [vmem:[%s2 + $0xc8] sm:$0xff]
    %v68 = vld [vmem:[%s2 + $0xd0] sm:$0xff]
    %v69 = vld [vmem:[%s2 + $0xd8] sm:$0xff]
    %v70 = vld [vmem:[%s2 + $0xe0] sm:$0xff]
    %v71 = vld [vmem:[%s2 + $0xe8] sm:$0xff]
    %v72 = vld [vmem:[%s2 + $0xf0] sm:$0xff]
    %v73 = vld [vmem:[%s2 + $0xf8] sm:$0xff]
    %v74 = vld [vmem:[%s2 + $0x100] sm:$0xff]
    %v75 = vld [vmem:[%s2 + $0x108] sm:$0xff]
    %v76 = vld [vmem:[%s2 + $0x110] sm:$0xff]
    %v77 = vld [vmem:[%s2 + $0x118] sm:$0xff]
    %v78 = vld [vmem:[%s2 + $0x120] sm:$0xff]
    %v79 = vld [vmem:[%s2 + $0x128] sm:$0xff]
    %v80 = vld [vmem:[%s2 + $0x130] sm:$0xff]
    %v81 = vld [vmem:[%s2 + $0x138] sm:$0xff]
    %v82 = vld [vmem:[%s2 + $0x140] sm:$0xff]
    %v83 = vld [vmem:[%s2 + $0x148] sm:$0xff]
    %v84 = vld [vmem:[%s2 + $0x150] sm:$0xff]
    %v85 = vld [vmem:[%s2 + $0x158] sm:$0xff]
    %v86 = vld [vmem:[%s2 + $0x160] sm:$0xff]
    %v87 = vld [vmem:[%s2 + $0x168] sm:$0xff]
    %v88 = vld [vmem:[%s2 + $0x170] sm:$0xff]
    %v89 = vld [vmem:[%s2 + $0x178] sm:$0xff]
    %v90 = vld [vmem:[%s0] sm:$0xff]
    %v91 = vld [vmem:[%s0 + $0x8] sm:$0xff]
    %v92 = vld [vmem:[%s0 + $0x10] sm:$0xff]
    %v93 = vld [vmem:[%s0 + $0x18] sm:$0xff]
    %v94 = vld [vmem:[%s0 + $0x20] sm:$0xff]
    %v95 = vld [vmem:[%s0 + $0x28] sm:$0xff]
    %v96 = vld [vmem:[%s0 + $0x30] sm:$0xff]
    %v97 = vld [vmem:[%s0 + $0x38] sm:$0xff]
    %v98 = vld [vmem:[%s0 + $0x40] sm:$0xff]
    %v99 = vld [vmem:[%s0 + $0x48] sm:$0xff]
    %v100 = vld [vmem:[%s0 + $0x50] sm:$0xff]
    %v101 = vld [vmem:[%s0 + $0x58] sm:$0xff]
    %v102 = vld [vmem:[%s0 + $0x60] sm:$0xff]
    %v103 = vld [vmem:[%s0 + $0x68] sm:$0xff]
    %v104 = vld [vmem:[%s0 + $0x70] sm:$0xff]
    %v105 = vld [vmem:[%s0 + $0x78] sm:$0xff]
    %v106 = vld [vmem:[%s0 + $0x80] sm:$0xff]
    %v107 = vld [vmem:[%s0 + $0x88] sm:$0xff]
    %v108 = vld [vmem:[%s0 + $0x90] sm:$0xff]
    %v109 = vld [vmem:[%s0 + $0x98] sm:$0xff]
    %v110 = vld [vmem:[%s0 + $0xa0] sm:$0xff]
    %v111 = vld [vmem:[%s0 + $0xa8] sm:$0xff]
    %v112 = vld [vmem:[%s0 + $0xb0] sm:$0xff]
    %v113 = vld [vmem:[%s0 + $0xb8] sm:$0xff]
    %v114 = vld [vmem:[%s0 + $0xc0] sm:$0xff]
    %v115 = vld [vmem:[%s0 + $0xc8] sm:$0xff]
    %v116 = vld [vmem:[%s0 + $0xd0] sm:$0xff]
    %v117 = vld [vmem:[%s0 + $0xd8] sm:$0xff]
    %v118 = vld [vmem:[%s0 + $0xe0] sm:$0xff]
    %v119 = vld [vmem:[%s0 + $0xe8] sm:$0xff]
    %v120 = vld [vmem:[%s0 + $0xf0] sm:$0xff]
    %v121 = vld [vmem:[%s0 + $0xf8] sm:$0xff]
    %v122 = vld [vmem:[%s0 + $0x100] sm:$0xff]
    %v123 = vld [vmem:[%s0 + $0x108] sm:$0xff]
    %v124 = vld [vmem:[%s0 + $0x110] sm:$0xff]
    %v125 = vld [vmem:[%s0 + $0x118] sm:$0xff]
    %v126 = vld [vmem:[%s0 + $0x120] sm:$0xff]
    %v127 = vld [vmem:[%s0 + $0x128] sm:$0xff]
    %v128 = vld [vmem:[%s0 + $0x130] sm:$0xff]
    %v129 = vld [vmem:[%s0 + $0x138] sm:$0xff]
    %v130 = vld [vmem:[%s0 + $0x140] sm:$0xff]
    %v131 = vld [vmem:[%s0 + $0x148] sm:$0xff]
    %v132 = vld [vmem:[%s0 + $0x150] sm:$0xff]
    %v133 = vld [vmem:[%s0 + $0x158] sm:$0xff]
    %v134 = vld [vmem:[%s0 + $0x160] sm:$0xff]
    %v135 = vld [vmem:[%s0 + $0x168] sm:$0xff]
    %v136 = vld [vmem:[%s0 + $0x170] sm:$0xff]
    %v137 = vld [vmem:[%s0 + $0x178] sm:$0xff]
    %138 = vmatprep.subr.mxu0 0.0
    %139 = vmatpush1.msra.mxu0 %v90
    %140 = vmatprep.subr.mxu0 0.0
    %141 = vmatpush1.msra.mxu0 %v91
    %142 = vmatprep.subr.mxu0 0.0
    %143 = vmatpush1.msra.mxu0 %v92
    %144 = vmatprep.subr.mxu0 0.0
    %145 = vmatpush1.msra.mxu0 %v93
    %146 = vmatprep.subr.mxu0 0.0
    %147 = vmatpush1.msra.mxu0 %v94
    %148 = vmatprep.subr.mxu0 0.0
    %149 = vmatpush1.msra.mxu0 %v95
    %150 = vmatprep.subr.mxu0 0.0
    %151 = vmatpush1.msra.mxu0 %v96
    %152 = vmatprep.subr.mxu0 0.0
    %153 = vmatpush1.msra.mxu0 %v97
    %154 = vmatprep.subr.mxu0 0.0
    %155 = vmatpush1.msra.mxu0 %v98
    %156 = vmatprep.subr.mxu0 0.0
    %157 = vmatpush1.msra.mxu0 %v99
    %158 = vmatprep.subr.mxu0 0.0
    %159 = vmatpush1.msra.mxu0 %v100
    %160 = vmatprep.subr.mxu0 0.0
    %161 = vmatpush1.msra.mxu0 %v101
    %162 = vmatprep.subr.mxu0 0.0
    %163 = vmatpush1.msra.mxu0 %v102
    %164 = vmatprep.subr.mxu0 0.0
    %165 = vmatpush1.msra.mxu0 %v103
    %166 = vmatprep.subr.mxu0 0.0
    %167 = vmatpush1.msra.mxu0 %v104
    %168 = vmatprep.subr.mxu0 0.0
    %169 = vmatpush1.msra.mxu0 %v105
    %170 = vmatprep.subr.mxu0 0.0
    %171 = vmatpush1.msra.mxu0 %v106
    %172 = vmatprep.subr.mxu0 0.0
    %173 = vmatpush1.msra.mxu0 %v107
    %174 = vmatprep.subr.mxu0 0.0
    %175 = vmatpush1.msra.mxu0 %v108
    %176 = vmatprep.subr.mxu0 0.0
    %177 = vmatpush1.msra.mxu0 %v109
    %178 = vmatprep.subr.mxu0 0.0
    %179 = vmatpush1.msra.mxu0 %v110
    %180 = vmatprep.subr.mxu0 0.0
    %181 = vmatpush1.msra.mxu0 %v111
    %182 = vmatprep.subr.mxu0 0.0
    %183 = vmatpush1.msra.mxu0 %v112
    %184 = vmatprep.subr.mxu0 0.0
    %185 = vmatpush1.msra.mxu0 %v113
    %186 = vmatprep.subr.mxu0 0.0
    %187 = vmatpush1.msra.mxu0 %v114
    %188 = vmatprep.subr.mxu0 0.0
    %189 = vmatpush1.msra.mxu0 %v115
    %190 = vmatprep.subr.mxu0 0.0
    %191 = vmatpush1.msra.mxu0 %v116
    %192 = vmatprep.subr.mxu0 0.0
    %193 = vmatpush1.msra.mxu0 %v117
    %194 = vmatprep.subr.mxu0 0.0
    %195 = vmatpush1.msra.mxu0 %v118
    %196 = vmatprep.subr.mxu0 0.0
    %197 = vmatpush1.msra.mxu0 %v119
    %198 = vmatprep.subr.mxu0 0.0
    %199 = vmatpush1.msra.mxu0 %v120
    %200 = vmatprep.subr.mxu0 0.0
    %201 = vmatpush1.msra.mxu0 %v121
    %202 = vmatprep.mubr.f32.mxu0 %v43
    %203 = vmatmul.mubr.f32.gmra.mrb[0].mxu0 %v42
    %v204 = vpop.f32.mrb[0].mxu0
    %v205 = vadd.f32 0.0, %v204
    %v206 = vpop.f32.mrb[0].mxu0
    %207 = vmatprep.mubr.f32.mxu0 %v46
    %208 = vmatmul.mubr.f32.gmra.mrb[0].mxu0 %v45
    %v209 = vpop.f32.mrb[0].mxu0
    %v210 = vadd.f32 0.0, %v209
    %v211 = vpop.f32.mrb[0].mxu0
    %212 = vmatprep.mubr.f32.mxu0 %v49
    %213 = vmatmul.mubr.f32.gmra.mrb[0].mxu0 %v48
    %v214 = vpop.f32.mrb[0].mxu0
    %v215 = vadd.f32 0.0, %v214
    %v216 = vpop.f32.mrb[0].mxu0
    %217 = vmatprep.mubr.f32.mxu0 %v52
    %218 = vmatmul.mubr.f32.gmra.mrb[0].mxu0 %v51
    %v219 = vpop.f32.mrb[0].mxu0
    %v220 = vadd.f32 0.0, %v219
    %v221 = vpop.f32.mrb[0].mxu0
    %222 = vmatprep.mubr.f32.mxu0 %v55
    %223 = vmatmul.mubr.f32.gmra.mrb[0].mxu0 %v54
    %v224 = vpop.f32.mrb[0].mxu0
    %v225 = vadd.f32 0.0, %v224
    %v226 = vpop.f32.mrb[0].mxu0
    %227 = vmatprep.mubr.f32.mxu0 %v58
    %228 = vmatmul.mubr.f32.gmra.mrb[0].mxu0 %v57
    %v229 = vpop.f32.mrb[0].mxu0
    %v230 = vadd.f32 0.0, %v229
    %v231 = vpop.f32.mrb[0].mxu0
    %232 = vmatprep.mubr.f32.mxu0 %v61
    %233 = vmatmul.mubr.f32.gmra.mrb[0].mxu0 %v60
    %v234 = vpop.f32.mrb[0].mxu0
    %v235 = vadd.f32 0.0, %v234
    %v236 = vpop.f32.mrb[0].mxu0
    %237 = vmatprep.mubr.f32.mxu0 %v64
    %238 = vmatmul.mubr.f32.gmra.mrb[0].mxu0 %v63
    %v239 = vpop.f32.mrb[0].mxu0
    %v240 = vadd.f32 0.0, %v239
    %v241 = vpop.f32.mrb[0].mxu0
    %242 = vmatprep.mubr.f32.mxu0 %v67
    %243 = vmatmul.mubr.f32.gmra.mrb[0].mxu0 %v66
    %v244 = vpop.f32.mrb[0].mxu0
    %v245 = vadd.f32 0.0, %v244
    %v246 = vpop.f32.mrb[0].mxu0
    %247 = vmatprep.mubr.f32.mxu0 %v70
    %248 = vmatmul.mubr.f32.gmra.mrb[0].mxu0 %v69
    %v249 = vpop.f32.mrb[0].mxu0
    %v250 = vadd.f32 0.0, %v249
    %v251 = vpop.f32.mrb[0].mxu0
    %252 = vmatprep.mubr.f32.mxu0 %v73
    %253 = vmatmul.mubr.f32.gmra.mrb[0].mxu0 %v72
    %v254 = vpop.f32.mrb[0].mxu0
    %v255 = vadd.f32 0.0, %v254
    %v256 = vpop.f32.mrb[0].mxu0
    %257 = vmatprep.mubr.f32.mxu0 %v76
    %258 = vmatmul.mubr.f32.gmra.mrb[0].mxu0 %v75
    %v259 = vpop.f32.mrb[0].mxu0
    %v260 = vadd.f32 0.0, %v259
    %v261 = vpop.f32.mrb[0].mxu0
    %262 = vmatprep.mubr.f32.mxu0 %v79
    %263 = vmatmul.mubr.f32.gmra.mrb[0].mxu0 %v78
    %v264 = vpop.f32.mrb[0].mxu0
    %v265 = vadd.f32 0.0, %v264
    %v266 = vpop.f32.mrb[0].mxu0
    %267 = vmatprep.mubr.f32.mxu0 %v82
    %268 = vmatmul.mubr.f32.gmra.mrb[0].mxu0 %v81
    %v269 = vpop.f32.mrb[0].mxu0
    %v270 = vadd.f32 0.0, %v269
    %v271 = vpop.f32.mrb[0].mxu0
    %272 = vmatprep.mubr.f32.mxu0 %v85
    %273 = vmatmul.mubr.f32.gmra.mrb[0].mxu0 %v84
    %v274 = vpop.f32.mrb[0].mxu0
    %v275 = vadd.f32 0.0, %v274
    %v276 = vpop.f32.mrb[0].mxu0
    %277 = vmatprep.mubr.f32.mxu0 %v88
    %278 = vmatmul.mubr.f32.gmra.mrb[0].mxu0 %v87
    %v279 = vpop.f32.mrb[0].mxu0
    %v280 = vadd.f32 0.0, %v279
    %v281 = vpop.f32.mrb[0].mxu0
    %282 = vdwg.mxu0
    %283 = vmatprep.subr.mxu0 0.0
    %284 = vmatpush1.msra.mxu0 %v122
    %285 = vmatprep.subr.mxu0 0.0
    %286 = vmatpush1.msra.mxu0 %v123
    %287 = vmatprep.subr.mxu0 0.0
    %288 = vmatpush1.msra.mxu0 %v124
    %289 = vmatprep.subr.mxu0 0.0
    %290 = vmatpush1.msra.mxu0 %v125
    %291 = vmatprep.subr.mxu0 0.0
    %292 = vmatpush1.msra.mxu0 %v126
    %293 = vmatprep.subr.mxu0 0.0
    %294 = vmatpush1.msra.mxu0 %v127
    %295 = vmatprep.subr.mxu0 0.0
    %296 = vmatpush1.msra.mxu0 %v128
    %297 = vmatprep.subr.mxu0 0.0
    %298 = vmatpush1.msra.mxu0 %v129
    %299 = vmatprep.subr.mxu0 0.0
    %300 = vmatpush1.msra.mxu0 %v130
    %301 = vmatprep.subr.mxu0 0.0
    %302 = vmatpush1.msra.mxu0 %v131
    %303 = vmatprep.subr.mxu0 0.0
    %304 = vmatpush1.msra.mxu0 %v132
    %305 = vmatprep.subr.mxu0 0.0
    %306 = vmatpush1.msra.mxu0 %v133
    %307 = vmatprep.subr.mxu0 0.0
    %308 = vmatpush1.msra.mxu0 %v134
    %309 = vmatprep.subr.mxu0 0.0
    %310 = vmatpush1.msra.mxu0 %v135
    %311 = vmatprep.subr.mxu0 0.0
    %312 = vmatpush1.msra.mxu0 %v136
    %313 = vmatprep.subr.mxu0 0.0
    %314 = vmatpush1.msra.mxu0 %v137
    %315 = vmatprep.subr.mxu0 0.0
    %316 = vmatpush1.msra.mxu0 0.0
    %317 = vmatprep.subr.mxu0 0.0
    %318 = vmatpush1.msra.mxu0 0.0
    %319 = vmatprep.subr.mxu0 0.0
    %320 = vmatpush1.msra.mxu0 0.0
    %321 = vmatprep.subr.mxu0 0.0
    %322 = vmatpush1.msra.mxu0 0.0
    %323 = vmatprep.subr.mxu0 0.0
    %324 = vmatpush1.msra.mxu0 0.0
    %325 = vmatprep.subr.mxu0 0.0
    %326 = vmatpush1.msra.mxu0 0.0
    %327 = vmatprep.subr.mxu0 0.0
    %328 = vmatpush1.msra.mxu0 0.0
    %329 = vmatprep.subr.mxu0 0.0
    %330 = vmatpush1.msra.mxu0 0.0
    %331 = vmatprep.subr.mxu0 0.0
    %332 = vmatpush1.msra.mxu0 0.0
    %333 = vmatprep.subr.mxu0 0.0
    %334 = vmatpush1.msra.mxu0 0.0
    %335 = vmatprep.subr.mxu0 0.0
    %336 = vmatpush1.msra.mxu0 0.0
    %337 = vmatprep.subr.mxu0 0.0
    %338 = vmatpush1.msra.mxu0 0.0
    %339 = vmatprep.subr.mxu0 0.0
    %340 = vmatpush1.msra.mxu0 0.0
    %341 = vmatprep.subr.mxu0 0.0
    %342 = vmatpush1.msra.mxu0 0.0
    %343 = vmatprep.subr.mxu0 0.0
    %344 = vmatpush1.msra.mxu0 0.0
    %345 = vmatprep.subr.mxu0 0.0
    %346 = vmatpush1.msra.mxu0 0.0
    %347 = vmatprep.mubr.f32.mxu0 0.0
    %348 = vmatmul.mubr.f32.gmra.mrb[0].mxu0 %v44
    %v349 = vpop.f32.mrb[0].mxu0
    %v350 = vadd.f32 %v205, %v349
    %v351 = vpop.f32.mrb[0].mxu0
    %352 = vmatprep.mubr.f32.mxu0 0.0
    %353 = vmatmul.mubr.f32.gmra.mrb[0].mxu0 %v47
    %v354 = vpop.f32.mrb[0].mxu0
    %v355 = vadd.f32 %v210, %v354
    %v356 = vpop.f32.mrb[0].mxu0
    %357 = vmatprep.mubr.f32.mxu0 0.0
    %358 = vmatmul.mubr.f32.gmra.mrb[0].mxu0 %v50
    %v359 = vpop.f32.mrb[0].mxu0
    %v360 = vadd.f32 %v215, %v359
    %v361 = vpop.f32.mrb[0].mxu0
    %362 = vmatprep.mubr.f32.mxu0 0.0
    %363 = vmatmul.mubr.f32.gmra.mrb[0].mxu0 %v53
    %v364 = vpop.f32.mrb[0].mxu0
    %v365 = vadd.f32 %v220, %v364
    %v366 = vpop.f32.mrb[0].mxu0
    %367 = vmatprep.mubr.f32.mxu0 0.0
    %368 = vmatmul.mubr.f32.gmra.mrb[0].mxu0 %v56
    %v369 = vpop.f32.mrb[0].mxu0
    %v370 = vadd.f32 %v225, %v369
    %v371 = vpop.f32.mrb[0].mxu0
    %372 = vmatprep.mubr.f32.mxu0 0.0
    %373 = vmatmul.mubr.f32.gmra.mrb[0].mxu0 %v59
    %v374 = vpop.f32.mrb[0].mxu0
    %v375 = vadd.f32 %v230, %v374
    %v376 = vpop.f32.mrb[0].mxu0
    %377 = vmatprep.mubr.f32.mxu0 0.0
    %378 = vmatmul.mubr.f32.gmra.mrb[0].mxu0 %v62
    %v379 = vpop.f32.mrb[0].mxu0
    %v380 = vadd.f32 %v235, %v379
    %v381 = vpop.f32.mrb[0].mxu0
    %382 = vmatprep.mubr.f32.mxu0 0.0
    %383 = vmatmul.mubr.f32.gmra.mrb[0].mxu0 %v65
    %v384 = vpop.f32.mrb[0].mxu0
    %v385 = vadd.f32 %v240, %v384
    %v386 = vpop.f32.mrb[0].mxu0
    %387 = vmatprep.mubr.f32.mxu0 0.0
    %388 = vmatmul.mubr.f32.gmra.mrb[0].mxu0 %v68
    %v389 = vpop.f32.mrb[0].mxu0
    %v390 = vadd.f32 %v245, %v389
    %v391 = vpop.f32.mrb[0].mxu0
    %392 = vmatprep.mubr.f32.mxu0 0.0
    %393 = vmatmul.mubr.f32.gmra.mrb[0].mxu0 %v71
    %v394 = vpop.f32.mrb[0].mxu0
    %v395 = vadd.f32 %v250, %v394
    %v396 = vpop.f32.mrb[0].mxu0
    %397 = vmatprep.mubr.f32.mxu0 0.0
    %398 = vmatmul.mubr.f32.gmra.mrb[0].mxu0 %v74
    %v399 = vpop.f32.mrb[0].mxu0
    %v400 = vadd.f32 %v255, %v399
    %v401 = vpop.f32.mrb[0].mxu0
    %402 = vmatprep.mubr.f32.mxu0 0.0
    %403 = vmatmul.mubr.f32.gmra.mrb[0].mxu0 %v77
    %v404 = vpop.f32.mrb[0].mxu0
    %v405 = vadd.f32 %v260, %v404
    %v406 = vpop.f32.mrb[0].mxu0
    %407 = vmatprep.mubr.f32.mxu0 0.0
    %408 = vmatmul.mubr.f32.gmra.mrb[0].mxu0 %v80
    %v409 = vpop.f32.mrb[0].mxu0
    %v410 = vadd.f32 %v265, %v409
    %v411 = vpop.f32.mrb[0].mxu0
    %412 = vmatprep.mubr.f32.mxu0 0.0
    %413 = vmatmul.mubr.f32.gmra.mrb[0].mxu0 %v83
    %v414 = vpop.f32.mrb[0].mxu0
    %v415 = vadd.f32 %v270, %v414
    %v416 = vpop.f32.mrb[0].mxu0
    %417 = vmatprep.mubr.f32.mxu0 0.0
    %418 = vmatmul.mubr.f32.gmra.mrb[0].mxu0 %v86
    %v419 = vpop.f32.mrb[0].mxu0
    %v420 = vadd.f32 %v275, %v419
    %v421 = vpop.f32.mrb[0].mxu0
    %422 = vmatprep.mubr.f32.mxu0 0.0
    %423 = vmatmul.mubr.f32.gmra.mrb[0].mxu0 %v89
    %v424 = vpop.f32.mrb[0].mxu0
    %v425 = vadd.f32 %v280, %v424
    %v426 = vpop.f32.mrb[0].mxu0
    %427 = vdwg.mxu0
    %v428 = vld [vmem:[%s4] sm:$0xff]
    %v429 = vld [vmem:[%s4 + $0x8] sm:$0xff]
    %vm430 = vcmask 130048
    %v432 = vsel %vm430, %v350, 0
    %v435 = vsel %vm430, %v355, 0
    %v438 = vsel %vm430, %v360, 0
    %v441 = vsel %vm430, %v365, 0
    %v444 = vsel %vm430, %v370, 0
    %v447 = vsel %vm430, %v375, 0
    %v450 = vsel %vm430, %v380, 0
    %v453 = vsel %vm430, %v385, 0
    %v456 = vsel %vm430, %v390, 0
    %v459 = vsel %vm430, %v395, 0
    %v462 = vsel %vm430, %v400, 0
    %v465 = vsel %vm430, %v405, 0
    %v468 = vsel %vm430, %v410, 0
    %v471 = vsel %vm430, %v415, 0
    %v474 = vsel %vm430, %v420, 0
    %v477 = vsel %vm430, %v425, 0
    %479 = vmatprep.subr.mxu0 0.0
    %480 = vmatpush1.msra.mxu0 %v428
    %481 = vmatprep.subr.mxu0 0.0
    %482 = vmatpush1.msra.mxu0 %v429
    %483 = vmatprep.subr.mxu0 0.0
    %484 = vmatpush1.msra.mxu0 0.0
    %485 = vmatprep.subr.mxu0 0.0
    %486 = vmatpush1.msra.mxu0 0.0
    %487 = vmatprep.subr.mxu0 0.0
    %488 = vmatpush1.msra.mxu0 0.0
    %489 = vmatprep.subr.mxu0 0.0
    %490 = vmatpush1.msra.mxu0 0.0
    %491 = vmatprep.subr.mxu0 0.0
    %492 = vmatpush1.msra.mxu0 0.0
    %493 = vmatprep.subr.mxu0 0.0
    %494 = vmatpush1.msra.mxu0 0.0
    %495 = vmatprep.subr.mxu0 0.0
    %496 = vmatpush1.msra.mxu0 0.0
    %497 = vmatprep.subr.mxu0 0.0
    %498 = vmatpush1.msra.mxu0 0.0
    %499 = vmatprep.subr.mxu0 0.0
    %500 = vmatpush1.msra.mxu0 0.0
    %501 = vmatprep.subr.mxu0 0.0
    %502 = vmatpush1.msra.mxu0 0.0
    %503 = vmatprep.subr.mxu0 0.0
    %504 = vmatpush1.msra.mxu0 0.0
    %505 = vmatprep.subr.mxu0 0.0
    %506 = vmatpush1.msra.mxu0 0.0
    %507 = vmatprep.subr.mxu0 0.0
    %508 = vmatpush1.msra.mxu0 0.0
    %509 = vmatprep.subr.mxu0 0.0
    %510 = vmatpush1.msra.mxu0 0.0
    %511 = vmatprep.subr.mxu0 0.0
    %512 = vmatpush1.msra.mxu0 0.0
    %513 = vmatprep.subr.mxu0 0.0
    %514 = vmatpush1.msra.mxu0 0.0
    %515 = vmatprep.subr.mxu0 0.0
    %516 = vmatpush1.msra.mxu0 0.0
    %517 = vmatprep.subr.mxu0 0.0
    %518 = vmatpush1.msra.mxu0 0.0
    %519 = vmatprep.subr.mxu0 0.0
    %520 = vmatpush1.msra.mxu0 0.0
    %521 = vmatprep.subr.mxu0 0.0
    %522 = vmatpush1.msra.mxu0 0.0
    %523 = vmatprep.subr.mxu0 0.0
    %524 = vmatpush1.msra.mxu0 0.0
    %525 = vmatprep.subr.mxu0 0.0
    %526 = vmatpush1.msra.mxu0 0.0
    %527 = vmatprep.subr.mxu0 0.0
    %528 = vmatpush1.msra.mxu0 0.0
    %529 = vmatprep.subr.mxu0 0.0
    %530 = vmatpush1.msra.mxu0 0.0
    %531 = vmatprep.subr.mxu0 0.0
    %532 = vmatpush1.msra.mxu0 0.0
    %533 = vmatprep.subr.mxu0 0.0
    %534 = vmatpush1.msra.mxu0 0.0
    %535 = vmatprep.subr.mxu0 0.0
    %536 = vmatpush1.msra.mxu0 0.0
    %537 = vmatprep.subr.mxu0 0.0
    %538 = vmatpush1.msra.mxu0 0.0
    %539 = vmatprep.subr.mxu0 0.0
    %540 = vmatpush1.msra.mxu0 0.0
    %541 = vmatprep.subr.mxu0 0.0
    %542 = vmatpush1.msra.mxu0 0.0
    %543 = vmatprep.mubr.f32.mxu0 0.0
    %544 = vmatmul.mubr.f32.gmra.mrb[0].mxu0 %v432
    %v545 = vpop.f32.mrb[0].mxu0
    %v546 = vadd.f32 0.0, %v545
    %v547 = vpop.f32.mrb[0].mxu0
    %548 = vmatprep.mubr.f32.mxu0 0.0
    %549 = vmatmul.mubr.f32.gmra.mrb[0].mxu0 %v435
    %v550 = vpop.f32.mrb[0].mxu0
    %v551 = vadd.f32 0.0, %v550
    %v552 = vpop.f32.mrb[0].mxu0
    %553 = vmatprep.mubr.f32.mxu0 0.0
    %554 = vmatmul.mubr.f32.gmra.mrb[0].mxu0 %v438
    %v555 = vpop.f32.mrb[0].mxu0
    %v556 = vadd.f32 0.0, %v555
    %v557 = vpop.f32.mrb[0].mxu0
    %558 = vmatprep.mubr.f32.mxu0 0.0
    %559 = vmatmul.mubr.f32.gmra.mrb[0].mxu0 %v441
    %v560 = vpop.f32.mrb[0].mxu0
    %v561 = vadd.f32 0.0, %v560
    %v562 = vpop.f32.mrb[0].mxu0
    %563 = vmatprep.mubr.f32.mxu0 0.0
    %564 = vmatmul.mubr.f32.gmra.mrb[0].mxu0 %v444
    %v565 = vpop.f32.mrb[0].mxu0
    %v566 = vadd.f32 0.0, %v565
    %v567 = vpop.f32.mrb[0].mxu0
    %568 = vmatprep.mubr.f32.mxu0 0.0
    %569 = vmatmul.mubr.f32.gmra.mrb[0].mxu0 %v447
    %v570 = vpop.f32.mrb[0].mxu0
    %v571 = vadd.f32 0.0, %v570
    %v572 = vpop.f32.mrb[0].mxu0
    %573 = vmatprep.mubr.f32.mxu0 0.0
    %574 = vmatmul.mubr.f32.gmra.mrb[0].mxu0 %v450
    %v575 = vpop.f32.mrb[0].mxu0
    %v576 = vadd.f32 0.0, %v575
    %v577 = vpop.f32.mrb[0].mxu0
    %578 = vmatprep.mubr.f32.mxu0 0.0
    %579 = vmatmul.mubr.f32.gmra.mrb[0].mxu0 %v453
    %v580 = vpop.f32.mrb[0].mxu0
    %v581 = vadd.f32 0.0, %v580
    %v582 = vpop.f32.mrb[0].mxu0
    %583 = vmatprep.mubr.f32.mxu0 0.0
    %584 = vmatmul.mubr.f32.gmra.mrb[0].mxu0 %v456
    %v585 = vpop.f32.mrb[0].mxu0
    %v586 = vadd.f32 0.0, %v585
    %v587 = vpop.f32.mrb[0].mxu0
    %588 = vmatprep.mubr.f32.mxu0 0.0
    %589 = vmatmul.mubr.f32.gmra.mrb[0].mxu0 %v459
    %v590 = vpop.f32.mrb[0].mxu0
    %v591 = vadd.f32 0.0, %v590
    %v592 = vpop.f32.mrb[0].mxu0
    %593 = vmatprep.mubr.f32.mxu0 0.0
    %594 = vmatmul.mubr.f32.gmra.mrb[0].mxu0 %v462
    %v595 = vpop.f32.mrb[0].mxu0
    %v596 = vadd.f32 0.0, %v595
    %v597 = vpop.f32.mrb[0].mxu0
    %598 = vmatprep.mubr.f32.mxu0 0.0
    %599 = vmatmul.mubr.f32.gmra.mrb[0].mxu0 %v465
    %v600 = vpop.f32.mrb[0].mxu0
    %v601 = vadd.f32 0.0, %v600
    %v602 = vpop.f32.mrb[0].mxu0
    %603 = vmatprep.mubr.f32.mxu0 0.0
    %604 = vmatmul.mubr.f32.gmra.mrb[0].mxu0 %v468
    %v605 = vpop.f32.mrb[0].mxu0
    %v606 = vadd.f32 0.0, %v605
    %v607 = vpop.f32.mrb[0].mxu0
    %608 = vmatprep.mubr.f32.mxu0 0.0
    %609 = vmatmul.mubr.f32.gmra.mrb[0].mxu0 %v471
    %v610 = vpop.f32.mrb[0].mxu0
    %v611 = vadd.f32 0.0, %v610
    %v612 = vpop.f32.mrb[0].mxu0
    %613 = vmatprep.mubr.f32.mxu0 0.0
    %614 = vmatmul.mubr.f32.gmra.mrb[0].mxu0 %v474
    %v615 = vpop.f32.mrb[0].mxu0
    %v616 = vadd.f32 0.0, %v615
    %v617 = vpop.f32.mrb[0].mxu0
    %618 = vmatprep.mubr.f32.mxu0 0.0
    %619 = vmatmul.mubr.f32.gmra.mrb[0].mxu0 %v477
    %v620 = vpop.f32.mrb[0].mxu0
    %v621 = vadd.f32 0.0, %v620
    %v622 = vpop.f32.mrb[0].mxu0
    %623 = vdwg.mxu0
    %v624 = vld [vmem:[%s3] sm:$0xff]
    %v625 = vld [vmem:[%s3 + $0x8] sm:$0xff]
    %v626 = vld [vmem:[%s3 + $0x10] sm:$0xff]
    %v627 = vld [vmem:[%s3 + $0x18] sm:$0xff]
    %v628 = vld [vmem:[%s3 + $0x20] sm:$0xff]
    %v629 = vld [vmem:[%s3 + $0x28] sm:$0xff]
    %v630 = vld [vmem:[%s3 + $0x30] sm:$0xff]
    %v631 = vld [vmem:[%s3 + $0x38] sm:$0xff]
    %v632 = vld [vmem:[%s3 + $0x40] sm:$0xff]
    %v633 = vld [vmem:[%s3 + $0x48] sm:$0xff]
    %v634 = vld [vmem:[%s3 + $0x50] sm:$0xff]
    %v635 = vld [vmem:[%s3 + $0x58] sm:$0xff]
    %v636 = vld [vmem:[%s3 + $0x60] sm:$0xff]
    %v637 = vld [vmem:[%s3 + $0x68] sm:$0xff]
    %v638 = vld [vmem:[%s3 + $0x70] sm:$0xff]
    %v639 = vld [vmem:[%s3 + $0x78] sm:$0xff]
    %640 = vmatprep.subr.mxu0 0.0
    %641 = vmatpush1.msra.mxu0 %v350
    %642 = vmatprep.subr.mxu0 0.0
    %643 = vmatpush1.msra.mxu0 %v355
    %644 = vmatprep.subr.mxu0 0.0
    %645 = vmatpush1.msra.mxu0 %v360
    %646 = vmatprep.subr.mxu0 0.0
    %647 = vmatpush1.msra.mxu0 %v365
    %648 = vmatprep.subr.mxu0 0.0
    %649 = vmatpush1.msra.mxu0 %v370
    %650 = vmatprep.subr.mxu0 0.0
    %651 = vmatpush1.msra.mxu0 %v375
    %652 = vmatprep.subr.mxu0 0.0
    %653 = vmatpush1.msra.mxu0 %v380
    %654 = vmatprep.subr.mxu0 0.0
    %655 = vmatpush1.msra.mxu0 %v385
    %656 = vmatprep.subr.mxu0 0.0
    %657 = vmatpush1.msra.mxu0 %v390
    %658 = vmatprep.subr.mxu0 0.0
    %659 = vmatpush1.msra.mxu0 %v395
    %660 = vmatprep.subr.mxu0 0.0
    %661 = vmatpush1.msra.mxu0 %v400
    %662 = vmatprep.subr.mxu0 0.0
    %663 = vmatpush1.msra.mxu0 %v405
    %664 = vmatprep.subr.mxu0 0.0
    %665 = vmatpush1.msra.mxu0 %v410
    %666 = vmatprep.subr.mxu0 0.0
    %667 = vmatpush1.msra.mxu0 %v415
    %668 = vmatprep.subr.mxu0 0.0
    %669 = vmatpush1.msra.mxu0 %v420
    %670 = vmatprep.subr.mxu0 0.0
    %671 = vmatpush1.msra.mxu0 %v425
    %672 = vmatprep.subr.mxu0 0.0
    %673 = vmatpush1.msra.mxu0 0.0
    %674 = vmatprep.subr.mxu0 0.0
    %675 = vmatpush1.msra.mxu0 0.0
    %676 = vmatprep.subr.mxu0 0.0
    %677 = vmatpush1.msra.mxu0 0.0
    %678 = vmatprep.subr.mxu0 0.0
    %679 = vmatpush1.msra.mxu0 0.0
    %680 = vmatprep.subr.mxu0 0.0
    %681 = vmatpush1.msra.mxu0 0.0
    %682 = vmatprep.subr.mxu0 0.0
    %683 = vmatpush1.msra.mxu0 0.0
    %684 = vmatprep.subr.mxu0 0.0
    %685 = vmatpush1.msra.mxu0 0.0
    %686 = vmatprep.subr.mxu0 0.0
    %687 = vmatpush1.msra.mxu0 0.0
    %688 = vmatprep.subr.mxu0 0.0
    %689 = vmatpush1.msra.mxu0 0.0
    %690 = vmatprep.subr.mxu0 0.0
    %691 = vmatpush1.msra.mxu0 0.0
    %692 = vmatprep.subr.mxu0 0.0
    %693 = vmatpush1.msra.mxu0 0.0
    %694 = vmatprep.subr.mxu0 0.0
    %695 = vmatpush1.msra.mxu0 0.0
    %696 = vmatprep.subr.mxu0 0.0
    %697 = vmatpush1.msra.mxu0 0.0
    %698 = vmatprep.subr.mxu0 0.0
    %699 = vmatpush1.msra.mxu0 0.0
    %700 = vmatprep.subr.mxu0 0.0
    %701 = vmatpush1.msra.mxu0 0.0
    %702 = vmatprep.subr.mxu0 0.0
    %703 = vmatpush1.msra.mxu0 0.0
    %704 = vmatprep.mubr.f32.mxu0 0.0
    %705 = vmatmul.mubr.f32.gmra.mrb[0].mxu0 %v624
    %v706 = vpop.f32.mrb[0].mxu0
    %v707 = vadd.f32 0.0, %v706
    %v708 = vpop.f32.mrb[0].mxu0
    %709 = vmatprep.mubr.f32.mxu0 0.0
    %710 = vmatmul.mubr.f32.gmra.mrb[0].mxu0 %v625
    %v711 = vpop.f32.mrb[0].mxu0
    %v712 = vadd.f32 0.0, %v711
    %v713 = vpop.f32.mrb[0].mxu0
    %714 = vmatprep.mubr.f32.mxu0 0.0
    %715 = vmatmul.mubr.f32.gmra.mrb[0].mxu0 %v626
    %v716 = vpop.f32.mrb[0].mxu0
    %v717 = vadd.f32 0.0, %v716
    %v718 = vpop.f32.mrb[0].mxu0
    %719 = vmatprep.mubr.f32.mxu0 0.0
    %720 = vmatmul.mubr.f32.gmra.mrb[0].mxu0 %v627
    %v721 = vpop.f32.mrb[0].mxu0
    %v722 = vadd.f32 0.0, %v721
    %v723 = vpop.f32.mrb[0].mxu0
    %724 = vmatprep.mubr.f32.mxu0 0.0
    %725 = vmatmul.mubr.f32.gmra.mrb[0].mxu0 %v628
    %v726 = vpop.f32.mrb[0].mxu0
    %v727 = vadd.f32 0.0, %v726
    %v728 = vpop.f32.mrb[0].mxu0
    %729 = vmatprep.mubr.f32.mxu0 0.0
    %730 = vmatmul.mubr.f32.gmra.mrb[0].mxu0 %v629
    %v731 = vpop.f32.mrb[0].mxu0
    %v732 = vadd.f32 0.0, %v731
    %v733 = vpop.f32.mrb[0].mxu0
    %734 = vmatprep.mubr.f32.mxu0 0.0
    %735 = vmatmul.mubr.f32.gmra.mrb[0].mxu0 %v630
    %v736 = vpop.f32.mrb[0].mxu0
    %v737 = vadd.f32 0.0, %v736
    %v738 = vpop.f32.mrb[0].mxu0
    %739 = vmatprep.mubr.f32.mxu0 0.0
    %740 = vmatmul.mubr.f32.gmra.mrb[0].mxu0 %v631
    %v741 = vpop.f32.mrb[0].mxu0
    %v742 = vadd.f32 0.0, %v741
    %v743 = vpop.f32.mrb[0].mxu0
    %744 = vmatprep.mubr.f32.mxu0 0.0
    %745 = vmatmul.mubr.f32.gmra.mrb[0].mxu0 %v632
    %v746 = vpop.f32.mrb[0].mxu0
    %v747 = vadd.f32 0.0, %v746
    %v748 = vpop.f32.mrb[0].mxu0
    %749 = vmatprep.mubr.f32.mxu0 0.0
    %750 = vmatmul.mubr.f32.gmra.mrb[0].mxu0 %v633
    %v751 = vpop.f32.mrb[0].mxu0
    %v752 = vadd.f32 0.0, %v751
    %v753 = vpop.f32.mrb[0].mxu0
    %754 = vmatprep.mubr.f32.mxu0 0.0
    %755 = vmatmul.mubr.f32.gmra.mrb[0].mxu0 %v634
    %v756 = vpop.f32.mrb[0].mxu0
    %v757 = vadd.f32 0.0, %v756
    %v758 = vpop.f32.mrb[0].mxu0
    %759 = vmatprep.mubr.f32.mxu0 0.0
    %760 = vmatmul.mubr.f32.gmra.mrb[0].mxu0 %v635
    %v761 = vpop.f32.mrb[0].mxu0
    %v762 = vadd.f32 0.0, %v761
    %v763 = vpop.f32.mrb[0].mxu0
    %764 = vmatprep.mubr.f32.mxu0 0.0
    %765 = vmatmul.mubr.f32.gmra.mrb[0].mxu0 %v636
    %v766 = vpop.f32.mrb[0].mxu0
    %v767 = vadd.f32 0.0, %v766
    %v768 = vpop.f32.mrb[0].mxu0
    %769 = vmatprep.mubr.f32.mxu0 0.0
    %770 = vmatmul.mubr.f32.gmra.mrb[0].mxu0 %v637
    %v771 = vpop.f32.mrb[0].mxu0
    %v772 = vadd.f32 0.0, %v771
    %v773 = vpop.f32.mrb[0].mxu0
    %774 = vmatprep.mubr.f32.mxu0 0.0
    %775 = vmatmul.mubr.f32.gmra.mrb[0].mxu0 %v638
    %v776 = vpop.f32.mrb[0].mxu0
    %v777 = vadd.f32 0.0, %v776
    %v778 = vpop.f32.mrb[0].mxu0
    %779 = vmatprep.mubr.f32.mxu0 0.0
    %780 = vmatmul.mubr.f32.gmra.mrb[0].mxu0 %v639
    %v781 = vpop.f32.mrb[0].mxu0
    %v782 = vadd.f32 0.0, %v781
    %v783 = vpop.f32.mrb[0].mxu0
    %784 = vdwg.mxu0
    %vm785 = vcmp.lt.f32.partialorder %v707, 0.0
    %vm786 = vcmp.lt.f32.partialorder %v712, 0.0
    %vm787 = vcmp.lt.f32.partialorder %v717, 0.0
    %vm788 = vcmp.lt.f32.partialorder %v722, 0.0
    %vm789 = vcmp.lt.f32.partialorder %v727, 0.0
    %vm790 = vcmp.lt.f32.partialorder %v732, 0.0
    %vm791 = vcmp.lt.f32.partialorder %v737, 0.0
    %vm792 = vcmp.lt.f32.partialorder %v742, 0.0
    %vm793 = vcmp.lt.f32.partialorder %v747, 0.0
    %vm794 = vcmp.lt.f32.partialorder %v752, 0.0
    %vm795 = vcmp.lt.f32.partialorder %v757, 0.0
    %vm796 = vcmp.lt.f32.partialorder %v762, 0.0
    %vm797 = vcmp.lt.f32.partialorder %v767, 0.0
    %vm798 = vcmp.lt.f32.partialorder %v772, 0.0
    %vm799 = vcmp.lt.f32.partialorder %v777, 0.0
    %vm800 = vcmp.lt.f32.partialorder %v782, 0.0
    %vm801 = vcmp.eq.f32.partialorder %v707, 0.0
    %vm802 = vcmp.eq.f32.partialorder %v712, 0.0
    %vm803 = vcmp.eq.f32.partialorder %v717, 0.0
    %vm804 = vcmp.eq.f32.partialorder %v722, 0.0
    %vm805 = vcmp.eq.f32.partialorder %v727, 0.0
    %vm806 = vcmp.eq.f32.partialorder %v732, 0.0
    %vm807 = vcmp.eq.f32.partialorder %v737, 0.0
    %vm808 = vcmp.eq.f32.partialorder %v742, 0.0
    %vm809 = vcmp.eq.f32.partialorder %v747, 0.0
    %vm810 = vcmp.eq.f32.partialorder %v752, 0.0
    %vm811 = vcmp.eq.f32.partialorder %v757, 0.0
    %vm812 = vcmp.eq.f32.partialorder %v762, 0.0
    %vm813 = vcmp.eq.f32.partialorder %v767, 0.0
    %vm814 = vcmp.eq.f32.partialorder %v772, 0.0
    %vm815 = vcmp.eq.f32.partialorder %v777, 0.0
    %vm816 = vcmp.eq.f32.partialorder %v782, 0.0
    %vm817 = vcmp.lt.f32.partialorder %v546, 0.0
    %vm818 = vcmp.lt.f32.partialorder %v551, 0.0
    %vm819 = vcmp.lt.f32.partialorder %v556, 0.0
    %vm820 = vcmp.lt.f32.partialorder %v561, 0.0
    %vm821 = vcmp.lt.f32.partialorder %v566, 0.0
    %vm822 = vcmp.lt.f32.partialorder %v571, 0.0
    %vm823 = vcmp.lt.f32.partialorder %v576, 0.0
    %vm824 = vcmp.lt.f32.partialorder %v581, 0.0
    %vm825 = vcmp.lt.f32.partialorder %v586, 0.0
    %vm826 = vcmp.lt.f32.partialorder %v591, 0.0
    %vm827 = vcmp.lt.f32.partialorder %v596, 0.0
    %vm828 = vcmp.lt.f32.partialorder %v601, 0.0
    %vm829 = vcmp.lt.f32.partialorder %v606, 0.0
    %vm830 = vcmp.lt.f32.partialorder %v611, 0.0
    %vm831 = vcmp.lt.f32.partialorder %v616, 0.0
    %vm832 = vcmp.lt.f32.partialorder %v621, 0.0
    %vm833 = vmand %vm801, %vm817
    %vm834 = vmand %vm802, %vm818
    %vm835 = vmand %vm803, %vm819
    %vm836 = vmand %vm804, %vm820
    %vm837 = vmand %vm805, %vm821
    %vm838 = vmand %vm806, %vm822
    %vm839 = vmand %vm807, %vm823
    %vm840 = vmand %vm808, %vm824
    %vm841 = vmand %vm809, %vm825
    %vm842 = vmand %vm810, %vm826
    %vm843 = vmand %vm811, %vm827
    %vm844 = vmand %vm812, %vm828
    %vm845 = vmand %vm813, %vm829
    %vm846 = vmand %vm814, %vm830
    %vm847 = vmand %vm815, %vm831
    %vm848 = vmand %vm816, %vm832
    %vm849 = vmor %vm785, %vm833
    %vm850 = vmor %vm786, %vm834
    %vm851 = vmor %vm787, %vm835
    %vm852 = vmor %vm788, %vm836
    %vm853 = vmor %vm789, %vm837
    %vm854 = vmor %vm790, %vm838
    %vm855 = vmor %vm791, %vm839
    %vm856 = vmor %vm792, %vm840
    %vm857 = vmor %vm793, %vm841
    %vm858 = vmor %vm794, %vm842
    %vm859 = vmor %vm795, %vm843
    %vm860 = vmor %vm796, %vm844
    %vm861 = vmor %vm797, %vm845
    %vm862 = vmor %vm798, %vm846
    %vm863 = vmor %vm799, %vm847
    %vm864 = vmor %vm800, %vm848
    %v865 = vsub.f32 0.0, %v546
    %v866 = vsub.f32 0.0, %v551
    %v867 = vsub.f32 0.0, %v556
    %v868 = vsub.f32 0.0, %v561
    %v869 = vsub.f32 0.0, %v566
    %v870 = vsub.f32 0.0, %v571
    %v871 = vsub.f32 0.0, %v576
    %v872 = vsub.f32 0.0, %v581
    %v873 = vsub.f32 0.0, %v586
    %v874 = vsub.f32 0.0, %v591
    %v875 = vsub.f32 0.0, %v596
    %v876 = vsub.f32 0.0, %v601
    %v877 = vsub.f32 0.0, %v606
    %v878 = vsub.f32 0.0, %v611
    %v879 = vsub.f32 0.0, %v616
    %v880 = vsub.f32 0.0, %v621
    %v881 = vsel %vm849, %v865, %v546
    %v882 = vsel %vm850, %v866, %v551
    %v883 = vsel %vm851, %v867, %v556
    %v884 = vsel %vm852, %v868, %v561
    %v885 = vsel %vm853, %v869, %v566
    %v886 = vsel %vm854, %v870, %v571
    %v887 = vsel %vm855, %v871, %v576
    %v888 = vsel %vm856, %v872, %v581
    %v889 = vsel %vm857, %v873, %v586
    %v890 = vsel %vm858, %v874, %v591
    %v891 = vsel %vm859, %v875, %v596
    %v892 = vsel %vm860, %v876, %v601
    %v893 = vsel %vm861, %v877, %v606
    %v894 = vsel %vm862, %v878, %v611
    %v895 = vsel %vm863, %v879, %v616
    %v896 = vsel %vm864, %v880, %v621
    %v897 = vsub.f32 0.0, %v707
    %v898 = vsub.f32 0.0, %v712
    %v899 = vsub.f32 0.0, %v717
    %v900 = vsub.f32 0.0, %v722
    %v901 = vsub.f32 0.0, %v727
    %v902 = vsub.f32 0.0, %v732
    %v903 = vsub.f32 0.0, %v737
    %v904 = vsub.f32 0.0, %v742
    %v905 = vsub.f32 0.0, %v747
    %v906 = vsub.f32 0.0, %v752
    %v907 = vsub.f32 0.0, %v757
    %v908 = vsub.f32 0.0, %v762
    %v909 = vsub.f32 0.0, %v767
    %v910 = vsub.f32 0.0, %v772
    %v911 = vsub.f32 0.0, %v777
    %v912 = vsub.f32 0.0, %v782
    %v913 = vsel %vm849, %v897, %v707
    %v914 = vsel %vm850, %v898, %v712
    %v915 = vsel %vm851, %v899, %v717
    %v916 = vsel %vm852, %v900, %v722
    %v917 = vsel %vm853, %v901, %v727
    %v918 = vsel %vm854, %v902, %v732
    %v919 = vsel %vm855, %v903, %v737
    %v920 = vsel %vm856, %v904, %v742
    %v921 = vsel %vm857, %v905, %v747
    %v922 = vsel %vm858, %v906, %v752
    %v923 = vsel %vm859, %v907, %v757
    %v924 = vsel %vm860, %v908, %v762
    %v925 = vsel %vm861, %v909, %v767
    %v926 = vsel %vm862, %v910, %v772
    %v927 = vsel %vm863, %v911, %v777
    %v928 = vsel %vm864, %v912, %v782
    %v929 = vmul.f32 %v546, %v546
    %v930 = vmul.f32 %v551, %v551
    %v931 = vmul.f32 %v556, %v556
    %v932 = vmul.f32 %v561, %v561
    %v933 = vmul.f32 %v566, %v566
    %v934 = vmul.f32 %v571, %v571
    %v935 = vmul.f32 %v576, %v576
    %v936 = vmul.f32 %v581, %v581
    %v937 = vmul.f32 %v586, %v586
    %v938 = vmul.f32 %v591, %v591
    %v939 = vmul.f32 %v596, %v596
    %v940 = vmul.f32 %v601, %v601
    %v941 = vmul.f32 %v606, %v606
    %v942 = vmul.f32 %v611, %v611
    %v943 = vmul.f32 %v616, %v616
    %v944 = vmul.f32 %v621, %v621
    %v945 = vmul.f32 %v707, %v707
    %v946 = vmul.f32 %v712, %v712
    %v947 = vmul.f32 %v717, %v717
    %v948 = vmul.f32 %v722, %v722
    %v949 = vmul.f32 %v727, %v727
    %v950 = vmul.f32 %v732, %v732
    %v951 = vmul.f32 %v737, %v737
    %v952 = vmul.f32 %v742, %v742
    %v953 = vmul.f32 %v747, %v747
    %v954 = vmul.f32 %v752, %v752
    %v955 = vmul.f32 %v757, %v757
    %v956 = vmul.f32 %v762, %v762
    %v957 = vmul.f32 %v767, %v767
    %v958 = vmul.f32 %v772, %v772
    %v959 = vmul.f32 %v777, %v777
    %v960 = vmul.f32 %v782, %v782
    %v961 = vadd.f32 %v929, %v945
    %v962 = vadd.f32 %v930, %v946
    %v963 = vadd.f32 %v931, %v947
    %v964 = vadd.f32 %v932, %v948
    %v965 = vadd.f32 %v933, %v949
    %v966 = vadd.f32 %v934, %v950
    %v967 = vadd.f32 %v935, %v951
    %v968 = vadd.f32 %v936, %v952
    %v969 = vadd.f32 %v937, %v953
    %v970 = vadd.f32 %v938, %v954
    %v971 = vadd.f32 %v939, %v955
    %v972 = vadd.f32 %v940, %v956
    %v973 = vadd.f32 %v941, %v957
    %v974 = vadd.f32 %v942, %v958
    %v975 = vadd.f32 %v943, %v959
    %v976 = vadd.f32 %v944, %v960
    %v977 = vrsqrt.pop %v961
    %v978 = vmul.f32 %v961, %v977
    %vm979 = vcmp.eq.f32.partialorder %v961, inf
    %v980 = vsel %vm979, %v961, %v978
    %vm981 = vcmp.eq.f32.partialorder %v961, 0.0
    %v982 = vand.u32 %v961, 2147483648
    %v983 = vsel %vm981, %v982, %v980
    %v984 = vrsqrt.pop %v962
    %v985 = vmul.f32 %v962, %v984
    %vm986 = vcmp.eq.f32.partialorder %v962, inf
    %v987 = vsel %vm986, %v962, %v985
    %vm988 = vcmp.eq.f32.partialorder %v962, 0.0
    %v989 = vand.u32 %v962, 2147483648
    %v990 = vsel %vm988, %v989, %v987
    %v991 = vrsqrt.pop %v963
    %v992 = vmul.f32 %v963, %v991
    %vm993 = vcmp.eq.f32.partialorder %v963, inf
    %v994 = vsel %vm993, %v963, %v992
    %vm995 = vcmp.eq.f32.partialorder %v963, 0.0
    %v996 = vand.u32 %v963, 2147483648
    %v997 = vsel %vm995, %v996, %v994
    %v998 = vrsqrt.pop %v964
    %v999 = vmul.f32 %v964, %v998
    %vm1000 = vcmp.eq.f32.partialorder %v964, inf
    %v1001 = vsel %vm1000, %v964, %v999
    %vm1002 = vcmp.eq.f32.partialorder %v964, 0.0
    %v1003 = vand.u32 %v964, 2147483648
    %v1004 = vsel %vm1002, %v1003, %v1001
    %v1005 = vrsqrt.pop %v965
    %v1006 = vmul.f32 %v965, %v1005
    %vm1007 = vcmp.eq.f32.partialorder %v965, inf
    %v1008 = vsel %vm1007, %v965, %v1006
    %vm1009 = vcmp.eq.f32.partialorder %v965, 0.0
    %v1010 = vand.u32 %v965, 2147483648
    %v1011 = vsel %vm1009, %v1010, %v1008
    %v1012 = vrsqrt.pop %v966
    %v1013 = vmul.f32 %v966, %v1012
    %vm1014 = vcmp.eq.f32.partialorder %v966, inf
    %v1015 = vsel %vm1014, %v966, %v1013
    %vm1016 = vcmp.eq.f32.partialorder %v966, 0.0
    %v1017 = vand.u32 %v966, 2147483648
    %v1018 = vsel %vm1016, %v1017, %v1015
    %v1019 = vrsqrt.pop %v967
    %v1020 = vmul.f32 %v967, %v1019
    %vm1021 = vcmp.eq.f32.partialorder %v967, inf
    %v1022 = vsel %vm1021, %v967, %v1020
    %vm1023 = vcmp.eq.f32.partialorder %v967, 0.0
    %v1024 = vand.u32 %v967, 2147483648
    %v1025 = vsel %vm1023, %v1024, %v1022
    %v1026 = vrsqrt.pop %v968
    %v1027 = vmul.f32 %v968, %v1026
    %vm1028 = vcmp.eq.f32.partialorder %v968, inf
    %v1029 = vsel %vm1028, %v968, %v1027
    %vm1030 = vcmp.eq.f32.partialorder %v968, 0.0
    %v1031 = vand.u32 %v968, 2147483648
    %v1032 = vsel %vm1030, %v1031, %v1029
    %v1033 = vrsqrt.pop %v969
    %v1034 = vmul.f32 %v969, %v1033
    %vm1035 = vcmp.eq.f32.partialorder %v969, inf
    %v1036 = vsel %vm1035, %v969, %v1034
    %vm1037 = vcmp.eq.f32.partialorder %v969, 0.0
    %v1038 = vand.u32 %v969, 2147483648
    %v1039 = vsel %vm1037, %v1038, %v1036
    %v1040 = vrsqrt.pop %v970
    %v1041 = vmul.f32 %v970, %v1040
    %vm1042 = vcmp.eq.f32.partialorder %v970, inf
    %v1043 = vsel %vm1042, %v970, %v1041
    %vm1044 = vcmp.eq.f32.partialorder %v970, 0.0
    %v1045 = vand.u32 %v970, 2147483648
    %v1046 = vsel %vm1044, %v1045, %v1043
    %v1047 = vrsqrt.pop %v971
    %v1048 = vmul.f32 %v971, %v1047
    %vm1049 = vcmp.eq.f32.partialorder %v971, inf
    %v1050 = vsel %vm1049, %v971, %v1048
    %vm1051 = vcmp.eq.f32.partialorder %v971, 0.0
    %v1052 = vand.u32 %v971, 2147483648
    %v1053 = vsel %vm1051, %v1052, %v1050
    %v1054 = vrsqrt.pop %v972
    %v1055 = vmul.f32 %v972, %v1054
    %vm1056 = vcmp.eq.f32.partialorder %v972, inf
    %v1057 = vsel %vm1056, %v972, %v1055
    %vm1058 = vcmp.eq.f32.partialorder %v972, 0.0
    %v1059 = vand.u32 %v972, 2147483648
    %v1060 = vsel %vm1058, %v1059, %v1057
    %v1061 = vrsqrt.pop %v973
    %v1062 = vmul.f32 %v973, %v1061
    %vm1063 = vcmp.eq.f32.partialorder %v973, inf
    %v1064 = vsel %vm1063, %v973, %v1062
    %vm1065 = vcmp.eq.f32.partialorder %v973, 0.0
    %v1066 = vand.u32 %v973, 2147483648
    %v1067 = vsel %vm1065, %v1066, %v1064
    %v1068 = vrsqrt.pop %v974
    %v1069 = vmul.f32 %v974, %v1068
    %vm1070 = vcmp.eq.f32.partialorder %v974, inf
    %v1071 = vsel %vm1070, %v974, %v1069
    %vm1072 = vcmp.eq.f32.partialorder %v974, 0.0
    %v1073 = vand.u32 %v974, 2147483648
    %v1074 = vsel %vm1072, %v1073, %v1071
    %v1075 = vrsqrt.pop %v975
    %v1076 = vmul.f32 %v975, %v1075
    %vm1077 = vcmp.eq.f32.partialorder %v975, inf
    %v1078 = vsel %vm1077, %v975, %v1076
    %vm1079 = vcmp.eq.f32.partialorder %v975, 0.0
    %v1080 = vand.u32 %v975, 2147483648
    %v1081 = vsel %vm1079, %v1080, %v1078
    %v1082 = vrsqrt.pop %v976
    %v1083 = vmul.f32 %v976, %v1082
    %vm1084 = vcmp.eq.f32.partialorder %v976, inf
    %v1085 = vsel %vm1084, %v976, %v1083
    %vm1086 = vcmp.eq.f32.partialorder %v976, 0.0
    %v1087 = vand.u32 %v976, 2147483648
    %v1088 = vsel %vm1086, %v1087, %v1085
    %v1089 = vld [vmem:[%s5] sm:$0xff]
    %v1090 = vld [vmem:[%s5 + $0x8] sm:$0xff]
    %v1091 = vld [vmem:[%s5 + $0x10] sm:$0xff]
    %v1092 = vld [vmem:[%s5 + $0x18] sm:$0xff]
    %v1094 = vsel %vm430, %v983, 0
    %v1097 = vsel %vm430, %v990, 0
    %v1100 = vsel %vm430, %v997, 0
    %v1103 = vsel %vm430, %v1004, 0
    %v1106 = vsel %vm430, %v1011, 0
    %v1109 = vsel %vm430, %v1018, 0
    %v1112 = vsel %vm430, %v1025, 0
    %v1115 = vsel %vm430, %v1032, 0
    %v1118 = vsel %vm430, %v1039, 0
    %v1121 = vsel %vm430, %v1046, 0
    %v1124 = vsel %vm430, %v1053, 0
    %v1127 = vsel %vm430, %v1060, 0
    %v1130 = vsel %vm430, %v1067, 0
    %v1133 = vsel %vm430, %v1074, 0
    %v1136 = vsel %vm430, %v1081, 0
    %v1139 = vsel %vm430, %v1088, 0
    %1141 = vmatprep.subr.mxu0 %v1090
    %1142 = vmatpush1.msra.mxu0 %v1089
    %1143 = vmatprep.subr.mxu0 %v1092
    %1144 = vmatpush1.msra.mxu0 %v1091
    %1145 = vmatprep.subr.mxu0 0.0
    %1146 = vmatpush1.msra.mxu0 0.0
    %1147 = vmatprep.subr.mxu0 0.0
    %1148 = vmatpush1.msra.mxu0 0.0
    %1149 = vmatprep.subr.mxu0 0.0
    %1150 = vmatpush1.msra.mxu0 0.0
    %1151 = vmatprep.subr.mxu0 0.0
    %1152 = vmatpush1.msra.mxu0 0.0
    %1153 = vmatprep.subr.mxu0 0.0
    %1154 = vmatpush1.msra.mxu0 0.0
    %1155 = vmatprep.subr.mxu0 0.0
    %1156 = vmatpush1.msra.mxu0 0.0
    %1157 = vmatprep.subr.mxu0 0.0
    %1158 = vmatpush1.msra.mxu0 0.0
    %1159 = vmatprep.subr.mxu0 0.0
    %1160 = vmatpush1.msra.mxu0 0.0
    %1161 = vmatprep.subr.mxu0 0.0
    %1162 = vmatpush1.msra.mxu0 0.0
    %1163 = vmatprep.subr.mxu0 0.0
    %1164 = vmatpush1.msra.mxu0 0.0
    %1165 = vmatprep.subr.mxu0 0.0
    %1166 = vmatpush1.msra.mxu0 0.0
    %1167 = vmatprep.subr.mxu0 0.0
    %1168 = vmatpush1.msra.mxu0 0.0
    %1169 = vmatprep.subr.mxu0 0.0
    %1170 = vmatpush1.msra.mxu0 0.0
    %1171 = vmatprep.subr.mxu0 0.0
    %1172 = vmatpush1.msra.mxu0 0.0
    %1173 = vmatprep.subr.mxu0 0.0
    %1174 = vmatpush1.msra.mxu0 0.0
    %1175 = vmatprep.subr.mxu0 0.0
    %1176 = vmatpush1.msra.mxu0 0.0
    %1177 = vmatprep.subr.mxu0 0.0
    %1178 = vmatpush1.msra.mxu0 0.0
    %1179 = vmatprep.subr.mxu0 0.0
    %1180 = vmatpush1.msra.mxu0 0.0
    %1181 = vmatprep.subr.mxu0 0.0
    %1182 = vmatpush1.msra.mxu0 0.0
    %1183 = vmatprep.subr.mxu0 0.0
    %1184 = vmatpush1.msra.mxu0 0.0
    %1185 = vmatprep.subr.mxu0 0.0
    %1186 = vmatpush1.msra.mxu0 0.0
    %1187 = vmatprep.subr.mxu0 0.0
    %1188 = vmatpush1.msra.mxu0 0.0
    %1189 = vmatprep.subr.mxu0 0.0
    %1190 = vmatpush1.msra.mxu0 0.0
    %1191 = vmatprep.subr.mxu0 0.0
    %1192 = vmatpush1.msra.mxu0 0.0
    %1193 = vmatprep.subr.mxu0 0.0
    %1194 = vmatpush1.msra.mxu0 0.0
    %1195 = vmatprep.subr.mxu0 0.0
    %1196 = vmatpush1.msra.mxu0 0.0
    %1197 = vmatprep.subr.mxu0 0.0
    %1198 = vmatpush1.msra.mxu0 0.0
    %1199 = vmatprep.subr.mxu0 0.0
    %1200 = vmatpush1.msra.mxu0 0.0
    %1201 = vmatprep.subr.mxu0 0.0
    %1202 = vmatpush1.msra.mxu0 0.0
    %1203 = vmatprep.subr.mxu0 0.0
    %1204 = vmatpush1.msra.mxu0 0.0
    %1205 = vmatprep.mubr.f32.mxu0 0.0
    %1206 = vmatmul.mubr.f32.gmra.mrb[0].mxu0 %v1094
    %v1207 = vpop.f32.mrb[0].mxu0
    %v1208 = vadd.f32 0.0, %v1207
    %v1209 = vpop.f32.mrb[0].mxu0
    %v1210 = vadd.f32 0.0, %v1209
    %1211 = vmatprep.mubr.f32.mxu0 0.0
    %1212 = vmatmul.mubr.f32.gmra.mrb[0].mxu0 %v1097
    %v1213 = vpop.f32.mrb[0].mxu0
    %v1214 = vadd.f32 0.0, %v1213
    %v1215 = vpop.f32.mrb[0].mxu0
    %v1216 = vadd.f32 0.0, %v1215
    %1217 = vmatprep.mubr.f32.mxu0 0.0
    %1218 = vmatmul.mubr.f32.gmra.mrb[0].mxu0 %v1100
    %v1219 = vpop.f32.mrb[0].mxu0
    %v1220 = vadd.f32 0.0, %v1219
    %v1221 = vpop.f32.mrb[0].mxu0
    %v1222 = vadd.f32 0.0, %v1221
    %1223 = vmatprep.mubr.f32.mxu0 0.0
    %1224 = vmatmul.mubr.f32.gmra.mrb[0].mxu0 %v1103
    %v1225 = vpop.f32.mrb[0].mxu0
    %v1226 = vadd.f32 0.0, %v1225
    %v1227 = vpop.f32.mrb[0].mxu0
    %v1228 = vadd.f32 0.0, %v1227
    %1229 = vmatprep.mubr.f32.mxu0 0.0
    %1230 = vmatmul.mubr.f32.gmra.mrb[0].mxu0 %v1106
    %v1231 = vpop.f32.mrb[0].mxu0
    %v1232 = vadd.f32 0.0, %v1231
    %v1233 = vpop.f32.mrb[0].mxu0
    %v1234 = vadd.f32 0.0, %v1233
    %1235 = vmatprep.mubr.f32.mxu0 0.0
    %1236 = vmatmul.mubr.f32.gmra.mrb[0].mxu0 %v1109
    %v1237 = vpop.f32.mrb[0].mxu0
    %v1238 = vadd.f32 0.0, %v1237
    %v1239 = vpop.f32.mrb[0].mxu0
    %v1240 = vadd.f32 0.0, %v1239
    %1241 = vmatprep.mubr.f32.mxu0 0.0
    %1242 = vmatmul.mubr.f32.gmra.mrb[0].mxu0 %v1112
    %v1243 = vpop.f32.mrb[0].mxu0
    %v1244 = vadd.f32 0.0, %v1243
    %v1245 = vpop.f32.mrb[0].mxu0
    %v1246 = vadd.f32 0.0, %v1245
    %1247 = vmatprep.mubr.f32.mxu0 0.0
    %1248 = vmatmul.mubr.f32.gmra.mrb[0].mxu0 %v1115
    %v1249 = vpop.f32.mrb[0].mxu0
    %v1250 = vadd.f32 0.0, %v1249
    %v1251 = vpop.f32.mrb[0].mxu0
    %v1252 = vadd.f32 0.0, %v1251
    %1253 = vmatprep.mubr.f32.mxu0 0.0
    %1254 = vmatmul.mubr.f32.gmra.mrb[0].mxu0 %v1118
    %v1255 = vpop.f32.mrb[0].mxu0
    %v1256 = vadd.f32 0.0, %v1255
    %v1257 = vpop.f32.mrb[0].mxu0
    %v1258 = vadd.f32 0.0, %v1257
    %1259 = vmatprep.mubr.f32.mxu0 0.0
    %1260 = vmatmul.mubr.f32.gmra.mrb[0].mxu0 %v1121
    %v1261 = vpop.f32.mrb[0].mxu0
    %v1262 = vadd.f32 0.0, %v1261
    %v1263 = vpop.f32.mrb[0].mxu0
    %v1264 = vadd.f32 0.0, %v1263
    %1265 = vmatprep.mubr.f32.mxu0 0.0
    %1266 = vmatmul.mubr.f32.gmra.mrb[0].mxu0 %v1124
    %v1267 = vpop.f32.mrb[0].mxu0
    %v1268 = vadd.f32 0.0, %v1267
    %v1269 = vpop.f32.mrb[0].mxu0
    %v1270 = vadd.f32 0.0, %v1269
    %1271 = vmatprep.mubr.f32.mxu0 0.0
    %1272 = vmatmul.mubr.f32.gmra.mrb[0].mxu0 %v1127
    %v1273 = vpop.f32.mrb[0].mxu0
    %v1274 = vadd.f32 0.0, %v1273
    %v1275 = vpop.f32.mrb[0].mxu0
    %v1276 = vadd.f32 0.0, %v1275
    %1277 = vmatprep.mubr.f32.mxu0 0.0
    %1278 = vmatmul.mubr.f32.gmra.mrb[0].mxu0 %v1130
    %v1279 = vpop.f32.mrb[0].mxu0
    %v1280 = vadd.f32 0.0, %v1279
    %v1281 = vpop.f32.mrb[0].mxu0
    %v1282 = vadd.f32 0.0, %v1281
    %1283 = vmatprep.mubr.f32.mxu0 0.0
    %1284 = vmatmul.mubr.f32.gmra.mrb[0].mxu0 %v1133
    %v1285 = vpop.f32.mrb[0].mxu0
    %v1286 = vadd.f32 0.0, %v1285
    %v1287 = vpop.f32.mrb[0].mxu0
    %v1288 = vadd.f32 0.0, %v1287
    %1289 = vmatprep.mubr.f32.mxu0 0.0
    %1290 = vmatmul.mubr.f32.gmra.mrb[0].mxu0 %v1136
    %v1291 = vpop.f32.mrb[0].mxu0
    %v1292 = vadd.f32 0.0, %v1291
    %v1293 = vpop.f32.mrb[0].mxu0
    %v1294 = vadd.f32 0.0, %v1293
    %1295 = vmatprep.mubr.f32.mxu0 0.0
    %1296 = vmatmul.mubr.f32.gmra.mrb[0].mxu0 %v1139
    %v1297 = vpop.f32.mrb[0].mxu0
    %v1298 = vadd.f32 0.0, %v1297
    %v1299 = vpop.f32.mrb[0].mxu0
    %v1300 = vadd.f32 0.0, %v1299
    %1301 = vdwg.mxu0
    %s1302 = scalar_lea.vmem %s5, 32
    %v1303 = vld [vmem:[%s1302] sm:$0xff]
    %v1304 = vld [vmem:[%s1302 + $0x8] sm:$0xff]
    %v1305 = vld [vmem:[%s1302 + $0x10] sm:$0xff]
    %v1306 = vld [vmem:[%s1302 + $0x18] sm:$0xff]
    %v1308 = vsel %vm430, %v913, 0
    %v1311 = vsel %vm430, %v914, 0
    %v1314 = vsel %vm430, %v915, 0
    %v1317 = vsel %vm430, %v916, 0
    %v1320 = vsel %vm430, %v917, 0
    %v1323 = vsel %vm430, %v918, 0
    %v1326 = vsel %vm430, %v919, 0
    %v1329 = vsel %vm430, %v920, 0
    %v1332 = vsel %vm430, %v921, 0
    %v1335 = vsel %vm430, %v922, 0
    %v1338 = vsel %vm430, %v923, 0
    %v1341 = vsel %vm430, %v924, 0
    %v1344 = vsel %vm430, %v925, 0
    %v1347 = vsel %vm430, %v926, 0
    %v1350 = vsel %vm430, %v927, 0
    %v1353 = vsel %vm430, %v928, 0
    %1355 = vmatprep.subr.mxu0 %v1304
    %1356 = vmatpush1.msra.mxu0 %v1303
    %1357 = vmatprep.subr.mxu0 %v1306
    %1358 = vmatpush1.msra.mxu0 %v1305
    %1359 = vmatprep.subr.mxu0 0.0
    %1360 = vmatpush1.msra.mxu0 0.0
    %1361 = vmatprep.subr.mxu0 0.0
    %1362 = vmatpush1.msra.mxu0 0.0
    %1363 = vmatprep.subr.mxu0 0.0
    %1364 = vmatpush1.msra.mxu0 0.0
    %1365 = vmatprep.subr.mxu0 0.0
    %1366 = vmatpush1.msra.mxu0 0.0
    %1367 = vmatprep.subr.mxu0 0.0
    %1368 = vmatpush1.msra.mxu0 0.0
    %1369 = vmatprep.subr.mxu0 0.0
    %1370 = vmatpush1.msra.mxu0 0.0
    %1371 = vmatprep.subr.mxu0 0.0
    %1372 = vmatpush1.msra.mxu0 0.0
    %1373 = vmatprep.subr.mxu0 0.0
    %1374 = vmatpush1.msra.mxu0 0.0
    %1375 = vmatprep.subr.mxu0 0.0
    %1376 = vmatpush1.msra.mxu0 0.0
    %1377 = vmatprep.subr.mxu0 0.0
    %1378 = vmatpush1.msra.mxu0 0.0
    %1379 = vmatprep.subr.mxu0 0.0
    %1380 = vmatpush1.msra.mxu0 0.0
    %1381 = vmatprep.subr.mxu0 0.0
    %1382 = vmatpush1.msra.mxu0 0.0
    %1383 = vmatprep.subr.mxu0 0.0
    %1384 = vmatpush1.msra.mxu0 0.0
    %1385 = vmatprep.subr.mxu0 0.0
    %1386 = vmatpush1.msra.mxu0 0.0
    %1387 = vmatprep.subr.mxu0 0.0
    %1388 = vmatpush1.msra.mxu0 0.0
    %1389 = vmatprep.subr.mxu0 0.0
    %1390 = vmatpush1.msra.mxu0 0.0
    %1391 = vmatprep.subr.mxu0 0.0
    %1392 = vmatpush1.msra.mxu0 0.0
    %1393 = vmatprep.subr.mxu0 0.0
    %1394 = vmatpush1.msra.mxu0 0.0
    %1395 = vmatprep.subr.mxu0 0.0
    %1396 = vmatpush1.msra.mxu0 0.0
    %1397 = vmatprep.subr.mxu0 0.0
    %1398 = vmatpush1.msra.mxu0 0.0
    %1399 = vmatprep.subr.mxu0 0.0
    %1400 = vmatpush1.msra.mxu0 0.0
    %1401 = vmatprep.subr.mxu0 0.0
    %1402 = vmatpush1.msra.mxu0 0.0
    %1403 = vmatprep.subr.mxu0 0.0
    %1404 = vmatpush1.msra.mxu0 0.0
    %1405 = vmatprep.subr.mxu0 0.0
    %1406 = vmatpush1.msra.mxu0 0.0
    %1407 = vmatprep.subr.mxu0 0.0
    %1408 = vmatpush1.msra.mxu0 0.0
    %1409 = vmatprep.subr.mxu0 0.0
    %1410 = vmatpush1.msra.mxu0 0.0
    %1411 = vmatprep.subr.mxu0 0.0
    %1412 = vmatpush1.msra.mxu0 0.0
    %1413 = vmatprep.subr.mxu0 0.0
    %1414 = vmatpush1.msra.mxu0 0.0
    %1415 = vmatprep.subr.mxu0 0.0
    %1416 = vmatpush1.msra.mxu0 0.0
    %1417 = vmatprep.subr.mxu0 0.0
    %1418 = vmatpush1.msra.mxu0 0.0
    %1419 = vmatprep.mubr.f32.mxu0 0.0
    %1420 = vmatmul.mubr.f32.gmra.mrb[0].mxu0 %v1308
    %v1421 = vpop.f32.mrb[0].mxu0
    %v1422 = vadd.f32 0.0, %v1421
    %v1423 = vpop.f32.mrb[0].mxu0
    %v1424 = vadd.f32 0.0, %v1423
    %1425 = vmatprep.mubr.f32.mxu0 0.0
    %1426 = vmatmul.mubr.f32.gmra.mrb[0].mxu0 %v1311
    %v1427 = vpop.f32.mrb[0].mxu0
    %v1428 = vadd.f32 0.0, %v1427
    %v1429 = vpop.f32.mrb[0].mxu0
    %v1430 = vadd.f32 0.0, %v1429
    %1431 = vmatprep.mubr.f32.mxu0 0.0
    %1432 = vmatmul.mubr.f32.gmra.mrb[0].mxu0 %v1314
    %v1433 = vpop.f32.mrb[0].mxu0
    %v1434 = vadd.f32 0.0, %v1433
    %v1435 = vpop.f32.mrb[0].mxu0
    %v1436 = vadd.f32 0.0, %v1435
    %1437 = vmatprep.mubr.f32.mxu0 0.0
    %1438 = vmatmul.mubr.f32.gmra.mrb[0].mxu0 %v1317
    %v1439 = vpop.f32.mrb[0].mxu0
    %v1440 = vadd.f32 0.0, %v1439
    %v1441 = vpop.f32.mrb[0].mxu0
    %v1442 = vadd.f32 0.0, %v1441
    %1443 = vmatprep.mubr.f32.mxu0 0.0
    %1444 = vmatmul.mubr.f32.gmra.mrb[0].mxu0 %v1320
    %v1445 = vpop.f32.mrb[0].mxu0
    %v1446 = vadd.f32 0.0, %v1445
    %v1447 = vpop.f32.mrb[0].mxu0
    %v1448 = vadd.f32 0.0, %v1447
    %1449 = vmatprep.mubr.f32.mxu0 0.0
    %1450 = vmatmul.mubr.f32.gmra.mrb[0].mxu0 %v1323
    %v1451 = vpop.f32.mrb[0].mxu0
    %v1452 = vadd.f32 0.0, %v1451
    %v1453 = vpop.f32.mrb[0].mxu0
    %v1454 = vadd.f32 0.0, %v1453
    %1455 = vmatprep.mubr.f32.mxu0 0.0
    %1456 = vmatmul.mubr.f32.gmra.mrb[0].mxu0 %v1326
    %v1457 = vpop.f32.mrb[0].mxu0
    %v1458 = vadd.f32 0.0, %v1457
    %v1459 = vpop.f32.mrb[0].mxu0
    %v1460 = vadd.f32 0.0, %v1459
    %1461 = vmatprep.mubr.f32.mxu0 0.0
    %1462 = vmatmul.mubr.f32.gmra.mrb[0].mxu0 %v1329
    %v1463 = vpop.f32.mrb[0].mxu0
    %v1464 = vadd.f32 0.0, %v1463
    %v1465 = vpop.f32.mrb[0].mxu0
    %v1466 = vadd.f32 0.0, %v1465
    %1467 = vmatprep.mubr.f32.mxu0 0.0
    %1468 = vmatmul.mubr.f32.gmra.mrb[0].mxu0 %v1332
    %v1469 = vpop.f32.mrb[0].mxu0
    %v1470 = vadd.f32 0.0, %v1469
    %v1471 = vpop.f32.mrb[0].mxu0
    %v1472 = vadd.f32 0.0, %v1471
    %1473 = vmatprep.mubr.f32.mxu0 0.0
    %1474 = vmatmul.mubr.f32.gmra.mrb[0].mxu0 %v1335
    %v1475 = vpop.f32.mrb[0].mxu0
    %v1476 = vadd.f32 0.0, %v1475
    %v1477 = vpop.f32.mrb[0].mxu0
    %v1478 = vadd.f32 0.0, %v1477
    %1479 = vmatprep.mubr.f32.mxu0 0.0
    %1480 = vmatmul.mubr.f32.gmra.mrb[0].mxu0 %v1338
    %v1481 = vpop.f32.mrb[0].mxu0
    %v1482 = vadd.f32 0.0, %v1481
    %v1483 = vpop.f32.mrb[0].mxu0
    %v1484 = vadd.f32 0.0, %v1483
    %1485 = vmatprep.mubr.f32.mxu0 0.0
    %1486 = vmatmul.mubr.f32.gmra.mrb[0].mxu0 %v1341
    %v1487 = vpop.f32.mrb[0].mxu0
    %v1488 = vadd.f32 0.0, %v1487
    %v1489 = vpop.f32.mrb[0].mxu0
    %v1490 = vadd.f32 0.0, %v1489
    %1491 = vmatprep.mubr.f32.mxu0 0.0
    %1492 = vmatmul.mubr.f32.gmra.mrb[0].mxu0 %v1344
    %v1493 = vpop.f32.mrb[0].mxu0
    %v1494 = vadd.f32 0.0, %v1493
    %v1495 = vpop.f32.mrb[0].mxu0
    %v1496 = vadd.f32 0.0, %v1495
    %1497 = vmatprep.mubr.f32.mxu0 0.0
    %1498 = vmatmul.mubr.f32.gmra.mrb[0].mxu0 %v1347
    %v1499 = vpop.f32.mrb[0].mxu0
    %v1500 = vadd.f32 0.0, %v1499
    %v1501 = vpop.f32.mrb[0].mxu0
    %v1502 = vadd.f32 0.0, %v1501
    %1503 = vmatprep.mubr.f32.mxu0 0.0
    %1504 = vmatmul.mubr.f32.gmra.mrb[0].mxu0 %v1350
    %v1505 = vpop.f32.mrb[0].mxu0
    %v1506 = vadd.f32 0.0, %v1505
    %v1507 = vpop.f32.mrb[0].mxu0
    %v1508 = vadd.f32 0.0, %v1507
    %1509 = vmatprep.mubr.f32.mxu0 0.0
    %1510 = vmatmul.mubr.f32.gmra.mrb[0].mxu0 %v1353
    %v1511 = vpop.f32.mrb[0].mxu0
    %v1512 = vadd.f32 0.0, %v1511
    %v1513 = vpop.f32.mrb[0].mxu0
    %v1514 = vadd.f32 0.0, %v1513
    %1515 = vdwg.mxu0
    %s1516 = scalar_lea.vmem %s5, 64
    %v1517 = vld [vmem:[%s1516] sm:$0xff]
    %v1518 = vld [vmem:[%s1516 + $0x8] sm:$0xff]
    %v1519 = vld [vmem:[%s1516 + $0x10] sm:$0xff]
    %v1520 = vld [vmem:[%s1516 + $0x18] sm:$0xff]
    %v1522 = vsel %vm430, %v881, 0
    %v1525 = vsel %vm430, %v882, 0
    %v1528 = vsel %vm430, %v883, 0
    %v1531 = vsel %vm430, %v884, 0
    %v1534 = vsel %vm430, %v885, 0
    %v1537 = vsel %vm430, %v886, 0
    %v1540 = vsel %vm430, %v887, 0
    %v1543 = vsel %vm430, %v888, 0
    %v1546 = vsel %vm430, %v889, 0
    %v1549 = vsel %vm430, %v890, 0
    %v1552 = vsel %vm430, %v891, 0
    %v1555 = vsel %vm430, %v892, 0
    %v1558 = vsel %vm430, %v893, 0
    %v1561 = vsel %vm430, %v894, 0
    %v1564 = vsel %vm430, %v895, 0
    %v1567 = vsel %vm430, %v896, 0
    %1569 = vmatprep.subr.mxu0 %v1518
    %1570 = vmatpush1.msra.mxu0 %v1517
    %1571 = vmatprep.subr.mxu0 %v1520
    %1572 = vmatpush1.msra.mxu0 %v1519
    %1573 = vmatprep.subr.mxu0 0.0
    %1574 = vmatpush1.msra.mxu0 0.0
    %1575 = vmatprep.subr.mxu0 0.0
    %1576 = vmatpush1.msra.mxu0 0.0
    %1577 = vmatprep.subr.mxu0 0.0
    %1578 = vmatpush1.msra.mxu0 0.0
    %1579 = vmatprep.subr.mxu0 0.0
    %1580 = vmatpush1.msra.mxu0 0.0
    %1581 = vmatprep.subr.mxu0 0.0
    %1582 = vmatpush1.msra.mxu0 0.0
    %1583 = vmatprep.subr.mxu0 0.0
    %1584 = vmatpush1.msra.mxu0 0.0
    %1585 = vmatprep.subr.mxu0 0.0
    %1586 = vmatpush1.msra.mxu0 0.0
    %1587 = vmatprep.subr.mxu0 0.0
    %1588 = vmatpush1.msra.mxu0 0.0
    %1589 = vmatprep.subr.mxu0 0.0
    %1590 = vmatpush1.msra.mxu0 0.0
    %1591 = vmatprep.subr.mxu0 0.0
    %1592 = vmatpush1.msra.mxu0 0.0
    %1593 = vmatprep.subr.mxu0 0.0
    %1594 = vmatpush1.msra.mxu0 0.0
    %1595 = vmatprep.subr.mxu0 0.0
    %1596 = vmatpush1.msra.mxu0 0.0
    %1597 = vmatprep.subr.mxu0 0.0
    %1598 = vmatpush1.msra.mxu0 0.0
    %1599 = vmatprep.subr.mxu0 0.0
    %1600 = vmatpush1.msra.mxu0 0.0
    %1601 = vmatprep.subr.mxu0 0.0
    %1602 = vmatpush1.msra.mxu0 0.0
    %1603 = vmatprep.subr.mxu0 0.0
    %1604 = vmatpush1.msra.mxu0 0.0
    %1605 = vmatprep.subr.mxu0 0.0
    %1606 = vmatpush1.msra.mxu0 0.0
    %1607 = vmatprep.subr.mxu0 0.0
    %1608 = vmatpush1.msra.mxu0 0.0
    %1609 = vmatprep.subr.mxu0 0.0
    %1610 = vmatpush1.msra.mxu0 0.0
    %1611 = vmatprep.subr.mxu0 0.0
    %1612 = vmatpush1.msra.mxu0 0.0
    %1613 = vmatprep.subr.mxu0 0.0
    %1614 = vmatpush1.msra.mxu0 0.0
    %1615 = vmatprep.subr.mxu0 0.0
    %1616 = vmatpush1.msra.mxu0 0.0
    %1617 = vmatprep.subr.mxu0 0.0
    %1618 = vmatpush1.msra.mxu0 0.0
    %1619 = vmatprep.subr.mxu0 0.0
    %1620 = vmatpush1.msra.mxu0 0.0
    %1621 = vmatprep.subr.mxu0 0.0
    %1622 = vmatpush1.msra.mxu0 0.0
    %1623 = vmatprep.subr.mxu0 0.0
    %1624 = vmatpush1.msra.mxu0 0.0
    %1625 = vmatprep.subr.mxu0 0.0
    %1626 = vmatpush1.msra.mxu0 0.0
    %1627 = vmatprep.subr.mxu0 0.0
    %1628 = vmatpush1.msra.mxu0 0.0
    %1629 = vmatprep.subr.mxu0 0.0
    %1630 = vmatpush1.msra.mxu0 0.0
    %1631 = vmatprep.subr.mxu0 0.0
    %1632 = vmatpush1.msra.mxu0 0.0
    %1633 = vmatprep.mubr.f32.mxu0 0.0
    %1634 = vmatmul.mubr.f32.gmra.mrb[0].mxu0 %v1522
    %v1635 = vpop.f32.mrb[0].mxu0
    %v1636 = vadd.f32 0.0, %v1635
    %v1637 = vpop.f32.mrb[0].mxu0
    %v1638 = vadd.f32 0.0, %v1637
    %1639 = vmatprep.mubr.f32.mxu0 0.0
    %1640 = vmatmul.mubr.f32.gmra.mrb[0].mxu0 %v1525
    %v1641 = vpop.f32.mrb[0].mxu0
    %v1642 = vadd.f32 0.0, %v1641
    %v1643 = vpop.f32.mrb[0].mxu0
    %v1644 = vadd.f32 0.0, %v1643
    %1645 = vmatprep.mubr.f32.mxu0 0.0
    %1646 = vmatmul.mubr.f32.gmra.mrb[0].mxu0 %v1528
    %v1647 = vpop.f32.mrb[0].mxu0
    %v1648 = vadd.f32 0.0, %v1647
    %v1649 = vpop.f32.mrb[0].mxu0
    %v1650 = vadd.f32 0.0, %v1649
    %1651 = vmatprep.mubr.f32.mxu0 0.0
    %1652 = vmatmul.mubr.f32.gmra.mrb[0].mxu0 %v1531
    %v1653 = vpop.f32.mrb[0].mxu0
    %v1654 = vadd.f32 0.0, %v1653
    %v1655 = vpop.f32.mrb[0].mxu0
    %v1656 = vadd.f32 0.0, %v1655
    %1657 = vmatprep.mubr.f32.mxu0 0.0
    %1658 = vmatmul.mubr.f32.gmra.mrb[0].mxu0 %v1534
    %v1659 = vpop.f32.mrb[0].mxu0
    %v1660 = vadd.f32 0.0, %v1659
    %v1661 = vpop.f32.mrb[0].mxu0
    %v1662 = vadd.f32 0.0, %v1661
    %1663 = vmatprep.mubr.f32.mxu0 0.0
    %1664 = vmatmul.mubr.f32.gmra.mrb[0].mxu0 %v1537
    %v1665 = vpop.f32.mrb[0].mxu0
    %v1666 = vadd.f32 0.0, %v1665
    %v1667 = vpop.f32.mrb[0].mxu0
    %v1668 = vadd.f32 0.0, %v1667
    %1669 = vmatprep.mubr.f32.mxu0 0.0
    %1670 = vmatmul.mubr.f32.gmra.mrb[0].mxu0 %v1540
    %v1671 = vpop.f32.mrb[0].mxu0
    %v1672 = vadd.f32 0.0, %v1671
    %v1673 = vpop.f32.mrb[0].mxu0
    %v1674 = vadd.f32 0.0, %v1673
    %1675 = vmatprep.mubr.f32.mxu0 0.0
    %1676 = vmatmul.mubr.f32.gmra.mrb[0].mxu0 %v1543
    %v1677 = vpop.f32.mrb[0].mxu0
    %v1678 = vadd.f32 0.0, %v1677
    %v1679 = vpop.f32.mrb[0].mxu0
    %v1680 = vadd.f32 0.0, %v1679
    %1681 = vmatprep.mubr.f32.mxu0 0.0
    %1682 = vmatmul.mubr.f32.gmra.mrb[0].mxu0 %v1546
    %v1683 = vpop.f32.mrb[0].mxu0
    %v1684 = vadd.f32 0.0, %v1683
    %v1685 = vpop.f32.mrb[0].mxu0
    %v1686 = vadd.f32 0.0, %v1685
    %1687 = vmatprep.mubr.f32.mxu0 0.0
    %1688 = vmatmul.mubr.f32.gmra.mrb[0].mxu0 %v1549
    %v1689 = vpop.f32.mrb[0].mxu0
    %v1690 = vadd.f32 0.0, %v1689
    %v1691 = vpop.f32.mrb[0].mxu0
    %v1692 = vadd.f32 0.0, %v1691
    %1693 = vmatprep.mubr.f32.mxu0 0.0
    %1694 = vmatmul.mubr.f32.gmra.mrb[0].mxu0 %v1552
    %v1695 = vpop.f32.mrb[0].mxu0
    %v1696 = vadd.f32 0.0, %v1695
    %v1697 = vpop.f32.mrb[0].mxu0
    %v1698 = vadd.f32 0.0, %v1697
    %1699 = vmatprep.mubr.f32.mxu0 0.0
    %1700 = vmatmul.mubr.f32.gmra.mrb[0].mxu0 %v1555
    %v1701 = vpop.f32.mrb[0].mxu0
    %v1702 = vadd.f32 0.0, %v1701
    %v1703 = vpop.f32.mrb[0].mxu0
    %v1704 = vadd.f32 0.0, %v1703
    %1705 = vmatprep.mubr.f32.mxu0 0.0
    %1706 = vmatmul.mubr.f32.gmra.mrb[0].mxu0 %v1558
    %v1707 = vpop.f32.mrb[0].mxu0
    %v1708 = vadd.f32 0.0, %v1707
    %v1709 = vpop.f32.mrb[0].mxu0
    %v1710 = vadd.f32 0.0, %v1709
    %1711 = vmatprep.mubr.f32.mxu0 0.0
    %1712 = vmatmul.mubr.f32.gmra.mrb[0].mxu0 %v1561
    %v1713 = vpop.f32.mrb[0].mxu0
    %v1714 = vadd.f32 0.0, %v1713
    %v1715 = vpop.f32.mrb[0].mxu0
    %v1716 = vadd.f32 0.0, %v1715
    %1717 = vmatprep.mubr.f32.mxu0 0.0
    %1718 = vmatmul.mubr.f32.gmra.mrb[0].mxu0 %v1564
    %v1719 = vpop.f32.mrb[0].mxu0
    %v1720 = vadd.f32 0.0, %v1719
    %v1721 = vpop.f32.mrb[0].mxu0
    %v1722 = vadd.f32 0.0, %v1721
    %1723 = vmatprep.mubr.f32.mxu0 0.0
    %1724 = vmatmul.mubr.f32.gmra.mrb[0].mxu0 %v1567
    %v1725 = vpop.f32.mrb[0].mxu0
    %v1726 = vadd.f32 0.0, %v1725
    %v1727 = vpop.f32.mrb[0].mxu0
    %v1728 = vadd.f32 0.0, %v1727
    %1729 = vdwg.mxu0
    %v1730 = vsub.f32 %v1422, %v1636
    %v1731 = vsub.f32 %v1424, %v1638
    %v1732 = vsub.f32 %v1428, %v1642
    %v1733 = vsub.f32 %v1430, %v1644
    %v1734 = vsub.f32 %v1434, %v1648
    %v1735 = vsub.f32 %v1436, %v1650
    %v1736 = vsub.f32 %v1440, %v1654
    %v1737 = vsub.f32 %v1442, %v1656
    %v1738 = vsub.f32 %v1446, %v1660
    %v1739 = vsub.f32 %v1448, %v1662
    %v1740 = vsub.f32 %v1452, %v1666
    %v1741 = vsub.f32 %v1454, %v1668
    %v1742 = vsub.f32 %v1458, %v1672
    %v1743 = vsub.f32 %v1460, %v1674
    %v1744 = vsub.f32 %v1464, %v1678
    %v1745 = vsub.f32 %v1466, %v1680
    %v1746 = vsub.f32 %v1470, %v1684
    %v1747 = vsub.f32 %v1472, %v1686
    %v1748 = vsub.f32 %v1476, %v1690
    %v1749 = vsub.f32 %v1478, %v1692
    %v1750 = vsub.f32 %v1482, %v1696
    %v1751 = vsub.f32 %v1484, %v1698
    %v1752 = vsub.f32 %v1488, %v1702
    %v1753 = vsub.f32 %v1490, %v1704
    %v1754 = vsub.f32 %v1494, %v1708
    %v1755 = vsub.f32 %v1496, %v1710
    %v1756 = vsub.f32 %v1500, %v1714
    %v1757 = vsub.f32 %v1502, %v1716
    %v1758 = vsub.f32 %v1506, %v1720
    %v1759 = vsub.f32 %v1508, %v1722
    %v1760 = vsub.f32 %v1512, %v1726
    %v1761 = vsub.f32 %v1514, %v1728
    %s1762 = scalar_lea.vmem %s5, 96
    %v1763 = vld [vmem:[%s1762] sm:$0xff]
    %v1764 = vld [vmem:[%s1762 + $0x8] sm:$0xff]
    %v1765 = vld [vmem:[%s1762 + $0x10] sm:$0xff]
    %v1766 = vld [vmem:[%s1762 + $0x18] sm:$0xff]
    %1767 = vmatprep.subr.mxu0 %v1764
    %1768 = vmatpush1.msra.mxu0 %v1763
    %1769 = vmatprep.subr.mxu0 %v1766
    %1770 = vmatpush1.msra.mxu0 %v1765
    %1771 = vmatprep.subr.mxu0 0.0
    %1772 = vmatpush1.msra.mxu0 0.0
    %1773 = vmatprep.subr.mxu0 0.0
    %1774 = vmatpush1.msra.mxu0 0.0
    %1775 = vmatprep.subr.mxu0 0.0
    %1776 = vmatpush1.msra.mxu0 0.0
    %1777 = vmatprep.subr.mxu0 0.0
    %1778 = vmatpush1.msra.mxu0 0.0
    %1779 = vmatprep.subr.mxu0 0.0
    %1780 = vmatpush1.msra.mxu0 0.0
    %1781 = vmatprep.subr.mxu0 0.0
    %1782 = vmatpush1.msra.mxu0 0.0
    %1783 = vmatprep.subr.mxu0 0.0
    %1784 = vmatpush1.msra.mxu0 0.0
    %1785 = vmatprep.subr.mxu0 0.0
    %1786 = vmatpush1.msra.mxu0 0.0
    %1787 = vmatprep.subr.mxu0 0.0
    %1788 = vmatpush1.msra.mxu0 0.0
    %1789 = vmatprep.subr.mxu0 0.0
    %1790 = vmatpush1.msra.mxu0 0.0
    %1791 = vmatprep.subr.mxu0 0.0
    %1792 = vmatpush1.msra.mxu0 0.0
    %1793 = vmatprep.subr.mxu0 0.0
    %1794 = vmatpush1.msra.mxu0 0.0
    %1795 = vmatprep.subr.mxu0 0.0
    %1796 = vmatpush1.msra.mxu0 0.0
    %1797 = vmatprep.subr.mxu0 0.0
    %1798 = vmatpush1.msra.mxu0 0.0
    %1799 = vmatprep.subr.mxu0 0.0
    %1800 = vmatpush1.msra.mxu0 0.0
    %1801 = vmatprep.subr.mxu0 0.0
    %1802 = vmatpush1.msra.mxu0 0.0
    %1803 = vmatprep.subr.mxu0 0.0
    %1804 = vmatpush1.msra.mxu0 0.0
    %1805 = vmatprep.subr.mxu0 0.0
    %1806 = vmatpush1.msra.mxu0 0.0
    %1807 = vmatprep.subr.mxu0 0.0
    %1808 = vmatpush1.msra.mxu0 0.0
    %1809 = vmatprep.subr.mxu0 0.0
    %1810 = vmatpush1.msra.mxu0 0.0
    %1811 = vmatprep.subr.mxu0 0.0
    %1812 = vmatpush1.msra.mxu0 0.0
    %1813 = vmatprep.subr.mxu0 0.0
    %1814 = vmatpush1.msra.mxu0 0.0
    %1815 = vmatprep.subr.mxu0 0.0
    %1816 = vmatpush1.msra.mxu0 0.0
    %1817 = vmatprep.subr.mxu0 0.0
    %1818 = vmatpush1.msra.mxu0 0.0
    %1819 = vmatprep.subr.mxu0 0.0
    %1820 = vmatpush1.msra.mxu0 0.0
    %1821 = vmatprep.subr.mxu0 0.0
    %1822 = vmatpush1.msra.mxu0 0.0
    %1823 = vmatprep.subr.mxu0 0.0
    %1824 = vmatpush1.msra.mxu0 0.0
    %1825 = vmatprep.subr.mxu0 0.0
    %1826 = vmatpush1.msra.mxu0 0.0
    %1827 = vmatprep.subr.mxu0 0.0
    %1828 = vmatpush1.msra.mxu0 0.0
    %1829 = vmatprep.subr.mxu0 0.0
    %1830 = vmatpush1.msra.mxu0 0.0
    %1831 = vmatprep.mubr.f32.mxu0 0.0
    %1832 = vmatmul.mubr.f32.gmra.mrb[0].mxu0 %v1308
    %v1833 = vpop.f32.mrb[0].mxu0
    %v1834 = vadd.f32 0.0, %v1833
    %v1835 = vpop.f32.mrb[0].mxu0
    %v1836 = vadd.f32 0.0, %v1835
    %1837 = vmatprep.mubr.f32.mxu0 0.0
    %1838 = vmatmul.mubr.f32.gmra.mrb[0].mxu0 %v1311
    %v1839 = vpop.f32.mrb[0].mxu0
    %v1840 = vadd.f32 0.0, %v1839
    %v1841 = vpop.f32.mrb[0].mxu0
    %v1842 = vadd.f32 0.0, %v1841
    %1843 = vmatprep.mubr.f32.mxu0 0.0
    %1844 = vmatmul.mubr.f32.gmra.mrb[0].mxu0 %v1314
    %v1845 = vpop.f32.mrb[0].mxu0
    %v1846 = vadd.f32 0.0, %v1845
    %v1847 = vpop.f32.mrb[0].mxu0
    %v1848 = vadd.f32 0.0, %v1847
    %1849 = vmatprep.mubr.f32.mxu0 0.0
    %1850 = vmatmul.mubr.f32.gmra.mrb[0].mxu0 %v1317
    %v1851 = vpop.f32.mrb[0].mxu0
    %v1852 = vadd.f32 0.0, %v1851
    %v1853 = vpop.f32.mrb[0].mxu0
    %v1854 = vadd.f32 0.0, %v1853
    %1855 = vmatprep.mubr.f32.mxu0 0.0
    %1856 = vmatmul.mubr.f32.gmra.mrb[0].mxu0 %v1320
    %v1857 = vpop.f32.mrb[0].mxu0
    %v1858 = vadd.f32 0.0, %v1857
    %v1859 = vpop.f32.mrb[0].mxu0
    %v1860 = vadd.f32 0.0, %v1859
    %1861 = vmatprep.mubr.f32.mxu0 0.0
    %1862 = vmatmul.mubr.f32.gmra.mrb[0].mxu0 %v1323
    %v1863 = vpop.f32.mrb[0].mxu0
    %v1864 = vadd.f32 0.0, %v1863
    %v1865 = vpop.f32.mrb[0].mxu0
    %v1866 = vadd.f32 0.0, %v1865
    %1867 = vmatprep.mubr.f32.mxu0 0.0
    %1868 = vmatmul.mubr.f32.gmra.mrb[0].mxu0 %v1326
    %v1869 = vpop.f32.mrb[0].mxu0
    %v1870 = vadd.f32 0.0, %v1869
    %v1871 = vpop.f32.mrb[0].mxu0
    %v1872 = vadd.f32 0.0, %v1871
    %1873 = vmatprep.mubr.f32.mxu0 0.0
    %1874 = vmatmul.mubr.f32.gmra.mrb[0].mxu0 %v1329
    %v1875 = vpop.f32.mrb[0].mxu0
    %v1876 = vadd.f32 0.0, %v1875
    %v1877 = vpop.f32.mrb[0].mxu0
    %v1878 = vadd.f32 0.0, %v1877
    %1879 = vmatprep.mubr.f32.mxu0 0.0
    %1880 = vmatmul.mubr.f32.gmra.mrb[0].mxu0 %v1332
    %v1881 = vpop.f32.mrb[0].mxu0
    %v1882 = vadd.f32 0.0, %v1881
    %v1883 = vpop.f32.mrb[0].mxu0
    %v1884 = vadd.f32 0.0, %v1883
    %1885 = vmatprep.mubr.f32.mxu0 0.0
    %1886 = vmatmul.mubr.f32.gmra.mrb[0].mxu0 %v1335
    %v1887 = vpop.f32.mrb[0].mxu0
    %v1888 = vadd.f32 0.0, %v1887
    %v1889 = vpop.f32.mrb[0].mxu0
    %v1890 = vadd.f32 0.0, %v1889
    %1891 = vmatprep.mubr.f32.mxu0 0.0
    %1892 = vmatmul.mubr.f32.gmra.mrb[0].mxu0 %v1338
    %v1893 = vpop.f32.mrb[0].mxu0
    %v1894 = vadd.f32 0.0, %v1893
    %v1895 = vpop.f32.mrb[0].mxu0
    %v1896 = vadd.f32 0.0, %v1895
    %1897 = vmatprep.mubr.f32.mxu0 0.0
    %1898 = vmatmul.mubr.f32.gmra.mrb[0].mxu0 %v1341
    %v1899 = vpop.f32.mrb[0].mxu0
    %v1900 = vadd.f32 0.0, %v1899
    %v1901 = vpop.f32.mrb[0].mxu0
    %v1902 = vadd.f32 0.0, %v1901
    %1903 = vmatprep.mubr.f32.mxu0 0.0
    %1904 = vmatmul.mubr.f32.gmra.mrb[0].mxu0 %v1344
    %v1905 = vpop.f32.mrb[0].mxu0
    %v1906 = vadd.f32 0.0, %v1905
    %v1907 = vpop.f32.mrb[0].mxu0
    %v1908 = vadd.f32 0.0, %v1907
    %1909 = vmatprep.mubr.f32.mxu0 0.0
    %1910 = vmatmul.mubr.f32.gmra.mrb[0].mxu0 %v1347
    %v1911 = vpop.f32.mrb[0].mxu0
    %v1912 = vadd.f32 0.0, %v1911
    %v1913 = vpop.f32.mrb[0].mxu0
    %v1914 = vadd.f32 0.0, %v1913
    %1915 = vmatprep.mubr.f32.mxu0 0.0
    %1916 = vmatmul.mubr.f32.gmra.mrb[0].mxu0 %v1350
    %v1917 = vpop.f32.mrb[0].mxu0
    %v1918 = vadd.f32 0.0, %v1917
    %v1919 = vpop.f32.mrb[0].mxu0
    %v1920 = vadd.f32 0.0, %v1919
    %1921 = vmatprep.mubr.f32.mxu0 0.0
    %1922 = vmatmul.mubr.f32.gmra.mrb[0].mxu0 %v1353
    %v1923 = vpop.f32.mrb[0].mxu0
    %v1924 = vadd.f32 0.0, %v1923
    %v1925 = vpop.f32.mrb[0].mxu0
    %v1926 = vadd.f32 0.0, %v1925
    %1927 = vdwg.mxu0
    %s1928 = scalar_lea.vmem %s5, 128
    %v1929 = vld [vmem:[%s1928] sm:$0xff]
    %v1930 = vld [vmem:[%s1928 + $0x8] sm:$0xff]
    %v1931 = vld [vmem:[%s1928 + $0x10] sm:$0xff]
    %v1932 = vld [vmem:[%s1928 + $0x18] sm:$0xff]
    %1933 = vmatprep.subr.mxu0 %v1930
    %1934 = vmatpush1.msra.mxu0 %v1929
    %1935 = vmatprep.subr.mxu0 %v1932
    %1936 = vmatpush1.msra.mxu0 %v1931
    %1937 = vmatprep.subr.mxu0 0.0
    %1938 = vmatpush1.msra.mxu0 0.0
    %1939 = vmatprep.subr.mxu0 0.0
    %1940 = vmatpush1.msra.mxu0 0.0
    %1941 = vmatprep.subr.mxu0 0.0
    %1942 = vmatpush1.msra.mxu0 0.0
    %1943 = vmatprep.subr.mxu0 0.0
    %1944 = vmatpush1.msra.mxu0 0.0
    %1945 = vmatprep.subr.mxu0 0.0
    %1946 = vmatpush1.msra.mxu0 0.0
    %1947 = vmatprep.subr.mxu0 0.0
    %1948 = vmatpush1.msra.mxu0 0.0
    %1949 = vmatprep.subr.mxu0 0.0
    %1950 = vmatpush1.msra.mxu0 0.0
    %1951 = vmatprep.subr.mxu0 0.0
    %1952 = vmatpush1.msra.mxu0 0.0
    %1953 = vmatprep.subr.mxu0 0.0
    %1954 = vmatpush1.msra.mxu0 0.0
    %1955 = vmatprep.subr.mxu0 0.0
    %1956 = vmatpush1.msra.mxu0 0.0
    %1957 = vmatprep.subr.mxu0 0.0
    %1958 = vmatpush1.msra.mxu0 0.0
    %1959 = vmatprep.subr.mxu0 0.0
    %1960 = vmatpush1.msra.mxu0 0.0
    %1961 = vmatprep.subr.mxu0 0.0
    %1962 = vmatpush1.msra.mxu0 0.0
    %1963 = vmatprep.subr.mxu0 0.0
    %1964 = vmatpush1.msra.mxu0 0.0
    %1965 = vmatprep.subr.mxu0 0.0
    %1966 = vmatpush1.msra.mxu0 0.0
    %1967 = vmatprep.subr.mxu0 0.0
    %1968 = vmatpush1.msra.mxu0 0.0
    %1969 = vmatprep.subr.mxu0 0.0
    %1970 = vmatpush1.msra.mxu0 0.0
    %1971 = vmatprep.subr.mxu0 0.0
    %1972 = vmatpush1.msra.mxu0 0.0
    %1973 = vmatprep.subr.mxu0 0.0
    %1974 = vmatpush1.msra.mxu0 0.0
    %1975 = vmatprep.subr.mxu0 0.0
    %1976 = vmatpush1.msra.mxu0 0.0
    %1977 = vmatprep.subr.mxu0 0.0
    %1978 = vmatpush1.msra.mxu0 0.0
    %1979 = vmatprep.subr.mxu0 0.0
    %1980 = vmatpush1.msra.mxu0 0.0
    %1981 = vmatprep.subr.mxu0 0.0
    %1982 = vmatpush1.msra.mxu0 0.0
    %1983 = vmatprep.subr.mxu0 0.0
    %1984 = vmatpush1.msra.mxu0 0.0
    %1985 = vmatprep.subr.mxu0 0.0
    %1986 = vmatpush1.msra.mxu0 0.0
    %1987 = vmatprep.subr.mxu0 0.0
    %1988 = vmatpush1.msra.mxu0 0.0
    %1989 = vmatprep.subr.mxu0 0.0
    %1990 = vmatpush1.msra.mxu0 0.0
    %1991 = vmatprep.subr.mxu0 0.0
    %1992 = vmatpush1.msra.mxu0 0.0
    %1993 = vmatprep.subr.mxu0 0.0
    %1994 = vmatpush1.msra.mxu0 0.0
    %1995 = vmatprep.subr.mxu0 0.0
    %1996 = vmatpush1.msra.mxu0 0.0
    %1997 = vmatprep.mubr.f32.mxu0 0.0
    %1998 = vmatmul.mubr.f32.gmra.mrb[0].mxu0 %v1522
    %v1999 = vpop.f32.mrb[0].mxu0
    %v2000 = vadd.f32 0.0, %v1999
    %v2001 = vpop.f32.mrb[0].mxu0
    %v2002 = vadd.f32 0.0, %v2001
    %2003 = vmatprep.mubr.f32.mxu0 0.0
    %2004 = vmatmul.mubr.f32.gmra.mrb[0].mxu0 %v1525
    %v2005 = vpop.f32.mrb[0].mxu0
    %v2006 = vadd.f32 0.0, %v2005
    %v2007 = vpop.f32.mrb[0].mxu0
    %v2008 = vadd.f32 0.0, %v2007
    %2009 = vmatprep.mubr.f32.mxu0 0.0
    %2010 = vmatmul.mubr.f32.gmra.mrb[0].mxu0 %v1528
    %v2011 = vpop.f32.mrb[0].mxu0
    %v2012 = vadd.f32 0.0, %v2011
    %v2013 = vpop.f32.mrb[0].mxu0
    %v2014 = vadd.f32 0.0, %v2013
    %2015 = vmatprep.mubr.f32.mxu0 0.0
    %2016 = vmatmul.mubr.f32.gmra.mrb[0].mxu0 %v1531
    %v2017 = vpop.f32.mrb[0].mxu0
    %v2018 = vadd.f32 0.0, %v2017
    %v2019 = vpop.f32.mrb[0].mxu0
    %v2020 = vadd.f32 0.0, %v2019
    %2021 = vmatprep.mubr.f32.mxu0 0.0
    %2022 = vmatmul.mubr.f32.gmra.mrb[0].mxu0 %v1534
    %v2023 = vpop.f32.mrb[0].mxu0
    %v2024 = vadd.f32 0.0, %v2023
    %v2025 = vpop.f32.mrb[0].mxu0
    %v2026 = vadd.f32 0.0, %v2025
    %2027 = vmatprep.mubr.f32.mxu0 0.0
    %2028 = vmatmul.mubr.f32.gmra.mrb[0].mxu0 %v1537
    %v2029 = vpop.f32.mrb[0].mxu0
    %v2030 = vadd.f32 0.0, %v2029
    %v2031 = vpop.f32.mrb[0].mxu0
    %v2032 = vadd.f32 0.0, %v2031
    %2033 = vmatprep.mubr.f32.mxu0 0.0
    %2034 = vmatmul.mubr.f32.gmra.mrb[0].mxu0 %v1540
    %v2035 = vpop.f32.mrb[0].mxu0
    %v2036 = vadd.f32 0.0, %v2035
    %v2037 = vpop.f32.mrb[0].mxu0
    %v2038 = vadd.f32 0.0, %v2037
    %2039 = vmatprep.mubr.f32.mxu0 0.0
    %2040 = vmatmul.mubr.f32.gmra.mrb[0].mxu0 %v1543
    %v2041 = vpop.f32.mrb[0].mxu0
    %v2042 = vadd.f32 0.0, %v2041
    %v2043 = vpop.f32.mrb[0].mxu0
    %v2044 = vadd.f32 0.0, %v2043
    %2045 = vmatprep.mubr.f32.mxu0 0.0
    %2046 = vmatmul.mubr.f32.gmra.mrb[0].mxu0 %v1546
    %v2047 = vpop.f32.mrb[0].mxu0
    %v2048 = vadd.f32 0.0, %v2047
    %v2049 = vpop.f32.mrb[0].mxu0
    %v2050 = vadd.f32 0.0, %v2049
    %2051 = vmatprep.mubr.f32.mxu0 0.0
    %2052 = vmatmul.mubr.f32.gmra.mrb[0].mxu0 %v1549
    %v2053 = vpop.f32.mrb[0].mxu0
    %v2054 = vadd.f32 0.0, %v2053
    %v2055 = vpop.f32.mrb[0].mxu0
    %v2056 = vadd.f32 0.0, %v2055
    %2057 = vmatprep.mubr.f32.mxu0 0.0
    %2058 = vmatmul.mubr.f32.gmra.mrb[0].mxu0 %v1552
    %v2059 = vpop.f32.mrb[0].mxu0
    %v2060 = vadd.f32 0.0, %v2059
    %v2061 = vpop.f32.mrb[0].mxu0
    %v2062 = vadd.f32 0.0, %v2061
    %2063 = vmatprep.mubr.f32.mxu0 0.0
    %2064 = vmatmul.mubr.f32.gmra.mrb[0].mxu0 %v1555
    %v2065 = vpop.f32.mrb[0].mxu0
    %v2066 = vadd.f32 0.0, %v2065
    %v2067 = vpop.f32.mrb[0].mxu0
    %v2068 = vadd.f32 0.0, %v2067
    %2069 = vmatprep.mubr.f32.mxu0 0.0
    %2070 = vmatmul.mubr.f32.gmra.mrb[0].mxu0 %v1558
    %v2071 = vpop.f32.mrb[0].mxu0
    %v2072 = vadd.f32 0.0, %v2071
    %v2073 = vpop.f32.mrb[0].mxu0
    %v2074 = vadd.f32 0.0, %v2073
    %2075 = vmatprep.mubr.f32.mxu0 0.0
    %2076 = vmatmul.mubr.f32.gmra.mrb[0].mxu0 %v1561
    %v2077 = vpop.f32.mrb[0].mxu0
    %v2078 = vadd.f32 0.0, %v2077
    %v2079 = vpop.f32.mrb[0].mxu0
    %v2080 = vadd.f32 0.0, %v2079
    %2081 = vmatprep.mubr.f32.mxu0 0.0
    %2082 = vmatmul.mubr.f32.gmra.mrb[0].mxu0 %v1564
    %v2083 = vpop.f32.mrb[0].mxu0
    %v2084 = vadd.f32 0.0, %v2083
    %v2085 = vpop.f32.mrb[0].mxu0
    %v2086 = vadd.f32 0.0, %v2085
    %2087 = vmatprep.mubr.f32.mxu0 0.0
    %2088 = vmatmul.mubr.f32.gmra.mrb[0].mxu0 %v1567
    %v2089 = vpop.f32.mrb[0].mxu0
    %v2090 = vadd.f32 0.0, %v2089
    %v2091 = vpop.f32.mrb[0].mxu0
    %v2092 = vadd.f32 0.0, %v2091
    %2093 = vdwg.mxu0
    %v2094 = vsub.f32 %v1834, %v2000
    %v2095 = vsub.f32 %v1836, %v2002
    %v2096 = vsub.f32 %v1840, %v2006
    %v2097 = vsub.f32 %v1842, %v2008
    %v2098 = vsub.f32 %v1846, %v2012
    %v2099 = vsub.f32 %v1848, %v2014
    %v2100 = vsub.f32 %v1852, %v2018
    %v2101 = vsub.f32 %v1854, %v2020
    %v2102 = vsub.f32 %v1858, %v2024
    %v2103 = vsub.f32 %v1860, %v2026
    %v2104 = vsub.f32 %v1864, %v2030
    %v2105 = vsub.f32 %v1866, %v2032
    %v2106 = vsub.f32 %v1870, %v2036
    %v2107 = vsub.f32 %v1872, %v2038
    %v2108 = vsub.f32 %v1876, %v2042
    %v2109 = vsub.f32 %v1878, %v2044
    %v2110 = vsub.f32 %v1882, %v2048
    %v2111 = vsub.f32 %v1884, %v2050
    %v2112 = vsub.f32 %v1888, %v2054
    %v2113 = vsub.f32 %v1890, %v2056
    %v2114 = vsub.f32 %v1894, %v2060
    %v2115 = vsub.f32 %v1896, %v2062
    %v2116 = vsub.f32 %v1900, %v2066
    %v2117 = vsub.f32 %v1902, %v2068
    %v2118 = vsub.f32 %v1906, %v2072
    %v2119 = vsub.f32 %v1908, %v2074
    %v2120 = vsub.f32 %v1912, %v2078
    %v2121 = vsub.f32 %v1914, %v2080
    %v2122 = vsub.f32 %v1918, %v2084
    %v2123 = vsub.f32 %v1920, %v2086
    %v2124 = vsub.f32 %v1924, %v2090
    %v2125 = vsub.f32 %v1926, %v2092
    %vm2126 = vcmp.ge.f32.partialorder %v1730, 0.0
    %vm2127 = vcmp.ge.f32.partialorder %v1731, 0.0
    %vm2128 = vcmp.ge.f32.partialorder %v1732, 0.0
    %vm2129 = vcmp.ge.f32.partialorder %v1733, 0.0
    %vm2130 = vcmp.ge.f32.partialorder %v1734, 0.0
    %vm2131 = vcmp.ge.f32.partialorder %v1735, 0.0
    %vm2132 = vcmp.ge.f32.partialorder %v1736, 0.0
    %vm2133 = vcmp.ge.f32.partialorder %v1737, 0.0
    %vm2134 = vcmp.ge.f32.partialorder %v1738, 0.0
    %vm2135 = vcmp.ge.f32.partialorder %v1739, 0.0
    %vm2136 = vcmp.ge.f32.partialorder %v1740, 0.0
    %vm2137 = vcmp.ge.f32.partialorder %v1741, 0.0
    %vm2138 = vcmp.ge.f32.partialorder %v1742, 0.0
    %vm2139 = vcmp.ge.f32.partialorder %v1743, 0.0
    %vm2140 = vcmp.ge.f32.partialorder %v1744, 0.0
    %vm2141 = vcmp.ge.f32.partialorder %v1745, 0.0
    %vm2142 = vcmp.ge.f32.partialorder %v1746, 0.0
    %vm2143 = vcmp.ge.f32.partialorder %v1747, 0.0
    %vm2144 = vcmp.ge.f32.partialorder %v1748, 0.0
    %vm2145 = vcmp.ge.f32.partialorder %v1749, 0.0
    %vm2146 = vcmp.ge.f32.partialorder %v1750, 0.0
    %vm2147 = vcmp.ge.f32.partialorder %v1751, 0.0
    %vm2148 = vcmp.ge.f32.partialorder %v1752, 0.0
    %vm2149 = vcmp.ge.f32.partialorder %v1753, 0.0
    %vm2150 = vcmp.ge.f32.partialorder %v1754, 0.0
    %vm2151 = vcmp.ge.f32.partialorder %v1755, 0.0
    %vm2152 = vcmp.ge.f32.partialorder %v1756, 0.0
    %vm2153 = vcmp.ge.f32.partialorder %v1757, 0.0
    %vm2154 = vcmp.ge.f32.partialorder %v1758, 0.0
    %vm2155 = vcmp.ge.f32.partialorder %v1759, 0.0
    %vm2156 = vcmp.ge.f32.partialorder %v1760, 0.0
    %vm2157 = vcmp.ge.f32.partialorder %v1761, 0.0
    %vm2158 = vcmp.lt.f32.partialorder %v2094, 0.0
    %vm2159 = vcmp.lt.f32.partialorder %v2095, 0.0
    %vm2160 = vcmp.lt.f32.partialorder %v2096, 0.0
    %vm2161 = vcmp.lt.f32.partialorder %v2097, 0.0
    %vm2162 = vcmp.lt.f32.partialorder %v2098, 0.0
    %vm2163 = vcmp.lt.f32.partialorder %v2099, 0.0
    %vm2164 = vcmp.lt.f32.partialorder %v2100, 0.0
    %vm2165 = vcmp.lt.f32.partialorder %v2101, 0.0
    %vm2166 = vcmp.lt.f32.partialorder %v2102, 0.0
    %vm2167 = vcmp.lt.f32.partialorder %v2103, 0.0
    %vm2168 = vcmp.lt.f32.partialorder %v2104, 0.0
    %vm2169 = vcmp.lt.f32.partialorder %v2105, 0.0
    %vm2170 = vcmp.lt.f32.partialorder %v2106, 0.0
    %vm2171 = vcmp.lt.f32.partialorder %v2107, 0.0
    %vm2172 = vcmp.lt.f32.partialorder %v2108, 0.0
    %vm2173 = vcmp.lt.f32.partialorder %v2109, 0.0
    %vm2174 = vcmp.lt.f32.partialorder %v2110, 0.0
    %vm2175 = vcmp.lt.f32.partialorder %v2111, 0.0
    %vm2176 = vcmp.lt.f32.partialorder %v2112, 0.0
    %vm2177 = vcmp.lt.f32.partialorder %v2113, 0.0
    %vm2178 = vcmp.lt.f32.partialorder %v2114, 0.0
    %vm2179 = vcmp.lt.f32.partialorder %v2115, 0.0
    %vm2180 = vcmp.lt.f32.partialorder %v2116, 0.0
    %vm2181 = vcmp.lt.f32.partialorder %v2117, 0.0
    %vm2182 = vcmp.lt.f32.partialorder %v2118, 0.0
    %vm2183 = vcmp.lt.f32.partialorder %v2119, 0.0
    %vm2184 = vcmp.lt.f32.partialorder %v2120, 0.0
    %vm2185 = vcmp.lt.f32.partialorder %v2121, 0.0
    %vm2186 = vcmp.lt.f32.partialorder %v2122, 0.0
    %vm2187 = vcmp.lt.f32.partialorder %v2123, 0.0
    %vm2188 = vcmp.lt.f32.partialorder %v2124, 0.0
    %vm2189 = vcmp.lt.f32.partialorder %v2125, 0.0
    %vm2190 = vmand %vm2126, %vm2158
    %vm2191 = vmand %vm2127, %vm2159
    %vm2192 = vmand %vm2128, %vm2160
    %vm2193 = vmand %vm2129, %vm2161
    %vm2194 = vmand %vm2130, %vm2162
    %vm2195 = vmand %vm2131, %vm2163
    %vm2196 = vmand %vm2132, %vm2164
    %vm2197 = vmand %vm2133, %vm2165
    %vm2198 = vmand %vm2134, %vm2166
    %vm2199 = vmand %vm2135, %vm2167
    %vm2200 = vmand %vm2136, %vm2168
    %vm2201 = vmand %vm2137, %vm2169
    %vm2202 = vmand %vm2138, %vm2170
    %vm2203 = vmand %vm2139, %vm2171
    %vm2204 = vmand %vm2140, %vm2172
    %vm2205 = vmand %vm2141, %vm2173
    %vm2206 = vmand %vm2142, %vm2174
    %vm2207 = vmand %vm2143, %vm2175
    %vm2208 = vmand %vm2144, %vm2176
    %vm2209 = vmand %vm2145, %vm2177
    %vm2210 = vmand %vm2146, %vm2178
    %vm2211 = vmand %vm2147, %vm2179
    %vm2212 = vmand %vm2148, %vm2180
    %vm2213 = vmand %vm2149, %vm2181
    %vm2214 = vmand %vm2150, %vm2182
    %vm2215 = vmand %vm2151, %vm2183
    %vm2216 = vmand %vm2152, %vm2184
    %vm2217 = vmand %vm2153, %vm2185
    %vm2218 = vmand %vm2154, %vm2186
    %vm2219 = vmand %vm2155, %vm2187
    %vm2220 = vmand %vm2156, %vm2188
    %vm2221 = vmand %vm2157, %vm2189
    %v2222 = vsel %vm2190, %v1208, 0.0
    %v2223 = vsel %vm2191, %v1210, 0.0
    %v2224 = vsel %vm2192, %v1214, 0.0
    %v2225 = vsel %vm2193, %v1216, 0.0
    %v2226 = vsel %vm2194, %v1220, 0.0
    %v2227 = vsel %vm2195, %v1222, 0.0
    %v2228 = vsel %vm2196, %v1226, 0.0
    %v2229 = vsel %vm2197, %v1228, 0.0
    %v2230 = vsel %vm2198, %v1232, 0.0
    %v2231 = vsel %vm2199, %v1234, 0.0
    %v2232 = vsel %vm2200, %v1238, 0.0
    %v2233 = vsel %vm2201, %v1240, 0.0
    %v2234 = vsel %vm2202, %v1244, 0.0
    %v2235 = vsel %vm2203, %v1246, 0.0
    %v2236 = vsel %vm2204, %v1250, 0.0
    %v2237 = vsel %vm2205, %v1252, 0.0
    %v2238 = vsel %vm2206, %v1256, 0.0
    %v2239 = vsel %vm2207, %v1258, 0.0
    %v2240 = vsel %vm2208, %v1262, 0.0
    %v2241 = vsel %vm2209, %v1264, 0.0
    %v2242 = vsel %vm2210, %v1268, 0.0
    %v2243 = vsel %vm2211, %v1270, 0.0
    %v2244 = vsel %vm2212, %v1274, 0.0
    %v2245 = vsel %vm2213, %v1276, 0.0
    %v2246 = vsel %vm2214, %v1280, 0.0
    %v2247 = vsel %vm2215, %v1282, 0.0
    %v2248 = vsel %vm2216, %v1286, 0.0
    %v2249 = vsel %vm2217, %v1288, 0.0
    %v2250 = vsel %vm2218, %v1292, 0.0
    %v2251 = vsel %vm2219, %v1294, 0.0
    %v2252 = vsel %vm2220, %v1298, 0.0
    %v2253 = vsel %vm2221, %v1300, 0.0
    %v2254 = vld [vmem:[%s6] sm:$0xff]
    %v2255 = vld [vmem:[%s6 + $0x8] sm:$0xff]
    %v2256 = vld [vmem:[%s6 + $0x10] sm:$0xff]
    %v2257 = vld [vmem:[%s6 + $0x18] sm:$0xff]
    %v2258 = vld [vmem:[%s6 + $0x20] sm:$0xff]
    %v2259 = vld [vmem:[%s6 + $0x28] sm:$0xff]
    %v2260 = vld [vmem:[%s6 + $0x30] sm:$0xff]
    %v2261 = vld [vmem:[%s6 + $0x38] sm:$0xff]
    %v2262 = vld [vmem:[%s6 + $0x40] sm:$0xff]
    %v2263 = vld [vmem:[%s6 + $0x48] sm:$0xff]
    %v2264 = vld [vmem:[%s6 + $0x50] sm:$0xff]
    %v2265 = vld [vmem:[%s6 + $0x58] sm:$0xff]
    %v2266 = vld [vmem:[%s6 + $0x60] sm:$0xff]
    %v2267 = vld [vmem:[%s6 + $0x68] sm:$0xff]
    %v2268 = vld [vmem:[%s6 + $0x70] sm:$0xff]
    %v2269 = vld [vmem:[%s6 + $0x78] sm:$0xff]
    %v2270 = vld [vmem:[%s6 + $0x80] sm:$0xff]
    %v2271 = vld [vmem:[%s6 + $0x88] sm:$0xff]
    %v2273 = vsel %vm430, %v2223, 0
    %v2276 = vsel %vm430, %v2225, 0
    %v2279 = vsel %vm430, %v2227, 0
    %v2282 = vsel %vm430, %v2229, 0
    %v2285 = vsel %vm430, %v2231, 0
    %v2288 = vsel %vm430, %v2233, 0
    %v2291 = vsel %vm430, %v2235, 0
    %v2294 = vsel %vm430, %v2237, 0
    %v2297 = vsel %vm430, %v2239, 0
    %v2300 = vsel %vm430, %v2241, 0
    %v2303 = vsel %vm430, %v2243, 0
    %v2306 = vsel %vm430, %v2245, 0
    %v2309 = vsel %vm430, %v2247, 0
    %v2312 = vsel %vm430, %v2249, 0
    %v2315 = vsel %vm430, %v2251, 0
    %v2318 = vsel %vm430, %v2253, 0
    %2320 = vmatprep.subr.mxu0 0.0
    %2321 = vmatpush1.msra.mxu0 %v2254
    %2322 = vmatprep.subr.mxu0 0.0
    %2323 = vmatpush1.msra.mxu0 %v2255
    %2324 = vmatprep.subr.mxu0 0.0
    %2325 = vmatpush1.msra.mxu0 %v2256
    %2326 = vmatprep.subr.mxu0 0.0
    %2327 = vmatpush1.msra.mxu0 %v2257
    %2328 = vmatprep.subr.mxu0 0.0
    %2329 = vmatpush1.msra.mxu0 %v2258
    %2330 = vmatprep.subr.mxu0 0.0
    %2331 = vmatpush1.msra.mxu0 %v2259
    %2332 = vmatprep.subr.mxu0 0.0
    %2333 = vmatpush1.msra.mxu0 %v2260
    %2334 = vmatprep.subr.mxu0 0.0
    %2335 = vmatpush1.msra.mxu0 %v2261
    %2336 = vmatprep.subr.mxu0 0.0
    %2337 = vmatpush1.msra.mxu0 %v2262
    %2338 = vmatprep.subr.mxu0 0.0
    %2339 = vmatpush1.msra.mxu0 %v2263
    %2340 = vmatprep.subr.mxu0 0.0
    %2341 = vmatpush1.msra.mxu0 %v2264
    %2342 = vmatprep.subr.mxu0 0.0
    %2343 = vmatpush1.msra.mxu0 %v2265
    %2344 = vmatprep.subr.mxu0 0.0
    %2345 = vmatpush1.msra.mxu0 %v2266
    %2346 = vmatprep.subr.mxu0 0.0
    %2347 = vmatpush1.msra.mxu0 %v2267
    %2348 = vmatprep.subr.mxu0 0.0
    %2349 = vmatpush1.msra.mxu0 %v2268
    %2350 = vmatprep.subr.mxu0 0.0
    %2351 = vmatpush1.msra.mxu0 %v2269
    %2352 = vmatprep.subr.mxu0 0.0
    %2353 = vmatpush1.msra.mxu0 %v2270
    %2354 = vmatprep.subr.mxu0 0.0
    %2355 = vmatpush1.msra.mxu0 %v2271
    %2356 = vmatprep.subr.mxu0 0.0
    %2357 = vmatpush1.msra.mxu0 0.0
    %2358 = vmatprep.subr.mxu0 0.0
    %2359 = vmatpush1.msra.mxu0 0.0
    %2360 = vmatprep.subr.mxu0 0.0
    %2361 = vmatpush1.msra.mxu0 0.0
    %2362 = vmatprep.subr.mxu0 0.0
    %2363 = vmatpush1.msra.mxu0 0.0
    %2364 = vmatprep.subr.mxu0 0.0
    %2365 = vmatpush1.msra.mxu0 0.0
    %2366 = vmatprep.subr.mxu0 0.0
    %2367 = vmatpush1.msra.mxu0 0.0
    %2368 = vmatprep.subr.mxu0 0.0
    %2369 = vmatpush1.msra.mxu0 0.0
    %2370 = vmatprep.subr.mxu0 0.0
    %2371 = vmatpush1.msra.mxu0 0.0
    %2372 = vmatprep.subr.mxu0 0.0
    %2373 = vmatpush1.msra.mxu0 0.0
    %2374 = vmatprep.subr.mxu0 0.0
    %2375 = vmatpush1.msra.mxu0 0.0
    %2376 = vmatprep.subr.mxu0 0.0
    %2377 = vmatpush1.msra.mxu0 0.0
    %2378 = vmatprep.subr.mxu0 0.0
    %2379 = vmatpush1.msra.mxu0 0.0
    %2380 = vmatprep.subr.mxu0 0.0
    %2381 = vmatpush1.msra.mxu0 0.0
    %2382 = vmatprep.subr.mxu0 0.0
    %2383 = vmatpush1.msra.mxu0 0.0
    %2384 = vmatprep.mubr.f32.mxu0 %v2273
    %2385 = vmatmul.mubr.f32.gmra.mrb[0].mxu0 %v2222
    %v2386 = vpop.f32.mrb[0].mxu0
    %v2387 = vadd.f32 0.0, %v2386
    %v2388 = vpop.f32.mrb[0].mxu0
    %2389 = vmatprep.mubr.f32.mxu0 %v2276
    %2390 = vmatmul.mubr.f32.gmra.mrb[0].mxu0 %v2224
    %v2391 = vpop.f32.mrb[0].mxu0
    %v2392 = vadd.f32 0.0, %v2391
    %v2393 = vpop.f32.mrb[0].mxu0
    %2394 = vmatprep.mubr.f32.mxu0 %v2279
    %2395 = vmatmul.mubr.f32.gmra.mrb[0].mxu0 %v2226
    %v2396 = vpop.f32.mrb[0].mxu0
    %v2397 = vadd.f32 0.0, %v2396
    %v2398 = vpop.f32.mrb[0].mxu0
    %2399 = vmatprep.mubr.f32.mxu0 %v2282
    %2400 = vmatmul.mubr.f32.gmra.mrb[0].mxu0 %v2228
    %v2401 = vpop.f32.mrb[0].mxu0
    %v2402 = vadd.f32 0.0, %v2401
    %v2403 = vpop.f32.mrb[0].mxu0
    %2404 = vmatprep.mubr.f32.mxu0 %v2285
    %2405 = vmatmul.mubr.f32.gmra.mrb[0].mxu0 %v2230
    %v2406 = vpop.f32.mrb[0].mxu0
    %v2407 = vadd.f32 0.0, %v2406
    %v2408 = vpop.f32.mrb[0].mxu0
    %2409 = vmatprep.mubr.f32.mxu0 %v2288
    %2410 = vmatmul.mubr.f32.gmra.mrb[0].mxu0 %v2232
    %v2411 = vpop.f32.mrb[0].mxu0
    %v2412 = vadd.f32 0.0, %v2411
    %v2413 = vpop.f32.mrb[0].mxu0
    %2414 = vmatprep.mubr.f32.mxu0 %v2291
    %2415 = vmatmul.mubr.f32.gmra.mrb[0].mxu0 %v2234
    %v2416 = vpop.f32.mrb[0].mxu0
    %v2417 = vadd.f32 0.0, %v2416
    %v2418 = vpop.f32.mrb[0].mxu0
    %2419 = vmatprep.mubr.f32.mxu0 %v2294
    %2420 = vmatmul.mubr.f32.gmra.mrb[0].mxu0 %v2236
    %v2421 = vpop.f32.mrb[0].mxu0
    %v2422 = vadd.f32 0.0, %v2421
    %v2423 = vpop.f32.mrb[0].mxu0
    %2424 = vmatprep.mubr.f32.mxu0 %v2297
    %2425 = vmatmul.mubr.f32.gmra.mrb[0].mxu0 %v2238
    %v2426 = vpop.f32.mrb[0].mxu0
    %v2427 = vadd.f32 0.0, %v2426
    %v2428 = vpop.f32.mrb[0].mxu0
    %2429 = vmatprep.mubr.f32.mxu0 %v2300
    %2430 = vmatmul.mubr.f32.gmra.mrb[0].mxu0 %v2240
    %v2431 = vpop.f32.mrb[0].mxu0
    %v2432 = vadd.f32 0.0, %v2431
    %v2433 = vpop.f32.mrb[0].mxu0
    %2434 = vmatprep.mubr.f32.mxu0 %v2303
    %2435 = vmatmul.mubr.f32.gmra.mrb[0].mxu0 %v2242
    %v2436 = vpop.f32.mrb[0].mxu0
    %v2437 = vadd.f32 0.0, %v2436
    %v2438 = vpop.f32.mrb[0].mxu0
    %2439 = vmatprep.mubr.f32.mxu0 %v2306
    %2440 = vmatmul.mubr.f32.gmra.mrb[0].mxu0 %v2244
    %v2441 = vpop.f32.mrb[0].mxu0
    %v2442 = vadd.f32 0.0, %v2441
    %v2443 = vpop.f32.mrb[0].mxu0
    %2444 = vmatprep.mubr.f32.mxu0 %v2309
    %2445 = vmatmul.mubr.f32.gmra.mrb[0].mxu0 %v2246
    %v2446 = vpop.f32.mrb[0].mxu0
    %v2447 = vadd.f32 0.0, %v2446
    %v2448 = vpop.f32.mrb[0].mxu0
    %2449 = vmatprep.mubr.f32.mxu0 %v2312
    %2450 = vmatmul.mubr.f32.gmra.mrb[0].mxu0 %v2248
    %v2451 = vpop.f32.mrb[0].mxu0
    %v2452 = vadd.f32 0.0, %v2451
    %v2453 = vpop.f32.mrb[0].mxu0
    %2454 = vmatprep.mubr.f32.mxu0 %v2315
    %2455 = vmatmul.mubr.f32.gmra.mrb[0].mxu0 %v2250
    %v2456 = vpop.f32.mrb[0].mxu0
    %v2457 = vadd.f32 0.0, %v2456
    %v2458 = vpop.f32.mrb[0].mxu0
    %2459 = vmatprep.mubr.f32.mxu0 %v2318
    %2460 = vmatmul.mubr.f32.gmra.mrb[0].mxu0 %v2252
    %v2461 = vpop.f32.mrb[0].mxu0
    %v2462 = vadd.f32 0.0, %v2461
    %v2463 = vpop.f32.mrb[0].mxu0
    %2464 = vdwg.mxu0
    %v2465 = vld [vmem:[%s7] sm:$0xff]
    %2466 = vmatprep.subr.mxu0 0.0
    %2467 = vmatpush1.msra.mxu0 %v2387
    %2468 = vmatprep.subr.mxu0 0.0
    %2469 = vmatpush1.msra.mxu0 %v2392
    %2470 = vmatprep.subr.mxu0 0.0
    %2471 = vmatpush1.msra.mxu0 %v2397
    %2472 = vmatprep.subr.mxu0 0.0
    %2473 = vmatpush1.msra.mxu0 %v2402
    %2474 = vmatprep.subr.mxu0 0.0
    %2475 = vmatpush1.msra.mxu0 %v2407
    %2476 = vmatprep.subr.mxu0 0.0
    %2477 = vmatpush1.msra.mxu0 %v2412
    %2478 = vmatprep.subr.mxu0 0.0
    %2479 = vmatpush1.msra.mxu0 %v2417
    %2480 = vmatprep.subr.mxu0 0.0
    %2481 = vmatpush1.msra.mxu0 %v2422
    %2482 = vmatprep.subr.mxu0 0.0
    %2483 = vmatpush1.msra.mxu0 %v2427
    %2484 = vmatprep.subr.mxu0 0.0
    %2485 = vmatpush1.msra.mxu0 %v2432
    %2486 = vmatprep.subr.mxu0 0.0
    %2487 = vmatpush1.msra.mxu0 %v2437
    %2488 = vmatprep.subr.mxu0 0.0
    %2489 = vmatpush1.msra.mxu0 %v2442
    %2490 = vmatprep.subr.mxu0 0.0
    %2491 = vmatpush1.msra.mxu0 %v2447
    %2492 = vmatprep.subr.mxu0 0.0
    %2493 = vmatpush1.msra.mxu0 %v2452
    %2494 = vmatprep.subr.mxu0 0.0
    %2495 = vmatpush1.msra.mxu0 %v2457
    %2496 = vmatprep.subr.mxu0 0.0
    %2497 = vmatpush1.msra.mxu0 %v2462
    %2498 = vmatprep.subr.mxu0 0.0
    %2499 = vmatpush1.msra.mxu0 0.0
    %2500 = vmatprep.subr.mxu0 0.0
    %2501 = vmatpush1.msra.mxu0 0.0
    %2502 = vmatprep.subr.mxu0 0.0
    %2503 = vmatpush1.msra.mxu0 0.0
    %2504 = vmatprep.subr.mxu0 0.0
    %2505 = vmatpush1.msra.mxu0 0.0
    %2506 = vmatprep.subr.mxu0 0.0
    %2507 = vmatpush1.msra.mxu0 0.0
    %2508 = vmatprep.subr.mxu0 0.0
    %2509 = vmatpush1.msra.mxu0 0.0
    %2510 = vmatprep.subr.mxu0 0.0
    %2511 = vmatpush1.msra.mxu0 0.0
    %2512 = vmatprep.subr.mxu0 0.0
    %2513 = vmatpush1.msra.mxu0 0.0
    %2514 = vmatprep.subr.mxu0 0.0
    %2515 = vmatpush1.msra.mxu0 0.0
    %2516 = vmatprep.subr.mxu0 0.0
    %2517 = vmatpush1.msra.mxu0 0.0
    %2518 = vmatprep.subr.mxu0 0.0
    %2519 = vmatpush1.msra.mxu0 0.0
    %2520 = vmatprep.subr.mxu0 0.0
    %2521 = vmatpush1.msra.mxu0 0.0
    %2522 = vmatprep.subr.mxu0 0.0
    %2523 = vmatpush1.msra.mxu0 0.0
    %2524 = vmatprep.subr.mxu0 0.0
    %2525 = vmatpush1.msra.mxu0 0.0
    %2526 = vmatprep.subr.mxu0 0.0
    %2527 = vmatpush1.msra.mxu0 0.0
    %2528 = vmatprep.subr.mxu0 0.0
    %2529 = vmatpush1.msra.mxu0 0.0
    %2530 = vmatprep.mubr.f32.mxu0 0.0
    %2531 = vmatmul.mubr.f32.gmra.mrb[0].mxu0 %v2465
    %v2532 = vpop.f32.mrb[0].mxu0
    %v2533 = vadd.f32 0.0, %v2532
    %v2534 = vpop.f32.mrb[0].mxu0
    %2535 = vdwg.mxu0
    %v2536 = vmul.f32 %v2533, %v2533
    %vm2537 = vcmask 146432
    %v2538 = vsel %vm2537, %v2536, 0.0
    %2539 = vadd.xlane.f32.xlu0 %v2538
    %v2540 = vpop.xlane.xlu0 %2539
    %v2541 = vld [vmem:[%s8] sm:$0xff]
    %v2542 = vld [vmem:[%s8 + $0x8] sm:$0xff]
    %v2543 = vld [vmem:[%s8 + $0x10] sm:$0x3]
    %s2544 = scalar_lea.vmem %s7, 8
    %v2545 = vld [vmem:[%s2544] sm:$0xff]
    %2546 = vmatprep.subr.mxu0 0.0
    %2547 = vmatpush1.msra.mxu0 %v2387
    %2548 = vmatprep.subr.mxu0 0.0
    %2549 = vmatpush1.msra.mxu0 %v2392
    %2550 = vmatprep.subr.mxu0 0.0
    %2551 = vmatpush1.msra.mxu0 %v2397
    %2552 = vmatprep.subr.mxu0 0.0
    %2553 = vmatpush1.msra.mxu0 %v2402
    %2554 = vmatprep.subr.mxu0 0.0
    %2555 = vmatpush1.msra.mxu0 %v2407
    %2556 = vmatprep.subr.mxu0 0.0
    %2557 = vmatpush1.msra.mxu0 %v2412
    %2558 = vmatprep.subr.mxu0 0.0
    %2559 = vmatpush1.msra.mxu0 %v2417
    %2560 = vmatprep.subr.mxu0 0.0
    %2561 = vmatpush1.msra.mxu0 %v2422
    %2562 = vmatprep.subr.mxu0 0.0
    %2563 = vmatpush1.msra.mxu0 %v2427
    %2564 = vmatprep.subr.mxu0 0.0
    %2565 = vmatpush1.msra.mxu0 %v2432
    %2566 = vmatprep.subr.mxu0 0.0
    %2567 = vmatpush1.msra.mxu0 %v2437
    %2568 = vmatprep.subr.mxu0 0.0
    %2569 = vmatpush1.msra.mxu0 %v2442
    %2570 = vmatprep.subr.mxu0 0.0
    %2571 = vmatpush1.msra.mxu0 %v2447
    %2572 = vmatprep.subr.mxu0 0.0
    %2573 = vmatpush1.msra.mxu0 %v2452
    %2574 = vmatprep.subr.mxu0 0.0
    %2575 = vmatpush1.msra.mxu0 %v2457
    %2576 = vmatprep.subr.mxu0 0.0
    %2577 = vmatpush1.msra.mxu0 %v2462
    %2578 = vmatprep.subr.mxu0 0.0
    %2579 = vmatpush1.msra.mxu0 0.0
    %2580 = vmatprep.subr.mxu0 0.0
    %2581 = vmatpush1.msra.mxu0 0.0
    %2582 = vmatprep.subr.mxu0 0.0
    %2583 = vmatpush1.msra.mxu0 0.0
    %2584 = vmatprep.subr.mxu0 0.0
    %2585 = vmatpush1.msra.mxu0 0.0
    %2586 = vmatprep.subr.mxu0 0.0
    %2587 = vmatpush1.msra.mxu0 0.0
    %2588 = vmatprep.subr.mxu0 0.0
    %2589 = vmatpush1.msra.mxu0 0.0
    %2590 = vmatprep.subr.mxu0 0.0
    %2591 = vmatpush1.msra.mxu0 0.0
    %2592 = vmatprep.subr.mxu0 0.0
    %2593 = vmatpush1.msra.mxu0 0.0
    %2594 = vmatprep.subr.mxu0 0.0
    %2595 = vmatpush1.msra.mxu0 0.0
    %2596 = vmatprep.subr.mxu0 0.0
    %2597 = vmatpush1.msra.mxu0 0.0
    %2598 = vmatprep.subr.mxu0 0.0
    %2599 = vmatpush1.msra.mxu0 0.0
    %2600 = vmatprep.subr.mxu0 0.0
    %2601 = vmatpush1.msra.mxu0 0.0
    %2602 = vmatprep.subr.mxu0 0.0
    %2603 = vmatpush1.msra.mxu0 0.0
    %2604 = vmatprep.subr.mxu0 0.0
    %2605 = vmatpush1.msra.mxu0 0.0
    %2606 = vmatprep.subr.mxu0 0.0
    %2607 = vmatpush1.msra.mxu0 0.0
    %2608 = vmatprep.subr.mxu0 0.0
    %2609 = vmatpush1.msra.mxu0 0.0
    %2610 = vmatprep.mubr.f32.mxu0 0.0
    %2611 = vmatmul.mubr.f32.gmra.mrb[0].mxu0 %v2545
    %v2612 = vpop.f32.mrb[0].mxu0
    %v2613 = vadd.f32 0.0, %v2612
    %v2614 = vpop.f32.mrb[0].mxu0
    %2615 = vdwg.mxu0
    %v2616 = vmul.f32 %v2613, %v2613
    %v2617 = vsel %vm2537, %v2616, 0.0
    %2618 = vadd.xlane.f32.xlu0 %v2617
    %v2619 = vpop.xlane.xlu0 %2618
    %s2620 = scalar_lea.vmem %s8, 24
    %v2621 = vld [vmem:[%s2620] sm:$0xff]
    %v2622 = vld [vmem:[%s2620 + $0x8] sm:$0xff]
    %v2623 = vld [vmem:[%s2620 + $0x10] sm:$0x3]
    %v2625 = vsel %vm2537, %v2613, 0
    %vm2627 = vcmask 1041408
    %v2629 = vsel %vm2627, %v2623, 0
    %2631 = vmatprep.subr.mxu0 0.0
    %2632 = vmatpush1.msra.mxu0 %v2621
    %2633 = vmatprep.subr.mxu0 0.0
    %2634 = vmatpush1.msra.mxu0 %v2622
    %2635 = vmatprep.subr.mxu0 0.0
    %2636 = vmatpush1.msra.mxu0 %v2629
    %2637 = vmatprep.subr.mxu0 0.0
    %2638 = vmatpush1.msra.mxu0 0.0
    %2639 = vmatprep.subr.mxu0 0.0
    %2640 = vmatpush1.msra.mxu0 0.0
    %2641 = vmatprep.subr.mxu0 0.0
    %2642 = vmatpush1.msra.mxu0 0.0
    %2643 = vmatprep.subr.mxu0 0.0
    %2644 = vmatpush1.msra.mxu0 0.0
    %2645 = vmatprep.subr.mxu0 0.0
    %2646 = vmatpush1.msra.mxu0 0.0
    %2647 = vmatprep.subr.mxu0 0.0
    %2648 = vmatpush1.msra.mxu0 0.0
    %2649 = vmatprep.subr.mxu0 0.0
    %2650 = vmatpush1.msra.mxu0 0.0
    %2651 = vmatprep.subr.mxu0 0.0
    %2652 = vmatpush1.msra.mxu0 0.0
    %2653 = vmatprep.subr.mxu0 0.0
    %2654 = vmatpush1.msra.mxu0 0.0
    %2655 = vmatprep.subr.mxu0 0.0
    %2656 = vmatpush1.msra.mxu0 0.0
    %2657 = vmatprep.subr.mxu0 0.0
    %2658 = vmatpush1.msra.mxu0 0.0
    %2659 = vmatprep.subr.mxu0 0.0
    %2660 = vmatpush1.msra.mxu0 0.0
    %2661 = vmatprep.subr.mxu0 0.0
    %2662 = vmatpush1.msra.mxu0 0.0
    %2663 = vmatprep.subr.mxu0 0.0
    %2664 = vmatpush1.msra.mxu0 0.0
    %2665 = vmatprep.subr.mxu0 0.0
    %2666 = vmatpush1.msra.mxu0 0.0
    %2667 = vmatprep.subr.mxu0 0.0
    %2668 = vmatpush1.msra.mxu0 0.0
    %2669 = vmatprep.subr.mxu0 0.0
    %2670 = vmatpush1.msra.mxu0 0.0
    %2671 = vmatprep.subr.mxu0 0.0
    %2672 = vmatpush1.msra.mxu0 0.0
    %2673 = vmatprep.subr.mxu0 0.0
    %2674 = vmatpush1.msra.mxu0 0.0
    %2675 = vmatprep.subr.mxu0 0.0
    %2676 = vmatpush1.msra.mxu0 0.0
    %2677 = vmatprep.subr.mxu0 0.0
    %2678 = vmatpush1.msra.mxu0 0.0
    %2679 = vmatprep.subr.mxu0 0.0
    %2680 = vmatpush1.msra.mxu0 0.0
    %2681 = vmatprep.subr.mxu0 0.0
    %2682 = vmatpush1.msra.mxu0 0.0
    %2683 = vmatprep.subr.mxu0 0.0
    %2684 = vmatpush1.msra.mxu0 0.0
    %2685 = vmatprep.subr.mxu0 0.0
    %2686 = vmatpush1.msra.mxu0 0.0
    %2687 = vmatprep.subr.mxu0 0.0
    %2688 = vmatpush1.msra.mxu0 0.0
    %2689 = vmatprep.subr.mxu0 0.0
    %2690 = vmatpush1.msra.mxu0 0.0
    %2691 = vmatprep.subr.mxu0 0.0
    %2692 = vmatpush1.msra.mxu0 0.0
    %2693 = vmatprep.subr.mxu0 0.0
    %2694 = vmatpush1.msra.mxu0 0.0
    %2695 = vmatprep.mubr.f32.mxu0 0.0
    %2696 = vmatmul.mubr.f32.gmra.mrb[0].mxu0 %v2625
    %v2697 = vpop.f32.mrb[0].mxu0
    %v2698 = vadd.f32 0.0, %v2697
    %v2699 = vpop.f32.mrb[0].mxu0
    %2700 = vdwg.mxu0
    %v2701 = vadd.f32 %v2540, %v2619
    %v2703 = vsel %vm2537, %v2533, 0
    %v2706 = vsel %vm2627, %v2543, 0
    %2708 = vmatprep.subr.mxu0 0.0
    %2709 = vmatpush1.msra.mxu0 %v2541
    %2710 = vmatprep.subr.mxu0 0.0
    %2711 = vmatpush1.msra.mxu0 %v2542
    %2712 = vmatprep.subr.mxu0 0.0
    %2713 = vmatpush1.msra.mxu0 %v2706
    %2714 = vmatprep.subr.mxu0 0.0
    %2715 = vmatpush1.msra.mxu0 0.0
    %2716 = vmatprep.subr.mxu0 0.0
    %2717 = vmatpush1.msra.mxu0 0.0
    %2718 = vmatprep.subr.mxu0 0.0
    %2719 = vmatpush1.msra.mxu0 0.0
    %2720 = vmatprep.subr.mxu0 0.0
    %2721 = vmatpush1.msra.mxu0 0.0
    %2722 = vmatprep.subr.mxu0 0.0
    %2723 = vmatpush1.msra.mxu0 0.0
    %2724 = vmatprep.subr.mxu0 0.0
    %2725 = vmatpush1.msra.mxu0 0.0
    %2726 = vmatprep.subr.mxu0 0.0
    %2727 = vmatpush1.msra.mxu0 0.0
    %2728 = vmatprep.subr.mxu0 0.0
    %2729 = vmatpush1.msra.mxu0 0.0
    %2730 = vmatprep.subr.mxu0 0.0
    %2731 = vmatpush1.msra.mxu0 0.0
    %2732 = vmatprep.subr.mxu0 0.0
    %2733 = vmatpush1.msra.mxu0 0.0
    %2734 = vmatprep.subr.mxu0 0.0
    %2735 = vmatpush1.msra.mxu0 0.0
    %2736 = vmatprep.subr.mxu0 0.0
    %2737 = vmatpush1.msra.mxu0 0.0
    %2738 = vmatprep.subr.mxu0 0.0
    %2739 = vmatpush1.msra.mxu0 0.0
    %2740 = vmatprep.subr.mxu0 0.0
    %2741 = vmatpush1.msra.mxu0 0.0
    %2742 = vmatprep.subr.mxu0 0.0
    %2743 = vmatpush1.msra.mxu0 0.0
    %2744 = vmatprep.subr.mxu0 0.0
    %2745 = vmatpush1.msra.mxu0 0.0
    %2746 = vmatprep.subr.mxu0 0.0
    %2747 = vmatpush1.msra.mxu0 0.0
    %2748 = vmatprep.subr.mxu0 0.0
    %2749 = vmatpush1.msra.mxu0 0.0
    %2750 = vmatprep.subr.mxu0 0.0
    %2751 = vmatpush1.msra.mxu0 0.0
    %2752 = vmatprep.subr.mxu0 0.0
    %2753 = vmatpush1.msra.mxu0 0.0
    %2754 = vmatprep.subr.mxu0 0.0
    %2755 = vmatpush1.msra.mxu0 0.0
    %2756 = vmatprep.subr.mxu0 0.0
    %2757 = vmatpush1.msra.mxu0 0.0
    %2758 = vmatprep.subr.mxu0 0.0
    %2759 = vmatpush1.msra.mxu0 0.0
    %2760 = vmatprep.subr.mxu0 0.0
    %2761 = vmatpush1.msra.mxu0 0.0
    %2762 = vmatprep.subr.mxu0 0.0
    %2763 = vmatpush1.msra.mxu0 0.0
    %2764 = vmatprep.subr.mxu0 0.0
    %2765 = vmatpush1.msra.mxu0 0.0
    %2766 = vmatprep.subr.mxu0 0.0
    %2767 = vmatpush1.msra.mxu0 0.0
    %2768 = vmatprep.subr.mxu0 0.0
    %2769 = vmatpush1.msra.mxu0 0.0
    %2770 = vmatprep.subr.mxu0 0.0
    %2771 = vmatpush1.msra.mxu0 0.0
    %2772 = vmatprep.mubr.f32.mxu0 0.0
    %2773 = vmatmul.mubr.f32.gmra.mrb[0].mxu0 %v2703
    %v2774 = vpop.f32.mrb[0].mxu0
    %v2775 = vadd.f32 %v2698, %v2774
    %v2776 = vpop.f32.mrb[0].mxu0
    %2777 = vdwg.mxu0
    %v2778 = vadd.f32 %v2701, 1e-12
    %v2779 = vrsqrt.pop %v2778
    %v2780 = vmul.f32 %v2775, %v2779
    %v2781 = vld [vmem:[%s1] sm:$0xff]
    %v2782 = vld [vmem:[%s9] sm:$0x1]
    %v2784 = vlaneseq
    %v2785 = vshrl.u32 %v2784, 7
    %v2786 = vsub.s32 0, %v2785
    %v2787 = vrot.slane %v2782, %v2786
    %vm2789 = vcmask 64512
    %v2791 = vsel %vm2789, %v2781, 0
    %2793 = vmatprep.subr.mxu0 0.0
    %2794 = vmatpush1.msra.mxu0 %v2780
    %2795 = vmatprep.subr.mxu0 0.0
    %2796 = vmatpush1.msra.mxu0 0.0
    %2797 = vmatprep.subr.mxu0 0.0
    %2798 = vmatpush1.msra.mxu0 0.0
    %2799 = vmatprep.subr.mxu0 0.0
    %2800 = vmatpush1.msra.mxu0 0.0
    %2801 = vmatprep.subr.mxu0 0.0
    %2802 = vmatpush1.msra.mxu0 0.0
    %2803 = vmatprep.subr.mxu0 0.0
    %2804 = vmatpush1.msra.mxu0 0.0
    %2805 = vmatprep.subr.mxu0 0.0
    %2806 = vmatpush1.msra.mxu0 0.0
    %2807 = vmatprep.subr.mxu0 0.0
    %2808 = vmatpush1.msra.mxu0 0.0
    %2809 = vmatprep.subr.mxu0 0.0
    %2810 = vmatpush1.msra.mxu0 0.0
    %2811 = vmatprep.subr.mxu0 0.0
    %2812 = vmatpush1.msra.mxu0 0.0
    %2813 = vmatprep.subr.mxu0 0.0
    %2814 = vmatpush1.msra.mxu0 0.0
    %2815 = vmatprep.subr.mxu0 0.0
    %2816 = vmatpush1.msra.mxu0 0.0
    %2817 = vmatprep.subr.mxu0 0.0
    %2818 = vmatpush1.msra.mxu0 0.0
    %2819 = vmatprep.subr.mxu0 0.0
    %2820 = vmatpush1.msra.mxu0 0.0
    %2821 = vmatprep.subr.mxu0 0.0
    %2822 = vmatpush1.msra.mxu0 0.0
    %2823 = vmatprep.subr.mxu0 0.0
    %2824 = vmatpush1.msra.mxu0 0.0
    %2825 = vmatprep.subr.mxu0 0.0
    %2826 = vmatpush1.msra.mxu0 0.0
    %2827 = vmatprep.subr.mxu0 0.0
    %2828 = vmatpush1.msra.mxu0 0.0
    %2829 = vmatprep.subr.mxu0 0.0
    %2830 = vmatpush1.msra.mxu0 0.0
    %2831 = vmatprep.subr.mxu0 0.0
    %2832 = vmatpush1.msra.mxu0 0.0
    %2833 = vmatprep.subr.mxu0 0.0
    %2834 = vmatpush1.msra.mxu0 0.0
    %2835 = vmatprep.subr.mxu0 0.0
    %2836 = vmatpush1.msra.mxu0 0.0
    %2837 = vmatprep.subr.mxu0 0.0
    %2838 = vmatpush1.msra.mxu0 0.0
    %2839 = vmatprep.subr.mxu0 0.0
    %2840 = vmatpush1.msra.mxu0 0.0
    %2841 = vmatprep.subr.mxu0 0.0
    %2842 = vmatpush1.msra.mxu0 0.0
    %2843 = vmatprep.subr.mxu0 0.0
    %2844 = vmatpush1.msra.mxu0 0.0
    %2845 = vmatprep.subr.mxu0 0.0
    %2846 = vmatpush1.msra.mxu0 0.0
    %2847 = vmatprep.subr.mxu0 0.0
    %2848 = vmatpush1.msra.mxu0 0.0
    %2849 = vmatprep.subr.mxu0 0.0
    %2850 = vmatpush1.msra.mxu0 0.0
    %2851 = vmatprep.subr.mxu0 0.0
    %2852 = vmatpush1.msra.mxu0 0.0
    %2853 = vmatprep.subr.mxu0 0.0
    %2854 = vmatpush1.msra.mxu0 0.0
    %2855 = vmatprep.subr.mxu0 0.0
    %2856 = vmatpush1.msra.mxu0 0.0
    %2857 = vmatprep.mubr.f32.mxu0 0.0
    %2858 = vmatmul.mubr.f32.gmra.mrb[0].mxu0 %v2791
    %v2859 = vpop.f32.mrb[0].mxu0
    %v2860 = vadd.f32 %v2787, %v2859
    %v2861 = vpop.f32.mrb[0].mxu0
    %2862 = vdwg.mxu0
    %v2863 = vmax.f32 %v2860, 0.0
    %v2864 = vld [vmem:[%s10] sm:$0xff]
    %v2865 = vld [vmem:[%s10 + $0x8] sm:$0xff]
    %v2866 = vld [vmem:[%s10 + $0x10] sm:$0xff]
    %v2867 = vld [vmem:[%s10 + $0x18] sm:$0xff]
    %v2868 = vld [vmem:[%s10 + $0x20] sm:$0xf]
    %vm2869 = vcmask 293888
    %v2871 = vsel %vm2869, %v2863, 0
    %vm2873 = vcmask 1043456
    %v2875 = vsel %vm2873, %v2868, 0
    %2877 = vmatprep.subr.mxu0 0.0
    %2878 = vmatpush1.msra.mxu0 %v2864
    %2879 = vmatprep.subr.mxu0 0.0
    %2880 = vmatpush1.msra.mxu0 %v2865
    %2881 = vmatprep.subr.mxu0 0.0
    %2882 = vmatpush1.msra.mxu0 %v2866
    %2883 = vmatprep.subr.mxu0 0.0
    %2884 = vmatpush1.msra.mxu0 %v2867
    %2885 = vmatprep.subr.mxu0 0.0
    %2886 = vmatpush1.msra.mxu0 %v2875
    %2887 = vmatprep.subr.mxu0 0.0
    %2888 = vmatpush1.msra.mxu0 0.0
    %2889 = vmatprep.subr.mxu0 0.0
    %2890 = vmatpush1.msra.mxu0 0.0
    %2891 = vmatprep.subr.mxu0 0.0
    %2892 = vmatpush1.msra.mxu0 0.0
    %2893 = vmatprep.subr.mxu0 0.0
    %2894 = vmatpush1.msra.mxu0 0.0
    %2895 = vmatprep.subr.mxu0 0.0
    %2896 = vmatpush1.msra.mxu0 0.0
    %2897 = vmatprep.subr.mxu0 0.0
    %2898 = vmatpush1.msra.mxu0 0.0
    %2899 = vmatprep.subr.mxu0 0.0
    %2900 = vmatpush1.msra.mxu0 0.0
    %2901 = vmatprep.subr.mxu0 0.0
    %2902 = vmatpush1.msra.mxu0 0.0
    %2903 = vmatprep.subr.mxu0 0.0
    %2904 = vmatpush1.msra.mxu0 0.0
    %2905 = vmatprep.subr.mxu0 0.0
    %2906 = vmatpush1.msra.mxu0 0.0
    %2907 = vmatprep.subr.mxu0 0.0
    %2908 = vmatpush1.msra.mxu0 0.0
    %2909 = vmatprep.subr.mxu0 0.0
    %2910 = vmatpush1.msra.mxu0 0.0
    %2911 = vmatprep.subr.mxu0 0.0
    %2912 = vmatpush1.msra.mxu0 0.0
    %2913 = vmatprep.subr.mxu0 0.0
    %2914 = vmatpush1.msra.mxu0 0.0
    %2915 = vmatprep.subr.mxu0 0.0
    %2916 = vmatpush1.msra.mxu0 0.0
    %2917 = vmatprep.subr.mxu0 0.0
    %2918 = vmatpush1.msra.mxu0 0.0
    %2919 = vmatprep.subr.mxu0 0.0
    %2920 = vmatpush1.msra.mxu0 0.0
    %2921 = vmatprep.subr.mxu0 0.0
    %2922 = vmatpush1.msra.mxu0 0.0
    %2923 = vmatprep.subr.mxu0 0.0
    %2924 = vmatpush1.msra.mxu0 0.0
    %2925 = vmatprep.subr.mxu0 0.0
    %2926 = vmatpush1.msra.mxu0 0.0
    %2927 = vmatprep.subr.mxu0 0.0
    %2928 = vmatpush1.msra.mxu0 0.0
    %2929 = vmatprep.subr.mxu0 0.0
    %2930 = vmatpush1.msra.mxu0 0.0
    %2931 = vmatprep.subr.mxu0 0.0
    %2932 = vmatpush1.msra.mxu0 0.0
    %2933 = vmatprep.subr.mxu0 0.0
    %2934 = vmatpush1.msra.mxu0 0.0
    %2935 = vmatprep.subr.mxu0 0.0
    %2936 = vmatpush1.msra.mxu0 0.0
    %2937 = vmatprep.subr.mxu0 0.0
    %2938 = vmatpush1.msra.mxu0 0.0
    %2939 = vmatprep.subr.mxu0 0.0
    %2940 = vmatpush1.msra.mxu0 0.0
    %2941 = vmatprep.mubr.f32.mxu0 0.0
    %2942 = vmatmul.mubr.f32.gmra.mrb[0].mxu0 %v2871
    %v2943 = vpop.f32.mrb[0].mxu0
    %v2944 = vadd.f32 0.0, %v2943
    %v2945 = vpop.f32.mrb[0].mxu0
    %2946 = vdwg.mxu0
    %v2947 = vld [vmem:[%s11] sm:$0x1]
    %v2949 = vlaneseq
    %v2950 = vshrl.u32 %v2949, 7
    %v2951 = vsub.s32 0, %v2950
    %v2952 = vrot.slane %v2947, %v2951
    %2954 = vmatprep.subr.mxu0 0.0
    %2955 = vmatpush1.msra.mxu0 %v2944
    %2956 = vmatprep.subr.mxu0 0.0
    %2957 = vmatpush1.msra.mxu0 0.0
    %2958 = vmatprep.subr.mxu0 0.0
    %2959 = vmatpush1.msra.mxu0 0.0
    %2960 = vmatprep.subr.mxu0 0.0
    %2961 = vmatpush1.msra.mxu0 0.0
    %2962 = vmatprep.subr.mxu0 0.0
    %2963 = vmatpush1.msra.mxu0 0.0
    %2964 = vmatprep.subr.mxu0 0.0
    %2965 = vmatpush1.msra.mxu0 0.0
    %2966 = vmatprep.subr.mxu0 0.0
    %2967 = vmatpush1.msra.mxu0 0.0
    %2968 = vmatprep.subr.mxu0 0.0
    %2969 = vmatpush1.msra.mxu0 0.0
    %2970 = vmatprep.subr.mxu0 0.0
    %2971 = vmatpush1.msra.mxu0 0.0
    %2972 = vmatprep.subr.mxu0 0.0
    %2973 = vmatpush1.msra.mxu0 0.0
    %2974 = vmatprep.subr.mxu0 0.0
    %2975 = vmatpush1.msra.mxu0 0.0
    %2976 = vmatprep.subr.mxu0 0.0
    %2977 = vmatpush1.msra.mxu0 0.0
    %2978 = vmatprep.subr.mxu0 0.0
    %2979 = vmatpush1.msra.mxu0 0.0
    %2980 = vmatprep.subr.mxu0 0.0
    %2981 = vmatpush1.msra.mxu0 0.0
    %2982 = vmatprep.subr.mxu0 0.0
    %2983 = vmatpush1.msra.mxu0 0.0
    %2984 = vmatprep.subr.mxu0 0.0
    %2985 = vmatpush1.msra.mxu0 0.0
    %2986 = vmatprep.subr.mxu0 0.0
    %2987 = vmatpush1.msra.mxu0 0.0
    %2988 = vmatprep.subr.mxu0 0.0
    %2989 = vmatpush1.msra.mxu0 0.0
    %2990 = vmatprep.subr.mxu0 0.0
    %2991 = vmatpush1.msra.mxu0 0.0
    %2992 = vmatprep.subr.mxu0 0.0
    %2993 = vmatpush1.msra.mxu0 0.0
    %2994 = vmatprep.subr.mxu0 0.0
    %2995 = vmatpush1.msra.mxu0 0.0
    %2996 = vmatprep.subr.mxu0 0.0
    %2997 = vmatpush1.msra.mxu0 0.0
    %2998 = vmatprep.subr.mxu0 0.0
    %2999 = vmatpush1.msra.mxu0 0.0
    %3000 = vmatprep.subr.mxu0 0.0
    %3001 = vmatpush1.msra.mxu0 0.0
    %3002 = vmatprep.subr.mxu0 0.0
    %3003 = vmatpush1.msra.mxu0 0.0
    %3004 = vmatprep.subr.mxu0 0.0
    %3005 = vmatpush1.msra.mxu0 0.0
    %3006 = vmatprep.subr.mxu0 0.0
    %3007 = vmatpush1.msra.mxu0 0.0
    %3008 = vmatprep.subr.mxu0 0.0
    %3009 = vmatpush1.msra.mxu0 0.0
    %3010 = vmatprep.subr.mxu0 0.0
    %3011 = vmatpush1.msra.mxu0 0.0
    %3012 = vmatprep.subr.mxu0 0.0
    %3013 = vmatpush1.msra.mxu0 0.0
    %3014 = vmatprep.subr.mxu0 0.0
    %3015 = vmatpush1.msra.mxu0 0.0
    %3016 = vmatprep.subr.mxu0 0.0
    %3017 = vmatpush1.msra.mxu0 0.0
    %3018 = vmatprep.mubr.f32.mxu0 0.0
    %3019 = vmatmul.mubr.f32.gmra.mrb[0].mxu0 %v2791
    %v3020 = vpop.f32.mrb[0].mxu0
    %v3021 = vadd.f32 %v2952, %v3020
    %v3022 = vpop.f32.mrb[0].mxu0
    %3023 = vdwg.mxu0
    %vm3024 = vcmask 39936
    %v3025 = vsel %vm3024, %v3021, -inf
    %3026 = vmax.xlane.f32.xlu0 %v3025
    %v3027 = vpop.xlane.xlu0 %3026
    %v3028 = vsub.f32 %v3021, %v3027
    %v3029 = vmul.f32 %v3028, 1.442695
    %v3030 = vpow.pop %v3029
    %v3031 = vsel %vm3024, %v3030, 0.0
    %3032 = vadd.xlane.f32.xlu0 %v3031
    %v3033 = vpop.xlane.xlu0 %3032
    %v3034 = vrcp.pop %v3033
    %v3035 = vmul.f32 %v3030, %v3034
    %3036 = vst.msk [vmem:[#allocation2] sm:$0xff] %vm3024, %v3035
    // Predicated region
    $region50: #{hoggcn_forward.1} parent=1 // pred_check
      _
    $region51: #{hoggcn_forward.1} parent=1 // pred_check_branch
      %3038 = sbr.rel (0) target = $region53
    $region52: #{hoggcn_forward.1} parent=1 // pred_region
      %s3040 = ssub.s32 128, 128
      %3041 = vsyncadd [#allocation3], %s3040
      %s3043 = sshll.u32 [#allocation2], 4
      %s3044 = int_to_ptr.vmem [resolvable:$true] %s3043
      %3046 = dma.vmem_to_hbm [thread:$0]  %s3044, 128, %s12, [#allocation3]
    $region53: #{hoggcn_forward.1} parent=1 // pred_fallthru
      _
    // Predicated region
    $region54: #{hoggcn_forward.1} parent=1 // pred_check
      _
    $region55: #{hoggcn_forward.1} parent=1 // pred_check_branch
      %3048 = sbr.rel (0) target = $region57
    $region56: #{hoggcn_forward.1} parent=1 // pred_region
      %3049 = dma.done [#allocation3], 128
    $region57: #{hoggcn_forward.1} parent=1 // pred_fallthru
      _
    %3050 = vsyncpa [#allocation3], 1

</llo_original>
